<compile_context>
chip_gen: v6e
topology: v6e:2x2x1
jax: 0.10.0
libtpu: 0.0.40
codegen_flags: <defaults>
</compile_context>

<pallas_src>
import functools

import jax
import jax.numpy as jnp
from jax import lax
from jax.experimental import pallas as pl
from jax.experimental.pallas import tpu as pltpu

EMBED = 64      # nn.Embedding(vocab, 64)
HIDDEN = 128    # nn.GRU(64, 128)
VOCAB = 96      # synthetic vocab size (stand-in for len(dataset.vocab))

_SUBLANE = 8    # f32 sublane tile
_LANE = 128     # lane tile


def _round_up(x, m):
    return (x + m - 1) // m * m


# ----------------------------- Pallas kernel -----------------------------

def _seq2seq_kernel(src_x_ref, tgt_x_ref,
                    wih_e_ref, whh_e_ref, bih_e_ref, bhh_e_ref,
                    wih_d_ref, whh_d_ref, bih_d_ref, bhh_d_ref,
                    ow_ref, ob_ref,
                    logits_ref,
                    dec_scr,
                    *, t_src, t_dec, batch):
    """Fused encoder-GRU -> decoder-GRU -> Linear forward (PyTorch GRU semantics).

    src_x_ref : (t_src*batch, E)  time-major flattened source embeddings
    tgt_x_ref : (t_dec*batch, E)  time-major flattened target embeddings
    w*_ref    : GRU weights pre-transposed, (in, 3H)/(H, 3H), gate order r|z|n
    b*_ref    : (1, 3H) biases
    ow_ref    : (H, Vp) output projection (vocab padded to the 128 lane tile)
    ob_ref    : (1, Vp)
    logits_ref: (t_dec*batch, Vp) flat time-major logits
    dec_scr   : (t_dec*batch, H)  VMEM scratch for decoder hidden states
    """
    H = whh_e_ref.shape[0]

    def gru_stack(gi_all, whh, bhh_row, h0, n_steps, store=None):
        # hidden weights / bias broadcast hoisted out of the (unrolled) loop
        bhh = jnp.broadcast_to(bhh_row, (batch, 3 * H))
        h = h0
        for t in range(n_steps):            # static trip count -> fully unrolled
            gi = gi_all[t * batch:(t + 1) * batch, :]
            gh = jnp.dot(h, whh, preferred_element_type=jnp.float32) + bhh
            r = jax.nn.sigmoid(gi[:, :H] + gh[:, :H])
            z = jax.nn.sigmoid(gi[:, H:2 * H] + gh[:, H:2 * H])
            n = jnp.tanh(gi[:, 2 * H:] + r * gh[:, 2 * H:])
            h = (1.0 - z) * n + z * h
            if store is not None:
                store[pl.ds(t * batch, batch), :] = h
        return h

    # ---- Encoder: input-gate matmul hoisted to ONE big matmul; only the final
    #      hidden state is kept (no per-step output stores / writeback).
    gi_enc = (jnp.dot(src_x_ref[...], wih_e_ref[...],
                      preferred_element_type=jnp.float32) + bih_e_ref[...])
    h0 = jnp.zeros((batch, H), jnp.float32)
    h_enc = gru_stack(gi_enc, whh_e_ref[...], bhh_e_ref[...], h0, t_src)

    # ---- Decoder: initialized from encoder hidden (stays in VMEM / vregs),
    #      per-step hidden states accumulated into scratch.
    gi_dec = (jnp.dot(tgt_x_ref[...], wih_d_ref[...],
                      preferred_element_type=jnp.float32) + bih_d_ref[...])
    gru_stack(gi_dec, whh_d_ref[...], bhh_d_ref[...], h_enc, t_dec,
              store=dec_scr)

    # ---- Output projection: one (t_dec*B, H) @ (H, Vp) matmul, lane-dense store.
    logits_ref[...] = (jnp.dot(dec_scr[...], ow_ref[...],
                               preferred_element_type=jnp.float32) + ob_ref[...])


# ----------------------------- wrapper -----------------------------

_VMEM = pl.BlockSpec(memory_space=pltpu.MemorySpace.VMEM)


def rnn_seq2seq_forward(params, src, tgt):
    """Matches RNNSeq2Seq.forward(src, tgt): returns logits (B, T_tgt-1, vocab)."""
    emb = params["embed"]                               # (V, E)
    B, t_src = src.shape
    t_dec = tgt.shape[1] - 1

    bp = _round_up(B, _SUBLANE)                         # pad batch to sublane tile
    vp = _round_up(VOCAB, _LANE)                        # pad vocab to lane tile

    src_p = jnp.pad(src, ((0, bp - B), (0, 0)))         # pad rows use token 0
    tgt_p = jnp.pad(tgt[:, :-1], ((0, bp - B), (0, 0)))

    # Embedding gather (XLA glue), produced directly time-major + flattened so
    # the kernel sees contiguous (T*B, E) slabs with no in-kernel transposes.
    src_x = jnp.take(emb, src_p.T, axis=0).reshape(t_src * bp, EMBED)
    tgt_x = jnp.take(emb, tgt_p.T, axis=0).reshape(t_dec * bp, EMBED)

    # Lane-dense (128-wide) output projection; extra columns are zeros.
    ow = jnp.pad(params["out_w"], ((0, 0), (0, vp - VOCAB)))
    ob = jnp.pad(params["out_b"], ((0, 0), (0, vp - VOCAB)))

    kernel = functools.partial(_seq2seq_kernel,
                               t_src=t_src, t_dec=t_dec, batch=bp)
    logits_flat = pl.pallas_call(
        kernel,
        out_shape=jax.ShapeDtypeStruct((t_dec * bp, vp), jnp.float32),
        in_specs=[_VMEM] * 12,
        out_specs=_VMEM,
        scratch_shapes=[pltpu.VMEM((t_dec * bp, HIDDEN), jnp.float32)],
    )(src_x, tgt_x, *params["enc"], *params["dec"], ow, ob)

    # Un-pad: (t_dec*bp, vp) -> (B, t_dec, VOCAB), batch-first like PyTorch.
    logits = logits_flat.reshape(t_dec, bp, vp)[:, :B, :VOCAB]
    return jnp.transpose(logits, (1, 0, 2))


# ----------------------------- pure-JAX reference -----------------------------

def _gru_ref(x_bte, h0, w_ih, w_hh, b_ih, b_hh):
    H = h0.shape[-1]

    def step(h, x):
        gi = x @ w_ih + b_ih
        gh = h @ w_hh + b_hh
        r = jax.nn.sigmoid(gi[:, :H] + gh[:, :H])
        z = jax.nn.sigmoid(gi[:, H:2 * H] + gh[:, H:2 * H])
        n = jnp.tanh(gi[:, 2 * H:] + r * gh[:, 2 * H:])
        h_new = (1.0 - z) * n + z * h
        return h_new, h_new

    hT, outs = lax.scan(step, h0, jnp.transpose(x_bte, (1, 0, 2)))
    return jnp.transpose(outs, (1, 0, 2)), hT


def _forward_ref(params, src, tgt):
    emb = params["embed"]
    src_emb = jnp.take(emb, src, axis=0)
    tgt_emb = jnp.take(emb, tgt[:, :-1], axis=0)
    B = src.shape[0]
    h0 = jnp.zeros((B, HIDDEN), jnp.float32)
    _, h_enc = _gru_ref(src_emb, h0, *params["enc"])
    dec_out, _ = _gru_ref(tgt_emb, h_enc, *params["dec"])
    return dec_out @ params["out_w"] + params["out_b"]


# ----------------------------- parameter init -----------------------------

def init_params(key):
    ks = jax.random.split(key, 12)
    k = 1.0 / jnp.sqrt(HIDDEN)

    def u(key, shape, scale):
        return jax.random.uniform(key, shape, jnp.float32, -scale, scale)

    def gru_params(k0, k1, k2, k3):
        # stored pre-transposed: (in, 3H), (H, 3H), biases (1, 3H)
        return (u(k0, (EMBED, 3 * HIDDEN), k),
                u(k1, (HIDDEN, 3 * HIDDEN), k),
                u(k2, (1, 3 * HIDDEN), k),
                u(k3, (1, 3 * HIDDEN), k))

    return {
        "embed": jax.random.normal(ks[0], (VOCAB, EMBED), jnp.float32),
        "enc": gru_params(ks[1], ks[2], ks[3], ks[4]),
        "dec": gru_params(ks[5], ks[6], ks[7], ks[8]),
        "out_w": u(ks[9], (HIDDEN, VOCAB), k),
        "out_b": u(ks[10], (1, VOCAB), k),
    }


# ----------------------------- main -----------------------------

if __name__ == "__main__":
    key = jax.random.PRNGKey(0)
    pkey, skey, tkey = jax.random.split(key, 3)

    params = init_params(pkey)

    B, T_SRC, T_TGT = 2, 8, 9
    src = jax.random.randint(skey, (B, T_SRC), 0, VOCAB, dtype=jnp.int32)
    tgt = jax.random.randint(tkey, (B, T_TGT), 0, VOCAB, dtype=jnp.int32)

    fwd = jax.jit(rnn_seq2seq_forward)
    logits = fwd(params, src, tgt)
    logits = jax.block_until_ready(logits)

    assert logits.shape == (B, T_TGT - 1, VOCAB), logits.shape

    ref = _forward_ref(params, src, tgt)
    assert jnp.allclose(logits, ref, rtol=1e-4, atol=1e-4), \
        float(jnp.max(jnp.abs(logits - ref)))

    print("KERNEL_OK")
</pallas_src>

<mosaic_0001>
module attributes {stable_mosaic.version = 11 : i64} {
  func.func @_seq2seq_kernel(%arg0: memref<64x64xf32, #tpu.memory_space<vmem>>, %arg1: memref<64x64xf32, #tpu.memory_space<vmem>>, %arg2: memref<64x384xf32, #tpu.memory_space<vmem>>, %arg3: memref<128x384xf32, #tpu.memory_space<vmem>>, %arg4: memref<1x384xf32, #tpu.memory_space<vmem>>, %arg5: memref<1x384xf32, #tpu.memory_space<vmem>>, %arg6: memref<64x384xf32, #tpu.memory_space<vmem>>, %arg7: memref<128x384xf32, #tpu.memory_space<vmem>>, %arg8: memref<1x384xf32, #tpu.memory_space<vmem>>, %arg9: memref<1x384xf32, #tpu.memory_space<vmem>>, %arg10: memref<128x128xf32, #tpu.memory_space<vmem>>, %arg11: memref<1x128xf32, #tpu.memory_space<vmem>>, %arg12: memref<64x128xf32, #tpu.memory_space<vmem>>, %arg13: memref<64x128xf32, #tpu.memory_space<vmem>>) attributes {dimension_semantics = [], scalar_prefetch = 0 : i64, scratch_operands = 1 : i64, tpu.core_type = #tpu.core_type<tc>} {
    %c0 = arith.constant 0 : index
    %c0_0 = arith.constant 0 : index
    %0 = vector.load %arg0[%c0, %c0_0] : memref<64x64xf32, #tpu.memory_space<vmem>>, vector<64x64xf32>
    %c0_1 = arith.constant 0 : index
    %c0_2 = arith.constant 0 : index
    %1 = vector.load %arg2[%c0_1, %c0_2] : memref<64x384xf32, #tpu.memory_space<vmem>>, vector<64x384xf32>
    %cst = arith.constant dense<0.000000e+00> : vector<64x384xf32>
    %2 = tpu.matmul %0, %1, %cst {dimension_numbers = #tpu.dot_dimension_numbers<[1], [0], [0], [1], [0, 0, 1, 1], [], []>} : vector<64x64xf32>, vector<64x384xf32>, vector<64x384xf32> -> vector<64x384xf32>
    %c0_3 = arith.constant 0 : index
    %c0_4 = arith.constant 0 : index
    %3 = vector.load %arg4[%c0_3, %c0_4] : memref<1x384xf32, #tpu.memory_space<vmem>>, vector<1x384xf32>
    %4 = vector.broadcast %3 : vector<1x384xf32> to vector<64x384xf32>
    %5 = arith.addf %2, %4 : vector<64x384xf32>
    %cst_5 = arith.constant 0.000000e+00 : f32
    %6 = vector.broadcast %cst_5 : f32 to vector<8x128xf32>
    %c0_6 = arith.constant 0 : index
    %c0_7 = arith.constant 0 : index
    %7 = vector.load %arg3[%c0_6, %c0_7] : memref<128x384xf32, #tpu.memory_space<vmem>>, vector<128x384xf32>
    %c0_8 = arith.constant 0 : index
    %c0_9 = arith.constant 0 : index
    %8 = vector.load %arg5[%c0_8, %c0_9] : memref<1x384xf32, #tpu.memory_space<vmem>>, vector<1x384xf32>
    %9 = vector.shape_cast %8 : vector<1x384xf32> to vector<1x384xf32>
    %10 = vector.broadcast %9 : vector<1x384xf32> to vector<8x384xf32>
    %11 = vector.extract_strided_slice %5 {offsets = [0, 0], sizes = [8, 384], strides = [1, 1]} : vector<64x384xf32> to vector<8x384xf32>
    %cst_10 = arith.constant dense<0.000000e+00> : vector<8x384xf32>
    %12 = tpu.matmul %6, %7, %cst_10 {dimension_numbers = #tpu.dot_dimension_numbers<[1], [0], [0], [1], [0, 0, 1, 1], [], []>} : vector<8x128xf32>, vector<128x384xf32>, vector<8x384xf32> -> vector<8x384xf32>
    %13 = arith.addf %12, %10 : vector<8x384xf32>
    %14 = vector.extract_strided_slice %11 {offsets = [0, 0], sizes = [8, 128], strides = [1, 1]} : vector<8x384xf32> to vector<8x128xf32>
    %15 = vector.extract_strided_slice %13 {offsets = [0, 0], sizes = [8, 128], strides = [1, 1]} : vector<8x384xf32> to vector<8x128xf32>
    %16 = arith.addf %14, %15 : vector<8x128xf32>
    %17 = arith.negf %16 : vector<8x128xf32>
    %18 = math.exp %17 : vector<8x128xf32>
    %cst_11 = arith.constant 1.000000e+00 : f32
    %19 = vector.broadcast %cst_11 : f32 to vector<8x128xf32>
    %20 = arith.addf %19, %18 : vector<8x128xf32>
    %21 = arith.divf %19, %20 : vector<8x128xf32>
    %22 = vector.extract_strided_slice %11 {offsets = [0, 128], sizes = [8, 128], strides = [1, 1]} : vector<8x384xf32> to vector<8x128xf32>
    %23 = vector.extract_strided_slice %13 {offsets = [0, 128], sizes = [8, 128], strides = [1, 1]} : vector<8x384xf32> to vector<8x128xf32>
    %24 = arith.addf %22, %23 : vector<8x128xf32>
    %25 = arith.negf %24 : vector<8x128xf32>
    %26 = math.exp %25 : vector<8x128xf32>
    %cst_12 = arith.constant 1.000000e+00 : f32
    %27 = vector.broadcast %cst_12 : f32 to vector<8x128xf32>
    %28 = arith.addf %27, %26 : vector<8x128xf32>
    %29 = arith.divf %27, %28 : vector<8x128xf32>
    %30 = vector.extract_strided_slice %11 {offsets = [0, 256], sizes = [8, 128], strides = [1, 1]} : vector<8x384xf32> to vector<8x128xf32>
    %31 = vector.extract_strided_slice %13 {offsets = [0, 256], sizes = [8, 128], strides = [1, 1]} : vector<8x384xf32> to vector<8x128xf32>
    %32 = arith.mulf %21, %31 : vector<8x128xf32>
    %33 = arith.addf %30, %32 : vector<8x128xf32>
    %34 = math.tanh %33 : vector<8x128xf32>
    %cst_13 = arith.constant 1.000000e+00 : f32
    %35 = vector.broadcast %cst_13 : f32 to vector<8x128xf32>
    %36 = arith.subf %35, %29 : vector<8x128xf32>
    %37 = arith.mulf %36, %34 : vector<8x128xf32>
    %38 = arith.mulf %29, %6 : vector<8x128xf32>
    %39 = arith.addf %37, %38 : vector<8x128xf32>
    %40 = vector.extract_strided_slice %5 {offsets = [8, 0], sizes = [8, 384], strides = [1, 1]} : vector<64x384xf32> to vector<8x384xf32>
    %cst_14 = arith.constant dense<0.000000e+00> : vector<8x384xf32>
    %41 = tpu.matmul %39, %7, %cst_14 {dimension_numbers = #tpu.dot_dimension_numbers<[1], [0], [0], [1], [0, 0, 1, 1], [], []>} : vector<8x128xf32>, vector<128x384xf32>, vector<8x384xf32> -> vector<8x384xf32>
    %42 = arith.addf %41, %10 : vector<8x384xf32>
    %43 = vector.extract_strided_slice %40 {offsets = [0, 0], sizes = [8, 128], strides = [1, 1]} : vector<8x384xf32> to vector<8x128xf32>
    %44 = vector.extract_strided_slice %42 {offsets = [0, 0], sizes = [8, 128], strides = [1, 1]} : vector<8x384xf32> to vector<8x128xf32>
    %45 = arith.addf %43, %44 : vector<8x128xf32>
    %46 = arith.negf %45 : vector<8x128xf32>
    %47 = math.exp %46 : vector<8x128xf32>
    %cst_15 = arith.constant 1.000000e+00 : f32
    %48 = vector.broadcast %cst_15 : f32 to vector<8x128xf32>
    %49 = arith.addf %48, %47 : vector<8x128xf32>
    %50 = arith.divf %48, %49 : vector<8x128xf32>
    %51 = vector.extract_strided_slice %40 {offsets = [0, 128], sizes = [8, 128], strides = [1, 1]} : vector<8x384xf32> to vector<8x128xf32>
    %52 = vector.extract_strided_slice %42 {offsets = [0, 128], sizes = [8, 128], strides = [1, 1]} : vector<8x384xf32> to vector<8x128xf32>
    %53 = arith.addf %51, %52 : vector<8x128xf32>
    %54 = arith.negf %53 : vector<8x128xf32>
    %55 = math.exp %54 : vector<8x128xf32>
    %cst_16 = arith.constant 1.000000e+00 : f32
    %56 = vector.broadcast %cst_16 : f32 to vector<8x128xf32>
    %57 = arith.addf %56, %55 : vector<8x128xf32>
    %58 = arith.divf %56, %57 : vector<8x128xf32>
    %59 = vector.extract_strided_slice %40 {offsets = [0, 256], sizes = [8, 128], strides = [1, 1]} : vector<8x384xf32> to vector<8x128xf32>
    %60 = vector.extract_strided_slice %42 {offsets = [0, 256], sizes = [8, 128], strides = [1, 1]} : vector<8x384xf32> to vector<8x128xf32>
    %61 = arith.mulf %50, %60 : vector<8x128xf32>
    %62 = arith.addf %59, %61 : vector<8x128xf32>
    %63 = math.tanh %62 : vector<8x128xf32>
    %cst_17 = arith.constant 1.000000e+00 : f32
    %64 = vector.broadcast %cst_17 : f32 to vector<8x128xf32>
    %65 = arith.subf %64, %58 : vector<8x128xf32>
    %66 = arith.mulf %65, %63 : vector<8x128xf32>
    %67 = arith.mulf %58, %39 : vector<8x128xf32>
    %68 = arith.addf %66, %67 : vector<8x128xf32>
    %69 = vector.extract_strided_slice %5 {offsets = [16, 0], sizes = [8, 384], strides = [1, 1]} : vector<64x384xf32> to vector<8x384xf32>
    %cst_18 = arith.constant dense<0.000000e+00> : vector<8x384xf32>
    %70 = tpu.matmul %68, %7, %cst_18 {dimension_numbers = #tpu.dot_dimension_numbers<[1], [0], [0], [1], [0, 0, 1, 1], [], []>} : vector<8x128xf32>, vector<128x384xf32>, vector<8x384xf32> -> vector<8x384xf32>
    %71 = arith.addf %70, %10 : vector<8x384xf32>
    %72 = vector.extract_strided_slice %69 {offsets = [0, 0], sizes = [8, 128], strides = [1, 1]} : vector<8x384xf32> to vector<8x128xf32>
    %73 = vector.extract_strided_slice %71 {offsets = [0, 0], sizes = [8, 128], strides = [1, 1]} : vector<8x384xf32> to vector<8x128xf32>
    %74 = arith.addf %72, %73 : vector<8x128xf32>
    %75 = arith.negf %74 : vector<8x128xf32>
    %76 = math.exp %75 : vector<8x128xf32>
    %cst_19 = arith.constant 1.000000e+00 : f32
    %77 = vector.broadcast %cst_19 : f32 to vector<8x128xf32>
    %78 = arith.addf %77, %76 : vector<8x128xf32>
    %79 = arith.divf %77, %78 : vector<8x128xf32>
    %80 = vector.extract_strided_slice %69 {offsets = [0, 128], sizes = [8, 128], strides = [1, 1]} : vector<8x384xf32> to vector<8x128xf32>
    %81 = vector.extract_strided_slice %71 {offsets = [0, 128], sizes = [8, 128], strides = [1, 1]} : vector<8x384xf32> to vector<8x128xf32>
    %82 = arith.addf %80, %81 : vector<8x128xf32>
    %83 = arith.negf %82 : vector<8x128xf32>
    %84 = math.exp %83 : vector<8x128xf32>
    %cst_20 = arith.constant 1.000000e+00 : f32
    %85 = vector.broadcast %cst_20 : f32 to vector<8x128xf32>
    %86 = arith.addf %85, %84 : vector<8x128xf32>
    %87 = arith.divf %85, %86 : vector<8x128xf32>
    %88 = vector.extract_strided_slice %69 {offsets = [0, 256], sizes = [8, 128], strides = [1, 1]} : vector<8x384xf32> to vector<8x128xf32>
    %89 = vector.extract_strided_slice %71 {offsets = [0, 256], sizes = [8, 128], strides = [1, 1]} : vector<8x384xf32> to vector<8x128xf32>
    %90 = arith.mulf %79, %89 : vector<8x128xf32>
    %91 = arith.addf %88, %90 : vector<8x128xf32>
    %92 = math.tanh %91 : vector<8x128xf32>
    %cst_21 = arith.constant 1.000000e+00 : f32
    %93 = vector.broadcast %cst_21 : f32 to vector<8x128xf32>
    %94 = arith.subf %93, %87 : vector<8x128xf32>
    %95 = arith.mulf %94, %92 : vector<8x128xf32>
    %96 = arith.mulf %87, %68 : vector<8x128xf32>
    %97 = arith.addf %95, %96 : vector<8x128xf32>
    %98 = vector.extract_strided_slice %5 {offsets = [24, 0], sizes = [8, 384], strides = [1, 1]} : vector<64x384xf32> to vector<8x384xf32>
    %cst_22 = arith.constant dense<0.000000e+00> : vector<8x384xf32>
    %99 = tpu.matmul %97, %7, %cst_22 {dimension_numbers = #tpu.dot_dimension_numbers<[1], [0], [0], [1], [0, 0, 1, 1], [], []>} : vector<8x128xf32>, vector<128x384xf32>, vector<8x384xf32> -> vector<8x384xf32>
    %100 = arith.addf %99, %10 : vector<8x384xf32>
    %101 = vector.extract_strided_slice %98 {offsets = [0, 0], sizes = [8, 128], strides = [1, 1]} : vector<8x384xf32> to vector<8x128xf32>
    %102 = vector.extract_strided_slice %100 {offsets = [0, 0], sizes = [8, 128], strides = [1, 1]} : vector<8x384xf32> to vector<8x128xf32>
    %103 = arith.addf %101, %102 : vector<8x128xf32>
    %104 = arith.negf %103 : vector<8x128xf32>
    %105 = math.exp %104 : vector<8x128xf32>
    %cst_23 = arith.constant 1.000000e+00 : f32
    %106 = vector.broadcast %cst_23 : f32 to vector<8x128xf32>
    %107 = arith.addf %106, %105 : vector<8x128xf32>
    %108 = arith.divf %106, %107 : vector<8x128xf32>
    %109 = vector.extract_strided_slice %98 {offsets = [0, 128], sizes = [8, 128], strides = [1, 1]} : vector<8x384xf32> to vector<8x128xf32>
    %110 = vector.extract_strided_slice %100 {offsets = [0, 128], sizes = [8, 128], strides = [1, 1]} : vector<8x384xf32> to vector<8x128xf32>
    %111 = arith.addf %109, %110 : vector<8x128xf32>
    %112 = arith.negf %111 : vector<8x128xf32>
    %113 = math.exp %112 : vector<8x128xf32>
    %cst_24 = arith.constant 1.000000e+00 : f32
    %114 = vector.broadcast %cst_24 : f32 to vector<8x128xf32>
    %115 = arith.addf %114, %113 : vector<8x128xf32>
    %116 = arith.divf %114, %115 : vector<8x128xf32>
    %117 = vector.extract_strided_slice %98 {offsets = [0, 256], sizes = [8, 128], strides = [1, 1]} : vector<8x384xf32> to vector<8x128xf32>
    %118 = vector.extract_strided_slice %100 {offsets = [0, 256], sizes = [8, 128], strides = [1, 1]} : vector<8x384xf32> to vector<8x128xf32>
    %119 = arith.mulf %108, %118 : vector<8x128xf32>
    %120 = arith.addf %117, %119 : vector<8x128xf32>
    %121 = math.tanh %120 : vector<8x128xf32>
    %cst_25 = arith.constant 1.000000e+00 : f32
    %122 = vector.broadcast %cst_25 : f32 to vector<8x128xf32>
    %123 = arith.subf %122, %116 : vector<8x128xf32>
    %124 = arith.mulf %123, %121 : vector<8x128xf32>
    %125 = arith.mulf %116, %97 : vector<8x128xf32>
    %126 = arith.addf %124, %125 : vector<8x128xf32>
    %127 = vector.extract_strided_slice %5 {offsets = [32, 0], sizes = [8, 384], strides = [1, 1]} : vector<64x384xf32> to vector<8x384xf32>
    %cst_26 = arith.constant dense<0.000000e+00> : vector<8x384xf32>
    %128 = tpu.matmul %126, %7, %cst_26 {dimension_numbers = #tpu.dot_dimension_numbers<[1], [0], [0], [1], [0, 0, 1, 1], [], []>} : vector<8x128xf32>, vector<128x384xf32>, vector<8x384xf32> -> vector<8x384xf32>
    %129 = arith.addf %128, %10 : vector<8x384xf32>
    %130 = vector.extract_strided_slice %127 {offsets = [0, 0], sizes = [8, 128], strides = [1, 1]} : vector<8x384xf32> to vector<8x128xf32>
    %131 = vector.extract_strided_slice %129 {offsets = [0, 0], sizes = [8, 128], strides = [1, 1]} : vector<8x384xf32> to vector<8x128xf32>
    %132 = arith.addf %130, %131 : vector<8x128xf32>
    %133 = arith.negf %132 : vector<8x128xf32>
    %134 = math.exp %133 : vector<8x128xf32>
    %cst_27 = arith.constant 1.000000e+00 : f32
    %135 = vector.broadcast %cst_27 : f32 to vector<8x128xf32>
    %136 = arith.addf %135, %134 : vector<8x128xf32>
    %137 = arith.divf %135, %136 : vector<8x128xf32>
    %138 = vector.extract_strided_slice %127 {offsets = [0, 128], sizes = [8, 128], strides = [1, 1]} : vector<8x384xf32> to vector<8x128xf32>
    %139 = vector.extract_strided_slice %129 {offsets = [0, 128], sizes = [8, 128], strides = [1, 1]} : vector<8x384xf32> to vector<8x128xf32>
    %140 = arith.addf %138, %139 : vector<8x128xf32>
    %141 = arith.negf %140 : vector<8x128xf32>
    %142 = math.exp %141 : vector<8x128xf32>
    %cst_28 = arith.constant 1.000000e+00 : f32
    %143 = vector.broadcast %cst_28 : f32 to vector<8x128xf32>
    %144 = arith.addf %143, %142 : vector<8x128xf32>
    %145 = arith.divf %143, %144 : vector<8x128xf32>
    %146 = vector.extract_strided_slice %127 {offsets = [0, 256], sizes = [8, 128], strides = [1, 1]} : vector<8x384xf32> to vector<8x128xf32>
    %147 = vector.extract_strided_slice %129 {offsets = [0, 256], sizes = [8, 128], strides = [1, 1]} : vector<8x384xf32> to vector<8x128xf32>
    %148 = arith.mulf %137, %147 : vector<8x128xf32>
    %149 = arith.addf %146, %148 : vector<8x128xf32>
    %150 = math.tanh %149 : vector<8x128xf32>
    %cst_29 = arith.constant 1.000000e+00 : f32
    %151 = vector.broadcast %cst_29 : f32 to vector<8x128xf32>
    %152 = arith.subf %151, %145 : vector<8x128xf32>
    %153 = arith.mulf %152, %150 : vector<8x128xf32>
    %154 = arith.mulf %145, %126 : vector<8x128xf32>
    %155 = arith.addf %153, %154 : vector<8x128xf32>
    %156 = vector.extract_strided_slice %5 {offsets = [40, 0], sizes = [8, 384], strides = [1, 1]} : vector<64x384xf32> to vector<8x384xf32>
    %cst_30 = arith.constant dense<0.000000e+00> : vector<8x384xf32>
    %157 = tpu.matmul %155, %7, %cst_30 {dimension_numbers = #tpu.dot_dimension_numbers<[1], [0], [0], [1], [0, 0, 1, 1], [], []>} : vector<8x128xf32>, vector<128x384xf32>, vector<8x384xf32> -> vector<8x384xf32>
    %158 = arith.addf %157, %10 : vector<8x384xf32>
    %159 = vector.extract_strided_slice %156 {offsets = [0, 0], sizes = [8, 128], strides = [1, 1]} : vector<8x384xf32> to vector<8x128xf32>
    %160 = vector.extract_strided_slice %158 {offsets = [0, 0], sizes = [8, 128], strides = [1, 1]} : vector<8x384xf32> to vector<8x128xf32>
    %161 = arith.addf %159, %160 : vector<8x128xf32>
    %162 = arith.negf %161 : vector<8x128xf32>
    %163 = math.exp %162 : vector<8x128xf32>
    %cst_31 = arith.constant 1.000000e+00 : f32
    %164 = vector.broadcast %cst_31 : f32 to vector<8x128xf32>
    %165 = arith.addf %164, %163 : vector<8x128xf32>
    %166 = arith.divf %164, %165 : vector<8x128xf32>
    %167 = vector.extract_strided_slice %156 {offsets = [0, 128], sizes = [8, 128], strides = [1, 1]} : vector<8x384xf32> to vector<8x128xf32>
    %168 = vector.extract_strided_slice %158 {offsets = [0, 128], sizes = [8, 128], strides = [1, 1]} : vector<8x384xf32> to vector<8x128xf32>
    %169 = arith.addf %167, %168 : vector<8x128xf32>
    %170 = arith.negf %169 : vector<8x128xf32>
    %171 = math.exp %170 : vector<8x128xf32>
    %cst_32 = arith.constant 1.000000e+00 : f32
    %172 = vector.broadcast %cst_32 : f32 to vector<8x128xf32>
    %173 = arith.addf %172, %171 : vector<8x128xf32>
    %174 = arith.divf %172, %173 : vector<8x128xf32>
    %175 = vector.extract_strided_slice %156 {offsets = [0, 256], sizes = [8, 128], strides = [1, 1]} : vector<8x384xf32> to vector<8x128xf32>
    %176 = vector.extract_strided_slice %158 {offsets = [0, 256], sizes = [8, 128], strides = [1, 1]} : vector<8x384xf32> to vector<8x128xf32>
    %177 = arith.mulf %166, %176 : vector<8x128xf32>
    %178 = arith.addf %175, %177 : vector<8x128xf32>
    %179 = math.tanh %178 : vector<8x128xf32>
    %cst_33 = arith.constant 1.000000e+00 : f32
    %180 = vector.broadcast %cst_33 : f32 to vector<8x128xf32>
    %181 = arith.subf %180, %174 : vector<8x128xf32>
    %182 = arith.mulf %181, %179 : vector<8x128xf32>
    %183 = arith.mulf %174, %155 : vector<8x128xf32>
    %184 = arith.addf %182, %183 : vector<8x128xf32>
    %185 = vector.extract_strided_slice %5 {offsets = [48, 0], sizes = [8, 384], strides = [1, 1]} : vector<64x384xf32> to vector<8x384xf32>
    %cst_34 = arith.constant dense<0.000000e+00> : vector<8x384xf32>
    %186 = tpu.matmul %184, %7, %cst_34 {dimension_numbers = #tpu.dot_dimension_numbers<[1], [0], [0], [1], [0, 0, 1, 1], [], []>} : vector<8x128xf32>, vector<128x384xf32>, vector<8x384xf32> -> vector<8x384xf32>
    %187 = arith.addf %186, %10 : vector<8x384xf32>
    %188 = vector.extract_strided_slice %185 {offsets = [0, 0], sizes = [8, 128], strides = [1, 1]} : vector<8x384xf32> to vector<8x128xf32>
    %189 = vector.extract_strided_slice %187 {offsets = [0, 0], sizes = [8, 128], strides = [1, 1]} : vector<8x384xf32> to vector<8x128xf32>
    %190 = arith.addf %188, %189 : vector<8x128xf32>
    %191 = arith.negf %190 : vector<8x128xf32>
    %192 = math.exp %191 : vector<8x128xf32>
    %cst_35 = arith.constant 1.000000e+00 : f32
    %193 = vector.broadcast %cst_35 : f32 to vector<8x128xf32>
    %194 = arith.addf %193, %192 : vector<8x128xf32>
    %195 = arith.divf %193, %194 : vector<8x128xf32>
    %196 = vector.extract_strided_slice %185 {offsets = [0, 128], sizes = [8, 128], strides = [1, 1]} : vector<8x384xf32> to vector<8x128xf32>
    %197 = vector.extract_strided_slice %187 {offsets = [0, 128], sizes = [8, 128], strides = [1, 1]} : vector<8x384xf32> to vector<8x128xf32>
    %198 = arith.addf %196, %197 : vector<8x128xf32>
    %199 = arith.negf %198 : vector<8x128xf32>
    %200 = math.exp %199 : vector<8x128xf32>
    %cst_36 = arith.constant 1.000000e+00 : f32
    %201 = vector.broadcast %cst_36 : f32 to vector<8x128xf32>
    %202 = arith.addf %201, %200 : vector<8x128xf32>
    %203 = arith.divf %201, %202 : vector<8x128xf32>
    %204 = vector.extract_strided_slice %185 {offsets = [0, 256], sizes = [8, 128], strides = [1, 1]} : vector<8x384xf32> to vector<8x128xf32>
    %205 = vector.extract_strided_slice %187 {offsets = [0, 256], sizes = [8, 128], strides = [1, 1]} : vector<8x384xf32> to vector<8x128xf32>
    %206 = arith.mulf %195, %205 : vector<8x128xf32>
    %207 = arith.addf %204, %206 : vector<8x128xf32>
    %208 = math.tanh %207 : vector<8x128xf32>
    %cst_37 = arith.constant 1.000000e+00 : f32
    %209 = vector.broadcast %cst_37 : f32 to vector<8x128xf32>
    %210 = arith.subf %209, %203 : vector<8x128xf32>
    %211 = arith.mulf %210, %208 : vector<8x128xf32>
    %212 = arith.mulf %203, %184 : vector<8x128xf32>
    %213 = arith.addf %211, %212 : vector<8x128xf32>
    %214 = vector.extract_strided_slice %5 {offsets = [56, 0], sizes = [8, 384], strides = [1, 1]} : vector<64x384xf32> to vector<8x384xf32>
    %cst_38 = arith.constant dense<0.000000e+00> : vector<8x384xf32>
    %215 = tpu.matmul %213, %7, %cst_38 {dimension_numbers = #tpu.dot_dimension_numbers<[1], [0], [0], [1], [0, 0, 1, 1], [], []>} : vector<8x128xf32>, vector<128x384xf32>, vector<8x384xf32> -> vector<8x384xf32>
    %216 = arith.addf %215, %10 : vector<8x384xf32>
    %217 = vector.extract_strided_slice %214 {offsets = [0, 0], sizes = [8, 128], strides = [1, 1]} : vector<8x384xf32> to vector<8x128xf32>
    %218 = vector.extract_strided_slice %216 {offsets = [0, 0], sizes = [8, 128], strides = [1, 1]} : vector<8x384xf32> to vector<8x128xf32>
    %219 = arith.addf %217, %218 : vector<8x128xf32>
    %220 = arith.negf %219 : vector<8x128xf32>
    %221 = math.exp %220 : vector<8x128xf32>
    %cst_39 = arith.constant 1.000000e+00 : f32
    %222 = vector.broadcast %cst_39 : f32 to vector<8x128xf32>
    %223 = arith.addf %222, %221 : vector<8x128xf32>
    %224 = arith.divf %222, %223 : vector<8x128xf32>
    %225 = vector.extract_strided_slice %214 {offsets = [0, 128], sizes = [8, 128], strides = [1, 1]} : vector<8x384xf32> to vector<8x128xf32>
    %226 = vector.extract_strided_slice %216 {offsets = [0, 128], sizes = [8, 128], strides = [1, 1]} : vector<8x384xf32> to vector<8x128xf32>
    %227 = arith.addf %225, %226 : vector<8x128xf32>
    %228 = arith.negf %227 : vector<8x128xf32>
    %229 = math.exp %228 : vector<8x128xf32>
    %cst_40 = arith.constant 1.000000e+00 : f32
    %230 = vector.broadcast %cst_40 : f32 to vector<8x128xf32>
    %231 = arith.addf %230, %229 : vector<8x128xf32>
    %232 = arith.divf %230, %231 : vector<8x128xf32>
    %233 = vector.extract_strided_slice %214 {offsets = [0, 256], sizes = [8, 128], strides = [1, 1]} : vector<8x384xf32> to vector<8x128xf32>
    %234 = vector.extract_strided_slice %216 {offsets = [0, 256], sizes = [8, 128], strides = [1, 1]} : vector<8x384xf32> to vector<8x128xf32>
    %235 = arith.mulf %224, %234 : vector<8x128xf32>
    %236 = arith.addf %233, %235 : vector<8x128xf32>
    %237 = math.tanh %236 : vector<8x128xf32>
    %cst_41 = arith.constant 1.000000e+00 : f32
    %238 = vector.broadcast %cst_41 : f32 to vector<8x128xf32>
    %239 = arith.subf %238, %232 : vector<8x128xf32>
    %240 = arith.mulf %239, %237 : vector<8x128xf32>
    %241 = arith.mulf %232, %213 : vector<8x128xf32>
    %242 = arith.addf %240, %241 : vector<8x128xf32>
    %c0_42 = arith.constant 0 : index
    %c0_43 = arith.constant 0 : index
    %243 = vector.load %arg1[%c0_42, %c0_43] : memref<64x64xf32, #tpu.memory_space<vmem>>, vector<64x64xf32>
    %c0_44 = arith.constant 0 : index
    %c0_45 = arith.constant 0 : index
    %244 = vector.load %arg6[%c0_44, %c0_45] : memref<64x384xf32, #tpu.memory_space<vmem>>, vector<64x384xf32>
    %cst_46 = arith.constant dense<0.000000e+00> : vector<64x384xf32>
    %245 = tpu.matmul %243, %244, %cst_46 {dimension_numbers = #tpu.dot_dimension_numbers<[1], [0], [0], [1], [0, 0, 1, 1], [], []>} : vector<64x64xf32>, vector<64x384xf32>, vector<64x384xf32> -> vector<64x384xf32>
    %c0_47 = arith.constant 0 : index
    %c0_48 = arith.constant 0 : index
    %246 = vector.load %arg8[%c0_47, %c0_48] : memref<1x384xf32, #tpu.memory_space<vmem>>, vector<1x384xf32>
    %247 = vector.broadcast %246 : vector<1x384xf32> to vector<64x384xf32>
    %248 = arith.addf %245, %247 : vector<64x384xf32>
    %c0_49 = arith.constant 0 : index
    %c0_50 = arith.constant 0 : index
    %249 = vector.load %arg7[%c0_49, %c0_50] : memref<128x384xf32, #tpu.memory_space<vmem>>, vector<128x384xf32>
    %c0_51 = arith.constant 0 : index
    %c0_52 = arith.constant 0 : index
    %250 = vector.load %arg9[%c0_51, %c0_52] : memref<1x384xf32, #tpu.memory_space<vmem>>, vector<1x384xf32>
    %251 = vector.shape_cast %250 : vector<1x384xf32> to vector<1x384xf32>
    %252 = vector.broadcast %251 : vector<1x384xf32> to vector<8x384xf32>
    %253 = vector.extract_strided_slice %248 {offsets = [0, 0], sizes = [8, 384], strides = [1, 1]} : vector<64x384xf32> to vector<8x384xf32>
    %cst_53 = arith.constant dense<0.000000e+00> : vector<8x384xf32>
    %254 = tpu.matmul %242, %249, %cst_53 {dimension_numbers = #tpu.dot_dimension_numbers<[1], [0], [0], [1], [0, 0, 1, 1], [], []>} : vector<8x128xf32>, vector<128x384xf32>, vector<8x384xf32> -> vector<8x384xf32>
    %255 = arith.addf %254, %252 : vector<8x384xf32>
    %256 = vector.extract_strided_slice %253 {offsets = [0, 0], sizes = [8, 128], strides = [1, 1]} : vector<8x384xf32> to vector<8x128xf32>
    %257 = vector.extract_strided_slice %255 {offsets = [0, 0], sizes = [8, 128], strides = [1, 1]} : vector<8x384xf32> to vector<8x128xf32>
    %258 = arith.addf %256, %257 : vector<8x128xf32>
    %259 = arith.negf %258 : vector<8x128xf32>
    %260 = math.exp %259 : vector<8x128xf32>
    %cst_54 = arith.constant 1.000000e+00 : f32
    %261 = vector.broadcast %cst_54 : f32 to vector<8x128xf32>
    %262 = arith.addf %261, %260 : vector<8x128xf32>
    %263 = arith.divf %261, %262 : vector<8x128xf32>
    %264 = vector.extract_strided_slice %253 {offsets = [0, 128], sizes = [8, 128], strides = [1, 1]} : vector<8x384xf32> to vector<8x128xf32>
    %265 = vector.extract_strided_slice %255 {offsets = [0, 128], sizes = [8, 128], strides = [1, 1]} : vector<8x384xf32> to vector<8x128xf32>
    %266 = arith.addf %264, %265 : vector<8x128xf32>
    %267 = arith.negf %266 : vector<8x128xf32>
    %268 = math.exp %267 : vector<8x128xf32>
    %cst_55 = arith.constant 1.000000e+00 : f32
    %269 = vector.broadcast %cst_55 : f32 to vector<8x128xf32>
    %270 = arith.addf %269, %268 : vector<8x128xf32>
    %271 = arith.divf %269, %270 : vector<8x128xf32>
    %272 = vector.extract_strided_slice %253 {offsets = [0, 256], sizes = [8, 128], strides = [1, 1]} : vector<8x384xf32> to vector<8x128xf32>
    %273 = vector.extract_strided_slice %255 {offsets = [0, 256], sizes = [8, 128], strides = [1, 1]} : vector<8x384xf32> to vector<8x128xf32>
    %274 = arith.mulf %263, %273 : vector<8x128xf32>
    %275 = arith.addf %272, %274 : vector<8x128xf32>
    %276 = math.tanh %275 : vector<8x128xf32>
    %cst_56 = arith.constant 1.000000e+00 : f32
    %277 = vector.broadcast %cst_56 : f32 to vector<8x128xf32>
    %278 = arith.subf %277, %271 : vector<8x128xf32>
    %279 = arith.mulf %278, %276 : vector<8x128xf32>
    %280 = arith.mulf %271, %242 : vector<8x128xf32>
    %281 = arith.addf %279, %280 : vector<8x128xf32>
    %c0_57 = arith.constant 0 : index
    %c0_58 = arith.constant 0 : index
    %282 = vector.load %arg13[%c0_57, %c0_58] : memref<64x128xf32, #tpu.memory_space<vmem>>, vector<8x128xf32>
    tpu.vector_store %arg13[%c0_57, %c0_58], %281 {strides = array<i32>} : memref<64x128xf32, #tpu.memory_space<vmem>>, vector<8x128xf32>,
    %283 = vector.extract_strided_slice %248 {offsets = [8, 0], sizes = [8, 384], strides = [1, 1]} : vector<64x384xf32> to vector<8x384xf32>
    %cst_59 = arith.constant dense<0.000000e+00> : vector<8x384xf32>
    %284 = tpu.matmul %281, %249, %cst_59 {dimension_numbers = #tpu.dot_dimension_numbers<[1], [0], [0], [1], [0, 0, 1, 1], [], []>} : vector<8x128xf32>, vector<128x384xf32>, vector<8x384xf32> -> vector<8x384xf32>
    %285 = arith.addf %284, %252 : vector<8x384xf32>
    %286 = vector.extract_strided_slice %283 {offsets = [0, 0], sizes = [8, 128], strides = [1, 1]} : vector<8x384xf32> to vector<8x128xf32>
    %287 = vector.extract_strided_slice %285 {offsets = [0, 0], sizes = [8, 128], strides = [1, 1]} : vector<8x384xf32> to vector<8x128xf32>
    %288 = arith.addf %286, %287 : vector<8x128xf32>
    %289 = arith.negf %288 : vector<8x128xf32>
    %290 = math.exp %289 : vector<8x128xf32>
    %cst_60 = arith.constant 1.000000e+00 : f32
    %291 = vector.broadcast %cst_60 : f32 to vector<8x128xf32>
    %292 = arith.addf %291, %290 : vector<8x128xf32>
    %293 = arith.divf %291, %292 : vector<8x128xf32>
    %294 = vector.extract_strided_slice %283 {offsets = [0, 128], sizes = [8, 128], strides = [1, 1]} : vector<8x384xf32> to vector<8x128xf32>
    %295 = vector.extract_strided_slice %285 {offsets = [0, 128], sizes = [8, 128], strides = [1, 1]} : vector<8x384xf32> to vector<8x128xf32>
    %296 = arith.addf %294, %295 : vector<8x128xf32>
    %297 = arith.negf %296 : vector<8x128xf32>
    %298 = math.exp %297 : vector<8x128xf32>
    %cst_61 = arith.constant 1.000000e+00 : f32
    %299 = vector.broadcast %cst_61 : f32 to vector<8x128xf32>
    %300 = arith.addf %299, %298 : vector<8x128xf32>
    %301 = arith.divf %299, %300 : vector<8x128xf32>
    %302 = vector.extract_strided_slice %283 {offsets = [0, 256], sizes = [8, 128], strides = [1, 1]} : vector<8x384xf32> to vector<8x128xf32>
    %303 = vector.extract_strided_slice %285 {offsets = [0, 256], sizes = [8, 128], strides = [1, 1]} : vector<8x384xf32> to vector<8x128xf32>
    %304 = arith.mulf %293, %303 : vector<8x128xf32>
    %305 = arith.addf %302, %304 : vector<8x128xf32>
    %306 = math.tanh %305 : vector<8x128xf32>
    %cst_62 = arith.constant 1.000000e+00 : f32
    %307 = vector.broadcast %cst_62 : f32 to vector<8x128xf32>
    %308 = arith.subf %307, %301 : vector<8x128xf32>
    %309 = arith.mulf %308, %306 : vector<8x128xf32>
    %310 = arith.mulf %301, %281 : vector<8x128xf32>
    %311 = arith.addf %309, %310 : vector<8x128xf32>
    %c8 = arith.constant 8 : index
    %c0_63 = arith.constant 0 : index
    %312 = vector.load %arg13[%c8, %c0_63] : memref<64x128xf32, #tpu.memory_space<vmem>>, vector<8x128xf32>
    tpu.vector_store %arg13[%c8, %c0_63], %311 {strides = array<i32>} : memref<64x128xf32, #tpu.memory_space<vmem>>, vector<8x128xf32>,
    %313 = vector.extract_strided_slice %248 {offsets = [16, 0], sizes = [8, 384], strides = [1, 1]} : vector<64x384xf32> to vector<8x384xf32>
    %cst_64 = arith.constant dense<0.000000e+00> : vector<8x384xf32>
    %314 = tpu.matmul %311, %249, %cst_64 {dimension_numbers = #tpu.dot_dimension_numbers<[1], [0], [0], [1], [0, 0, 1, 1], [], []>} : vector<8x128xf32>, vector<128x384xf32>, vector<8x384xf32> -> vector<8x384xf32>
    %315 = arith.addf %314, %252 : vector<8x384xf32>
    %316 = vector.extract_strided_slice %313 {offsets = [0, 0], sizes = [8, 128], strides = [1, 1]} : vector<8x384xf32> to vector<8x128xf32>
    %317 = vector.extract_strided_slice %315 {offsets = [0, 0], sizes = [8, 128], strides = [1, 1]} : vector<8x384xf32> to vector<8x128xf32>
    %318 = arith.addf %316, %317 : vector<8x128xf32>
    %319 = arith.negf %318 : vector<8x128xf32>
    %320 = math.exp %319 : vector<8x128xf32>
    %cst_65 = arith.constant 1.000000e+00 : f32
    %321 = vector.broadcast %cst_65 : f32 to vector<8x128xf32>
    %322 = arith.addf %321, %320 : vector<8x128xf32>
    %323 = arith.divf %321, %322 : vector<8x128xf32>
    %324 = vector.extract_strided_slice %313 {offsets = [0, 128], sizes = [8, 128], strides = [1, 1]} : vector<8x384xf32> to vector<8x128xf32>
    %325 = vector.extract_strided_slice %315 {offsets = [0, 128], sizes = [8, 128], strides = [1, 1]} : vector<8x384xf32> to vector<8x128xf32>
    %326 = arith.addf %324, %325 : vector<8x128xf32>
    %327 = arith.negf %326 : vector<8x128xf32>
    %328 = math.exp %327 : vector<8x128xf32>
    %cst_66 = arith.constant 1.000000e+00 : f32
    %329 = vector.broadcast %cst_66 : f32 to vector<8x128xf32>
    %330 = arith.addf %329, %328 : vector<8x128xf32>
    %331 = arith.divf %329, %330 : vector<8x128xf32>
    %332 = vector.extract_strided_slice %313 {offsets = [0, 256], sizes = [8, 128], strides = [1, 1]} : vector<8x384xf32> to vector<8x128xf32>
    %333 = vector.extract_strided_slice %315 {offsets = [0, 256], sizes = [8, 128], strides = [1, 1]} : vector<8x384xf32> to vector<8x128xf32>
    %334 = arith.mulf %323, %333 : vector<8x128xf32>
    %335 = arith.addf %332, %334 : vector<8x128xf32>
    %336 = math.tanh %335 : vector<8x128xf32>
    %cst_67 = arith.constant 1.000000e+00 : f32
    %337 = vector.broadcast %cst_67 : f32 to vector<8x128xf32>
    %338 = arith.subf %337, %331 : vector<8x128xf32>
    %339 = arith.mulf %338, %336 : vector<8x128xf32>
    %340 = arith.mulf %331, %311 : vector<8x128xf32>
    %341 = arith.addf %339, %340 : vector<8x128xf32>
    %c16 = arith.constant 16 : index
    %c0_68 = arith.constant 0 : index
    %342 = vector.load %arg13[%c16, %c0_68] : memref<64x128xf32, #tpu.memory_space<vmem>>, vector<8x128xf32>
    tpu.vector_store %arg13[%c16, %c0_68], %341 {strides = array<i32>} : memref<64x128xf32, #tpu.memory_space<vmem>>, vector<8x128xf32>,
    %343 = vector.extract_strided_slice %248 {offsets = [24, 0], sizes = [8, 384], strides = [1, 1]} : vector<64x384xf32> to vector<8x384xf32>
    %cst_69 = arith.constant dense<0.000000e+00> : vector<8x384xf32>
    %344 = tpu.matmul %341, %249, %cst_69 {dimension_numbers = #tpu.dot_dimension_numbers<[1], [0], [0], [1], [0, 0, 1, 1], [], []>} : vector<8x128xf32>, vector<128x384xf32>, vector<8x384xf32> -> vector<8x384xf32>
    %345 = arith.addf %344, %252 : vector<8x384xf32>
    %346 = vector.extract_strided_slice %343 {offsets = [0, 0], sizes = [8, 128], strides = [1, 1]} : vector<8x384xf32> to vector<8x128xf32>
    %347 = vector.extract_strided_slice %345 {offsets = [0, 0], sizes = [8, 128], strides = [1, 1]} : vector<8x384xf32> to vector<8x128xf32>
    %348 = arith.addf %346, %347 : vector<8x128xf32>
    %349 = arith.negf %348 : vector<8x128xf32>
    %350 = math.exp %349 : vector<8x128xf32>
    %cst_70 = arith.constant 1.000000e+00 : f32
    %351 = vector.broadcast %cst_70 : f32 to vector<8x128xf32>
    %352 = arith.addf %351, %350 : vector<8x128xf32>
    %353 = arith.divf %351, %352 : vector<8x128xf32>
    %354 = vector.extract_strided_slice %343 {offsets = [0, 128], sizes = [8, 128], strides = [1, 1]} : vector<8x384xf32> to vector<8x128xf32>
    %355 = vector.extract_strided_slice %345 {offsets = [0, 128], sizes = [8, 128], strides = [1, 1]} : vector<8x384xf32> to vector<8x128xf32>
    %356 = arith.addf %354, %355 : vector<8x128xf32>
    %357 = arith.negf %356 : vector<8x128xf32>
    %358 = math.exp %357 : vector<8x128xf32>
    %cst_71 = arith.constant 1.000000e+00 : f32
    %359 = vector.broadcast %cst_71 : f32 to vector<8x128xf32>
    %360 = arith.addf %359, %358 : vector<8x128xf32>
    %361 = arith.divf %359, %360 : vector<8x128xf32>
    %362 = vector.extract_strided_slice %343 {offsets = [0, 256], sizes = [8, 128], strides = [1, 1]} : vector<8x384xf32> to vector<8x128xf32>
    %363 = vector.extract_strided_slice %345 {offsets = [0, 256], sizes = [8, 128], strides = [1, 1]} : vector<8x384xf32> to vector<8x128xf32>
    %364 = arith.mulf %353, %363 : vector<8x128xf32>
    %365 = arith.addf %362, %364 : vector<8x128xf32>
    %366 = math.tanh %365 : vector<8x128xf32>
    %cst_72 = arith.constant 1.000000e+00 : f32
    %367 = vector.broadcast %cst_72 : f32 to vector<8x128xf32>
    %368 = arith.subf %367, %361 : vector<8x128xf32>
    %369 = arith.mulf %368, %366 : vector<8x128xf32>
    %370 = arith.mulf %361, %341 : vector<8x128xf32>
    %371 = arith.addf %369, %370 : vector<8x128xf32>
    %c24 = arith.constant 24 : index
    %c0_73 = arith.constant 0 : index
    %372 = vector.load %arg13[%c24, %c0_73] : memref<64x128xf32, #tpu.memory_space<vmem>>, vector<8x128xf32>
    tpu.vector_store %arg13[%c24, %c0_73], %371 {strides = array<i32>} : memref<64x128xf32, #tpu.memory_space<vmem>>, vector<8x128xf32>,
    %373 = vector.extract_strided_slice %248 {offsets = [32, 0], sizes = [8, 384], strides = [1, 1]} : vector<64x384xf32> to vector<8x384xf32>
    %cst_74 = arith.constant dense<0.000000e+00> : vector<8x384xf32>
    %374 = tpu.matmul %371, %249, %cst_74 {dimension_numbers = #tpu.dot_dimension_numbers<[1], [0], [0], [1], [0, 0, 1, 1], [], []>} : vector<8x128xf32>, vector<128x384xf32>, vector<8x384xf32> -> vector<8x384xf32>
    %375 = arith.addf %374, %252 : vector<8x384xf32>
    %376 = vector.extract_strided_slice %373 {offsets = [0, 0], sizes = [8, 128], strides = [1, 1]} : vector<8x384xf32> to vector<8x128xf32>
    %377 = vector.extract_strided_slice %375 {offsets = [0, 0], sizes = [8, 128], strides = [1, 1]} : vector<8x384xf32> to vector<8x128xf32>
    %378 = arith.addf %376, %377 : vector<8x128xf32>
    %379 = arith.negf %378 : vector<8x128xf32>
    %380 = math.exp %379 : vector<8x128xf32>
    %cst_75 = arith.constant 1.000000e+00 : f32
    %381 = vector.broadcast %cst_75 : f32 to vector<8x128xf32>
    %382 = arith.addf %381, %380 : vector<8x128xf32>
    %383 = arith.divf %381, %382 : vector<8x128xf32>
    %384 = vector.extract_strided_slice %373 {offsets = [0, 128], sizes = [8, 128], strides = [1, 1]} : vector<8x384xf32> to vector<8x128xf32>
    %385 = vector.extract_strided_slice %375 {offsets = [0, 128], sizes = [8, 128], strides = [1, 1]} : vector<8x384xf32> to vector<8x128xf32>
    %386 = arith.addf %384, %385 : vector<8x128xf32>
    %387 = arith.negf %386 : vector<8x128xf32>
    %388 = math.exp %387 : vector<8x128xf32>
    %cst_76 = arith.constant 1.000000e+00 : f32
    %389 = vector.broadcast %cst_76 : f32 to vector<8x128xf32>
    %390 = arith.addf %389, %388 : vector<8x128xf32>
    %391 = arith.divf %389, %390 : vector<8x128xf32>
    %392 = vector.extract_strided_slice %373 {offsets = [0, 256], sizes = [8, 128], strides = [1, 1]} : vector<8x384xf32> to vector<8x128xf32>
    %393 = vector.extract_strided_slice %375 {offsets = [0, 256], sizes = [8, 128], strides = [1, 1]} : vector<8x384xf32> to vector<8x128xf32>
    %394 = arith.mulf %383, %393 : vector<8x128xf32>
    %395 = arith.addf %392, %394 : vector<8x128xf32>
    %396 = math.tanh %395 : vector<8x128xf32>
    %cst_77 = arith.constant 1.000000e+00 : f32
    %397 = vector.broadcast %cst_77 : f32 to vector<8x128xf32>
    %398 = arith.subf %397, %391 : vector<8x128xf32>
    %399 = arith.mulf %398, %396 : vector<8x128xf32>
    %400 = arith.mulf %391, %371 : vector<8x128xf32>
    %401 = arith.addf %399, %400 : vector<8x128xf32>
    %c32 = arith.constant 32 : index
    %c0_78 = arith.constant 0 : index
    %402 = vector.load %arg13[%c32, %c0_78] : memref<64x128xf32, #tpu.memory_space<vmem>>, vector<8x128xf32>
    tpu.vector_store %arg13[%c32, %c0_78], %401 {strides = array<i32>} : memref<64x128xf32, #tpu.memory_space<vmem>>, vector<8x128xf32>,
    %403 = vector.extract_strided_slice %248 {offsets = [40, 0], sizes = [8, 384], strides = [1, 1]} : vector<64x384xf32> to vector<8x384xf32>
    %cst_79 = arith.constant dense<0.000000e+00> : vector<8x384xf32>
    %404 = tpu.matmul %401, %249, %cst_79 {dimension_numbers = #tpu.dot_dimension_numbers<[1], [0], [0], [1], [0, 0, 1, 1], [], []>} : vector<8x128xf32>, vector<128x384xf32>, vector<8x384xf32> -> vector<8x384xf32>
    %405 = arith.addf %404, %252 : vector<8x384xf32>
    %406 = vector.extract_strided_slice %403 {offsets = [0, 0], sizes = [8, 128], strides = [1, 1]} : vector<8x384xf32> to vector<8x128xf32>
    %407 = vector.extract_strided_slice %405 {offsets = [0, 0], sizes = [8, 128], strides = [1, 1]} : vector<8x384xf32> to vector<8x128xf32>
    %408 = arith.addf %406, %407 : vector<8x128xf32>
    %409 = arith.negf %408 : vector<8x128xf32>
    %410 = math.exp %409 : vector<8x128xf32>
    %cst_80 = arith.constant 1.000000e+00 : f32
    %411 = vector.broadcast %cst_80 : f32 to vector<8x128xf32>
    %412 = arith.addf %411, %410 : vector<8x128xf32>
    %413 = arith.divf %411, %412 : vector<8x128xf32>
    %414 = vector.extract_strided_slice %403 {offsets = [0, 128], sizes = [8, 128], strides = [1, 1]} : vector<8x384xf32> to vector<8x128xf32>
    %415 = vector.extract_strided_slice %405 {offsets = [0, 128], sizes = [8, 128], strides = [1, 1]} : vector<8x384xf32> to vector<8x128xf32>
    %416 = arith.addf %414, %415 : vector<8x128xf32>
    %417 = arith.negf %416 : vector<8x128xf32>
    %418 = math.exp %417 : vector<8x128xf32>
    %cst_81 = arith.constant 1.000000e+00 : f32
    %419 = vector.broadcast %cst_81 : f32 to vector<8x128xf32>
    %420 = arith.addf %419, %418 : vector<8x128xf32>
    %421 = arith.divf %419, %420 : vector<8x128xf32>
    %422 = vector.extract_strided_slice %403 {offsets = [0, 256], sizes = [8, 128], strides = [1, 1]} : vector<8x384xf32> to vector<8x128xf32>
    %423 = vector.extract_strided_slice %405 {offsets = [0, 256], sizes = [8, 128], strides = [1, 1]} : vector<8x384xf32> to vector<8x128xf32>
    %424 = arith.mulf %413, %423 : vector<8x128xf32>
    %425 = arith.addf %422, %424 : vector<8x128xf32>
    %426 = math.tanh %425 : vector<8x128xf32>
    %cst_82 = arith.constant 1.000000e+00 : f32
    %427 = vector.broadcast %cst_82 : f32 to vector<8x128xf32>
    %428 = arith.subf %427, %421 : vector<8x128xf32>
    %429 = arith.mulf %428, %426 : vector<8x128xf32>
    %430 = arith.mulf %421, %401 : vector<8x128xf32>
    %431 = arith.addf %429, %430 : vector<8x128xf32>
    %c40 = arith.constant 40 : index
    %c0_83 = arith.constant 0 : index
    %432 = vector.load %arg13[%c40, %c0_83] : memref<64x128xf32, #tpu.memory_space<vmem>>, vector<8x128xf32>
    tpu.vector_store %arg13[%c40, %c0_83], %431 {strides = array<i32>} : memref<64x128xf32, #tpu.memory_space<vmem>>, vector<8x128xf32>,
    %433 = vector.extract_strided_slice %248 {offsets = [48, 0], sizes = [8, 384], strides = [1, 1]} : vector<64x384xf32> to vector<8x384xf32>
    %cst_84 = arith.constant dense<0.000000e+00> : vector<8x384xf32>
    %434 = tpu.matmul %431, %249, %cst_84 {dimension_numbers = #tpu.dot_dimension_numbers<[1], [0], [0], [1], [0, 0, 1, 1], [], []>} : vector<8x128xf32>, vector<128x384xf32>, vector<8x384xf32> -> vector<8x384xf32>
    %435 = arith.addf %434, %252 : vector<8x384xf32>
    %436 = vector.extract_strided_slice %433 {offsets = [0, 0], sizes = [8, 128], strides = [1, 1]} : vector<8x384xf32> to vector<8x128xf32>
    %437 = vector.extract_strided_slice %435 {offsets = [0, 0], sizes = [8, 128], strides = [1, 1]} : vector<8x384xf32> to vector<8x128xf32>
    %438 = arith.addf %436, %437 : vector<8x128xf32>
    %439 = arith.negf %438 : vector<8x128xf32>
    %440 = math.exp %439 : vector<8x128xf32>
    %cst_85 = arith.constant 1.000000e+00 : f32
    %441 = vector.broadcast %cst_85 : f32 to vector<8x128xf32>
    %442 = arith.addf %441, %440 : vector<8x128xf32>
    %443 = arith.divf %441, %442 : vector<8x128xf32>
    %444 = vector.extract_strided_slice %433 {offsets = [0, 128], sizes = [8, 128], strides = [1, 1]} : vector<8x384xf32> to vector<8x128xf32>
    %445 = vector.extract_strided_slice %435 {offsets = [0, 128], sizes = [8, 128], strides = [1, 1]} : vector<8x384xf32> to vector<8x128xf32>
    %446 = arith.addf %444, %445 : vector<8x128xf32>
    %447 = arith.negf %446 : vector<8x128xf32>
    %448 = math.exp %447 : vector<8x128xf32>
    %cst_86 = arith.constant 1.000000e+00 : f32
    %449 = vector.broadcast %cst_86 : f32 to vector<8x128xf32>
    %450 = arith.addf %449, %448 : vector<8x128xf32>
    %451 = arith.divf %449, %450 : vector<8x128xf32>
    %452 = vector.extract_strided_slice %433 {offsets = [0, 256], sizes = [8, 128], strides = [1, 1]} : vector<8x384xf32> to vector<8x128xf32>
    %453 = vector.extract_strided_slice %435 {offsets = [0, 256], sizes = [8, 128], strides = [1, 1]} : vector<8x384xf32> to vector<8x128xf32>
    %454 = arith.mulf %443, %453 : vector<8x128xf32>
    %455 = arith.addf %452, %454 : vector<8x128xf32>
    %456 = math.tanh %455 : vector<8x128xf32>
    %cst_87 = arith.constant 1.000000e+00 : f32
    %457 = vector.broadcast %cst_87 : f32 to vector<8x128xf32>
    %458 = arith.subf %457, %451 : vector<8x128xf32>
    %459 = arith.mulf %458, %456 : vector<8x128xf32>
    %460 = arith.mulf %451, %431 : vector<8x128xf32>
    %461 = arith.addf %459, %460 : vector<8x128xf32>
    %c48 = arith.constant 48 : index
    %c0_88 = arith.constant 0 : index
    %462 = vector.load %arg13[%c48, %c0_88] : memref<64x128xf32, #tpu.memory_space<vmem>>, vector<8x128xf32>
    tpu.vector_store %arg13[%c48, %c0_88], %461 {strides = array<i32>} : memref<64x128xf32, #tpu.memory_space<vmem>>, vector<8x128xf32>,
    %463 = vector.extract_strided_slice %248 {offsets = [56, 0], sizes = [8, 384], strides = [1, 1]} : vector<64x384xf32> to vector<8x384xf32>
    %cst_89 = arith.constant dense<0.000000e+00> : vector<8x384xf32>
    %464 = tpu.matmul %461, %249, %cst_89 {dimension_numbers = #tpu.dot_dimension_numbers<[1], [0], [0], [1], [0, 0, 1, 1], [], []>} : vector<8x128xf32>, vector<128x384xf32>, vector<8x384xf32> -> vector<8x384xf32>
    %465 = arith.addf %464, %252 : vector<8x384xf32>
    %466 = vector.extract_strided_slice %463 {offsets = [0, 0], sizes = [8, 128], strides = [1, 1]} : vector<8x384xf32> to vector<8x128xf32>
    %467 = vector.extract_strided_slice %465 {offsets = [0, 0], sizes = [8, 128], strides = [1, 1]} : vector<8x384xf32> to vector<8x128xf32>
    %468 = arith.addf %466, %467 : vector<8x128xf32>
    %469 = arith.negf %468 : vector<8x128xf32>
    %470 = math.exp %469 : vector<8x128xf32>
    %cst_90 = arith.constant 1.000000e+00 : f32
    %471 = vector.broadcast %cst_90 : f32 to vector<8x128xf32>
    %472 = arith.addf %471, %470 : vector<8x128xf32>
    %473 = arith.divf %471, %472 : vector<8x128xf32>
    %474 = vector.extract_strided_slice %463 {offsets = [0, 128], sizes = [8, 128], strides = [1, 1]} : vector<8x384xf32> to vector<8x128xf32>
    %475 = vector.extract_strided_slice %465 {offsets = [0, 128], sizes = [8, 128], strides = [1, 1]} : vector<8x384xf32> to vector<8x128xf32>
    %476 = arith.addf %474, %475 : vector<8x128xf32>
    %477 = arith.negf %476 : vector<8x128xf32>
    %478 = math.exp %477 : vector<8x128xf32>
    %cst_91 = arith.constant 1.000000e+00 : f32
    %479 = vector.broadcast %cst_91 : f32 to vector<8x128xf32>
    %480 = arith.addf %479, %478 : vector<8x128xf32>
    %481 = arith.divf %479, %480 : vector<8x128xf32>
    %482 = vector.extract_strided_slice %463 {offsets = [0, 256], sizes = [8, 128], strides = [1, 1]} : vector<8x384xf32> to vector<8x128xf32>
    %483 = vector.extract_strided_slice %465 {offsets = [0, 256], sizes = [8, 128], strides = [1, 1]} : vector<8x384xf32> to vector<8x128xf32>
    %484 = arith.mulf %473, %483 : vector<8x128xf32>
    %485 = arith.addf %482, %484 : vector<8x128xf32>
    %486 = math.tanh %485 : vector<8x128xf32>
    %cst_92 = arith.constant 1.000000e+00 : f32
    %487 = vector.broadcast %cst_92 : f32 to vector<8x128xf32>
    %488 = arith.subf %487, %481 : vector<8x128xf32>
    %489 = arith.mulf %488, %486 : vector<8x128xf32>
    %490 = arith.mulf %481, %461 : vector<8x128xf32>
    %491 = arith.addf %489, %490 : vector<8x128xf32>
    %c56 = arith.constant 56 : index
    %c0_93 = arith.constant 0 : index
    %492 = vector.load %arg13[%c56, %c0_93] : memref<64x128xf32, #tpu.memory_space<vmem>>, vector<8x128xf32>
    tpu.vector_store %arg13[%c56, %c0_93], %491 {strides = array<i32>} : memref<64x128xf32, #tpu.memory_space<vmem>>, vector<8x128xf32>,
    %c0_94 = arith.constant 0 : index
    %c0_95 = arith.constant 0 : index
    %493 = vector.load %arg13[%c0_94, %c0_95] : memref<64x128xf32, #tpu.memory_space<vmem>>, vector<64x128xf32>
    %c0_96 = arith.constant 0 : index
    %c0_97 = arith.constant 0 : index
    %494 = vector.load %arg10[%c0_96, %c0_97] : memref<128x128xf32, #tpu.memory_space<vmem>>, vector<128x128xf32>
    %cst_98 = arith.constant dense<0.000000e+00> : vector<64x128xf32>
    %495 = tpu.matmul %493, %494, %cst_98 {dimension_numbers = #tpu.dot_dimension_numbers<[1], [0], [0], [1], [0, 0, 1, 1], [], []>} : vector<64x128xf32>, vector<128x128xf32>, vector<64x128xf32> -> vector<64x128xf32>
    %c0_99 = arith.constant 0 : index
    %c0_100 = arith.constant 0 : index
    %496 = vector.load %arg11[%c0_99, %c0_100] : memref<1x128xf32, #tpu.memory_space<vmem>>, vector<1x128xf32>
    %497 = vector.broadcast %496 : vector<1x128xf32> to vector<64x128xf32>
    %498 = arith.addf %495, %497 : vector<64x128xf32>
    %c0_101 = arith.constant 0 : index
    %c0_102 = arith.constant 0 : index
    %499 = vector.load %arg12[%c0_101, %c0_102] : memref<64x128xf32, #tpu.memory_space<vmem>>, vector<64x128xf32>
    tpu.vector_store %arg12[%c0_101, %c0_102], %498 {strides = array<i32>} : memref<64x128xf32, #tpu.memory_space<vmem>>, vector<64x128xf32>,
    return
  }
}

</mosaic_0001>

<llo_original>
// kernel: rnn_seq2seq_forward.1
$region0: #{rnn_seq2seq_forward.1}
  #allocation0 [shape = 'u32[]', space=smem, size = 0x4, offset = 0x4, fixed_abs, tag = 'smem constant byte address 0x4 - core index']
  #allocation1 [shape = 'u32[144,128]{1,0:T(1,128)}', space=vmem, size = 0x12000, scoped, tag = 'internal scratch']
  #allocation2 [shape = 'f32[64,128]{1,0:T(8,128)}', space=vmem, size = 0x8000, scoped, tag = 'scratch operand']
  %s0 = inlined_call_operand.vmem [shape: f32[64,64], index: 0, kind: input, shape index: {}]
  %s1 = inlined_call_operand.vmem [shape: f32[64,64], index: 1, kind: input, shape index: {}]
  %s2 = inlined_call_operand.vmem [shape: f32[64,384], index: 2, kind: input, shape index: {}]
  %s3 = inlined_call_operand.vmem [shape: f32[128,384], index: 3, kind: input, shape index: {}]
  %s4 = inlined_call_operand.vmem [shape: f32[1,384], index: 4, kind: input, shape index: {}]
  %s5 = inlined_call_operand.vmem [shape: f32[1,384], index: 5, kind: input, shape index: {}]
  %s6 = inlined_call_operand.vmem [shape: f32[64,384], index: 6, kind: input, shape index: {}]
  %s7 = inlined_call_operand.vmem [shape: f32[128,384], index: 7, kind: input, shape index: {}]
  %s8 = inlined_call_operand.vmem [shape: f32[1,384], index: 8, kind: input, shape index: {}]
  %s9 = inlined_call_operand.vmem [shape: f32[1,384], index: 9, kind: input, shape index: {}]
  %s10 = inlined_call_operand.vmem [shape: f32[128,128], index: 10, kind: input, shape index: {}]
  %s11 = inlined_call_operand.vmem [shape: f32[1,128], index: 11, kind: input, shape index: {}]
  %s12 = inlined_call_operand.vmem [shape: f32[64,128], index: 12, kind: output, shape index: {}]
  %s13 = sld [smem:[#allocation0]]
  $region58: #{rnn_seq2seq_forward.1} parent=0
    _
  %s15 = ssub.s32 1, %s13
  %s16 = scalar_select 0, %s15, %s13
  // Predicated region
  $region2: #{rnn_seq2seq_forward.1} parent=0 // pred_check
    _
  $region3: #{rnn_seq2seq_forward.1} parent=0 // pred_check_branch
    %18 = sbr.rel (0) target = $region5
  $region4: #{rnn_seq2seq_forward.1} parent=0 // pred_region
    _
  $region5: #{rnn_seq2seq_forward.1} parent=0 // pred_fallthru
    _
  // Predicated region
  $region6: #{rnn_seq2seq_forward.1} parent=0 // pred_check
    _
  $region7: #{rnn_seq2seq_forward.1} parent=0 // pred_check_branch
    %20 = sbr.rel (0) target = $region9
  $region8: #{rnn_seq2seq_forward.1} parent=0 // pred_region
    _
  $region9: #{rnn_seq2seq_forward.1} parent=0 // pred_fallthru
    _
  // Predicated region
  $region10: #{rnn_seq2seq_forward.1} parent=0 // pred_check
    _
  $region11: #{rnn_seq2seq_forward.1} parent=0 // pred_check_branch
    %22 = sbr.rel (0) target = $region13
  $region12: #{rnn_seq2seq_forward.1} parent=0 // pred_region
    _
  $region13: #{rnn_seq2seq_forward.1} parent=0 // pred_fallthru
    _
  // Predicated region
  $region14: #{rnn_seq2seq_forward.1} parent=0 // pred_check
    _
  $region15: #{rnn_seq2seq_forward.1} parent=0 // pred_check_branch
    %24 = sbr.rel (0) target = $region17
  $region16: #{rnn_seq2seq_forward.1} parent=0 // pred_region
    _
  $region17: #{rnn_seq2seq_forward.1} parent=0 // pred_fallthru
    _
  // Predicated region
  $region18: #{rnn_seq2seq_forward.1} parent=0 // pred_check
    _
  $region19: #{rnn_seq2seq_forward.1} parent=0 // pred_check_branch
    %26 = sbr.rel (0) target = $region21
  $region20: #{rnn_seq2seq_forward.1} parent=0 // pred_region
    _
  $region21: #{rnn_seq2seq_forward.1} parent=0 // pred_fallthru
    _
  // Predicated region
  $region22: #{rnn_seq2seq_forward.1} parent=0 // pred_check
    _
  $region23: #{rnn_seq2seq_forward.1} parent=0 // pred_check_branch
    %28 = sbr.rel (0) target = $region25
  $region24: #{rnn_seq2seq_forward.1} parent=0 // pred_region
    _
  $region25: #{rnn_seq2seq_forward.1} parent=0 // pred_fallthru
    _
  // Predicated region
  $region26: #{rnn_seq2seq_forward.1} parent=0 // pred_check
    _
  $region27: #{rnn_seq2seq_forward.1} parent=0 // pred_check_branch
    %30 = sbr.rel (0) target = $region29
  $region28: #{rnn_seq2seq_forward.1} parent=0 // pred_region
    _
  $region29: #{rnn_seq2seq_forward.1} parent=0 // pred_fallthru
    _
  // Predicated region
  $region30: #{rnn_seq2seq_forward.1} parent=0 // pred_check
    _
  $region31: #{rnn_seq2seq_forward.1} parent=0 // pred_check_branch
    %32 = sbr.rel (0) target = $region33
  $region32: #{rnn_seq2seq_forward.1} parent=0 // pred_region
    _
  $region33: #{rnn_seq2seq_forward.1} parent=0 // pred_fallthru
    _
  // Predicated region
  $region34: #{rnn_seq2seq_forward.1} parent=0 // pred_check
    _
  $region35: #{rnn_seq2seq_forward.1} parent=0 // pred_check_branch
    %34 = sbr.rel (0) target = $region37
  $region36: #{rnn_seq2seq_forward.1} parent=0 // pred_region
    _
  $region37: #{rnn_seq2seq_forward.1} parent=0 // pred_fallthru
    _
  // Predicated region
  $region38: #{rnn_seq2seq_forward.1} parent=0 // pred_check
    _
  $region39: #{rnn_seq2seq_forward.1} parent=0 // pred_check_branch
    %36 = sbr.rel (0) target = $region41
  $region40: #{rnn_seq2seq_forward.1} parent=0 // pred_region
    _
  $region41: #{rnn_seq2seq_forward.1} parent=0 // pred_fallthru
    _
  // Predicated region
  $region42: #{rnn_seq2seq_forward.1} parent=0 // pred_check
    _
  $region43: #{rnn_seq2seq_forward.1} parent=0 // pred_check_branch
    %38 = sbr.rel (0) target = $region45
  $region44: #{rnn_seq2seq_forward.1} parent=0 // pred_region
    _
  $region45: #{rnn_seq2seq_forward.1} parent=0 // pred_fallthru
    _
  // Predicated region
  $region46: #{rnn_seq2seq_forward.1} parent=0 // pred_check
    _
  $region47: #{rnn_seq2seq_forward.1} parent=0 // pred_check_branch
    %40 = sbr.rel (0) target = $region49
  $region48: #{rnn_seq2seq_forward.1} parent=0 // pred_region
    _
  $region49: #{rnn_seq2seq_forward.1} parent=0 // pred_fallthru
    _
  %v41 = vld [vmem:[%s0] sm:$0xff]
  %v42 = vld [vmem:[%s0 + $0x8] sm:$0xff]
  %v43 = vld [vmem:[%s0 + $0x10] sm:$0xff]
  %v44 = vld [vmem:[%s0 + $0x18] sm:$0xff]
  %v45 = vld [vmem:[%s0 + $0x20] sm:$0xff]
  %v46 = vld [vmem:[%s0 + $0x28] sm:$0xff]
  %v47 = vld [vmem:[%s0 + $0x30] sm:$0xff]
  %v48 = vld [vmem:[%s0 + $0x38] sm:$0xff]
  %v49 = vld [vmem:[%s2] sm:$0xff]
  %v50 = vld [vmem:[%s2 + $0x8] sm:$0xff]
  %v51 = vld [vmem:[%s2 + $0x10] sm:$0xff]
  %v52 = vld [vmem:[%s2 + $0x18] sm:$0xff]
  %v53 = vld [vmem:[%s2 + $0x20] sm:$0xff]
  %v54 = vld [vmem:[%s2 + $0x28] sm:$0xff]
  %v55 = vld [vmem:[%s2 + $0x30] sm:$0xff]
  %v56 = vld [vmem:[%s2 + $0x38] sm:$0xff]
  %v57 = vld [vmem:[%s2 + $0x40] sm:$0xff]
  %v58 = vld [vmem:[%s2 + $0x48] sm:$0xff]
  %v59 = vld [vmem:[%s2 + $0x50] sm:$0xff]
  %v60 = vld [vmem:[%s2 + $0x58] sm:$0xff]
  %v61 = vld [vmem:[%s2 + $0x60] sm:$0xff]
  %v62 = vld [vmem:[%s2 + $0x68] sm:$0xff]
  %v63 = vld [vmem:[%s2 + $0x70] sm:$0xff]
  %v64 = vld [vmem:[%s2 + $0x78] sm:$0xff]
  %v65 = vld [vmem:[%s2 + $0x80] sm:$0xff]
  %v66 = vld [vmem:[%s2 + $0x88] sm:$0xff]
  %v67 = vld [vmem:[%s2 + $0x90] sm:$0xff]
  %v68 = vld [vmem:[%s2 + $0x98] sm:$0xff]
  %v69 = vld [vmem:[%s2 + $0xa0] sm:$0xff]
  %v70 = vld [vmem:[%s2 + $0xa8] sm:$0xff]
  %v71 = vld [vmem:[%s2 + $0xb0] sm:$0xff]
  %v72 = vld [vmem:[%s2 + $0xb8] sm:$0xff]
  %v73 = vld [vmem:[%s4] sm:$0x7]
  %v75 = vlaneseq
  %v76 = vshrl.u32 %v75, 7
  %v77 = vsub.s32 0, %v76
  %v78 = vrot.slane %v73, %v77
  %v79 = vlaneseq
  %v80 = vshrl.u32 %v79, 7
  %v81 = vsub.s32 1, %v80
  %v82 = vrot.slane %v73, %v81
  %v83 = vlaneseq
  %v84 = vshrl.u32 %v83, 7
  %v85 = vsub.s32 2, %v84
  %v86 = vrot.slane %v73, %v85
  %vm90 = vcmask 523264
  %v92 = vsel %vm90, %v41, 0
  %v95 = vsel %vm90, %v42, 0
  %v98 = vsel %vm90, %v43, 0
  %v101 = vsel %vm90, %v44, 0
  %v104 = vsel %vm90, %v45, 0
  %v107 = vsel %vm90, %v46, 0
  %v110 = vsel %vm90, %v47, 0
  %v113 = vsel %vm90, %v48, 0
  %115 = vmatprep.subr.mxu0 0.0
  %116 = vmatpush1.msra.mxu0 0.0
  %117 = vmatprep.subr.mxu0 0.0
  %118 = vmatpush1.msra.mxu0 0.0
  %119 = vmatprep.subr.mxu0 0.0
  %120 = vmatpush1.msra.mxu0 0.0
  %121 = vmatprep.subr.mxu0 0.0
  %122 = vmatpush1.msra.mxu0 0.0
  %123 = vmatprep.subr.mxu0 0.0
  %124 = vmatpush1.msra.mxu0 0.0
  %125 = vmatprep.subr.mxu0 0.0
  %126 = vmatpush1.msra.mxu0 0.0
  %127 = vmatprep.subr.mxu0 0.0
  %128 = vmatpush1.msra.mxu0 0.0
  %129 = vmatprep.subr.mxu0 0.0
  %130 = vmatpush1.msra.mxu0 0.0
  %131 = vmatprep.subr.mxu0 %v71
  %132 = vmatpush1.msra.mxu0 %v70
  %133 = vmatprep.subr.mxu0 %v68
  %134 = vmatpush1.msra.mxu0 %v67
  %135 = vmatprep.subr.mxu0 %v65
  %136 = vmatpush1.msra.mxu0 %v64
  %137 = vmatprep.subr.mxu0 %v62
  %138 = vmatpush1.msra.mxu0 %v61
  %139 = vmatprep.subr.mxu0 %v59
  %140 = vmatpush1.msra.mxu0 %v58
  %141 = vmatprep.subr.mxu0 %v56
  %142 = vmatpush1.msra.mxu0 %v55
  %143 = vmatprep.subr.mxu0 %v53
  %144 = vmatpush1.msra.mxu0 %v52
  %145 = vmatprep.subr.mxu0 %v50
  %146 = vmatpush1.msra.mxu0 %v49
  %147 = vmatprep.subr.mxu0 0.0
  %148 = vmatpush2.msra.mxu0 0.0
  %149 = vmatprep.subr.mxu0 0.0
  %150 = vmatpush2.msra.mxu0 0.0
  %151 = vmatprep.subr.mxu0 0.0
  %152 = vmatpush2.msra.mxu0 0.0
  %153 = vmatprep.subr.mxu0 0.0
  %154 = vmatpush2.msra.mxu0 0.0
  %155 = vmatprep.subr.mxu0 0.0
  %156 = vmatpush2.msra.mxu0 0.0
  %157 = vmatprep.subr.mxu0 0.0
  %158 = vmatpush2.msra.mxu0 0.0
  %159 = vmatprep.subr.mxu0 0.0
  %160 = vmatpush2.msra.mxu0 0.0
  %161 = vmatprep.subr.mxu0 0.0
  %162 = vmatpush2.msra.mxu0 0.0
  %163 = vmatprep.subr.mxu0 0.0
  %164 = vmatpush2.msra.mxu0 0.0
  %165 = vmatprep.subr.mxu0 0.0
  %166 = vmatpush2.msra.mxu0 0.0
  %167 = vmatprep.subr.mxu0 0.0
  %168 = vmatpush2.msra.mxu0 0.0
  %169 = vmatprep.subr.mxu0 0.0
  %170 = vmatpush2.msra.mxu0 0.0
  %171 = vmatprep.subr.mxu0 0.0
  %172 = vmatpush2.msra.mxu0 0.0
  %173 = vmatprep.subr.mxu0 0.0
  %174 = vmatpush2.msra.mxu0 0.0
  %175 = vmatprep.subr.mxu0 0.0
  %176 = vmatpush2.msra.mxu0 0.0
  %177 = vmatprep.subr.mxu0 0.0
  %178 = vmatpush2.msra.mxu0 0.0
  %179 = vmatprep.mubr.f32.mxu0 0.0
  %180 = vmatmul.mubr.f32.gmra.mxu0 %v92
  %v181 = vpop.f32.mrf.mxu0
  %v182 = vadd.f32 %v78, %v181
  %v183 = vpop.f32.mrf.mxu0
  %v184 = vadd.f32 %v82, %v183
  %185 = vmatprep.mubr.f32.mxu0 0.0
  %186 = vmatmul.mubr.f32.gmra.mxu0 %v95
  %v187 = vpop.f32.mrf.mxu0
  %v188 = vadd.f32 %v78, %v187
  %v189 = vpop.f32.mrf.mxu0
  %v190 = vadd.f32 %v82, %v189
  %191 = vmatprep.mubr.f32.mxu0 0.0
  %192 = vmatmul.mubr.f32.gmra.mxu0 %v98
  %v193 = vpop.f32.mrf.mxu0
  %v194 = vadd.f32 %v78, %v193
  %v195 = vpop.f32.mrf.mxu0
  %v196 = vadd.f32 %v82, %v195
  %197 = vmatprep.mubr.f32.mxu0 0.0
  %198 = vmatmul.mubr.f32.gmra.mxu0 %v101
  %v199 = vpop.f32.mrf.mxu0
  %v200 = vadd.f32 %v78, %v199
  %v201 = vpop.f32.mrf.mxu0
  %v202 = vadd.f32 %v82, %v201
  %203 = vmatprep.mubr.f32.mxu0 0.0
  %204 = vmatmul.mubr.f32.gmra.mxu0 %v104
  %v205 = vpop.f32.mrf.mxu0
  %v206 = vadd.f32 %v78, %v205
  %v207 = vpop.f32.mrf.mxu0
  %v208 = vadd.f32 %v82, %v207
  %209 = vmatprep.mubr.f32.mxu0 0.0
  %210 = vmatmul.mubr.f32.gmra.mxu0 %v107
  %v211 = vpop.f32.mrf.mxu0
  %v212 = vadd.f32 %v78, %v211
  %v213 = vpop.f32.mrf.mxu0
  %v214 = vadd.f32 %v82, %v213
  %215 = vmatprep.mubr.f32.mxu0 0.0
  %216 = vmatmul.mubr.f32.gmra.mxu0 %v110
  %v217 = vpop.f32.mrf.mxu0
  %v218 = vadd.f32 %v78, %v217
  %v219 = vpop.f32.mrf.mxu0
  %v220 = vadd.f32 %v82, %v219
  %221 = vmatprep.mubr.f32.mxu0 0.0
  %222 = vmatmul.mubr.f32.gmra.mxu0 %v113
  %v223 = vpop.f32.mrf.mxu0
  %v224 = vadd.f32 %v78, %v223
  %v225 = vpop.f32.mrf.mxu0
  %v226 = vadd.f32 %v82, %v225
  %227 = vdwg.mxu0
  %228 = vmatprep.subr.mxu0 0.0
  %229 = vmatpush1.msra.mxu0 0.0
  %230 = vmatprep.subr.mxu0 0.0
  %231 = vmatpush1.msra.mxu0 0.0
  %232 = vmatprep.subr.mxu0 0.0
  %233 = vmatpush1.msra.mxu0 0.0
  %234 = vmatprep.subr.mxu0 0.0
  %235 = vmatpush1.msra.mxu0 0.0
  %236 = vmatprep.subr.mxu0 0.0
  %237 = vmatpush1.msra.mxu0 0.0
  %238 = vmatprep.subr.mxu0 0.0
  %239 = vmatpush1.msra.mxu0 0.0
  %240 = vmatprep.subr.mxu0 0.0
  %241 = vmatpush1.msra.mxu0 0.0
  %242 = vmatprep.subr.mxu0 0.0
  %243 = vmatpush1.msra.mxu0 0.0
  %244 = vmatprep.subr.mxu0 0.0
  %245 = vmatpush1.msra.mxu0 %v72
  %246 = vmatprep.subr.mxu0 0.0
  %247 = vmatpush1.msra.mxu0 %v69
  %248 = vmatprep.subr.mxu0 0.0
  %249 = vmatpush1.msra.mxu0 %v66
  %250 = vmatprep.subr.mxu0 0.0
  %251 = vmatpush1.msra.mxu0 %v63
  %252 = vmatprep.subr.mxu0 0.0
  %253 = vmatpush1.msra.mxu0 %v60
  %254 = vmatprep.subr.mxu0 0.0
  %255 = vmatpush1.msra.mxu0 %v57
  %256 = vmatprep.subr.mxu0 0.0
  %257 = vmatpush1.msra.mxu0 %v54
  %258 = vmatprep.subr.mxu0 0.0
  %259 = vmatpush1.msra.mxu0 %v51
  %260 = vmatprep.subr.mxu0 0.0
  %261 = vmatpush2.msra.mxu0 0.0
  %262 = vmatprep.subr.mxu0 0.0
  %263 = vmatpush2.msra.mxu0 0.0
  %264 = vmatprep.subr.mxu0 0.0
  %265 = vmatpush2.msra.mxu0 0.0
  %266 = vmatprep.subr.mxu0 0.0
  %267 = vmatpush2.msra.mxu0 0.0
  %268 = vmatprep.subr.mxu0 0.0
  %269 = vmatpush2.msra.mxu0 0.0
  %270 = vmatprep.subr.mxu0 0.0
  %271 = vmatpush2.msra.mxu0 0.0
  %272 = vmatprep.subr.mxu0 0.0
  %273 = vmatpush2.msra.mxu0 0.0
  %274 = vmatprep.subr.mxu0 0.0
  %275 = vmatpush2.msra.mxu0 0.0
  %276 = vmatprep.subr.mxu0 0.0
  %277 = vmatpush2.msra.mxu0 0.0
  %278 = vmatprep.subr.mxu0 0.0
  %279 = vmatpush2.msra.mxu0 0.0
  %280 = vmatprep.subr.mxu0 0.0
  %281 = vmatpush2.msra.mxu0 0.0
  %282 = vmatprep.subr.mxu0 0.0
  %283 = vmatpush2.msra.mxu0 0.0
  %284 = vmatprep.subr.mxu0 0.0
  %285 = vmatpush2.msra.mxu0 0.0
  %286 = vmatprep.subr.mxu0 0.0
  %287 = vmatpush2.msra.mxu0 0.0
  %288 = vmatprep.subr.mxu0 0.0
  %289 = vmatpush2.msra.mxu0 0.0
  %290 = vmatprep.subr.mxu0 0.0
  %291 = vmatpush2.msra.mxu0 0.0
  %292 = vmatprep.mubr.f32.mxu0 0.0
  %293 = vmatmul.mubr.f32.gmra.mxu0 %v92
  %v294 = vpop.f32.mrf.mxu0
  %v295 = vadd.f32 %v86, %v294
  %v296 = vpop.f32.mrf.mxu0
  %297 = vmatprep.mubr.f32.mxu0 0.0
  %298 = vmatmul.mubr.f32.gmra.mxu0 %v95
  %v299 = vpop.f32.mrf.mxu0
  %v300 = vadd.f32 %v86, %v299
  %v301 = vpop.f32.mrf.mxu0
  %302 = vmatprep.mubr.f32.mxu0 0.0
  %303 = vmatmul.mubr.f32.gmra.mxu0 %v98
  %v304 = vpop.f32.mrf.mxu0
  %v305 = vadd.f32 %v86, %v304
  %v306 = vpop.f32.mrf.mxu0
  %307 = vmatprep.mubr.f32.mxu0 0.0
  %308 = vmatmul.mubr.f32.gmra.mxu0 %v101
  %v309 = vpop.f32.mrf.mxu0
  %v310 = vadd.f32 %v86, %v309
  %v311 = vpop.f32.mrf.mxu0
  %312 = vmatprep.mubr.f32.mxu0 0.0
  %313 = vmatmul.mubr.f32.gmra.mxu0 %v104
  %v314 = vpop.f32.mrf.mxu0
  %v315 = vadd.f32 %v86, %v314
  %v316 = vpop.f32.mrf.mxu0
  %317 = vmatprep.mubr.f32.mxu0 0.0
  %318 = vmatmul.mubr.f32.gmra.mxu0 %v107
  %v319 = vpop.f32.mrf.mxu0
  %v320 = vadd.f32 %v86, %v319
  %v321 = vpop.f32.mrf.mxu0
  %322 = vmatprep.mubr.f32.mxu0 0.0
  %323 = vmatmul.mubr.f32.gmra.mxu0 %v110
  %v324 = vpop.f32.mrf.mxu0
  %v325 = vadd.f32 %v86, %v324
  %v326 = vpop.f32.mrf.mxu0
  %327 = vmatprep.mubr.f32.mxu0 0.0
  %328 = vmatmul.mubr.f32.gmra.mxu0 %v113
  %v329 = vpop.f32.mrf.mxu0
  %v330 = vadd.f32 %v86, %v329
  %v331 = vpop.f32.mrf.mxu0
  %332 = vdwg.mxu0
  %v333 = vld [vmem:[%s3] sm:$0xff]
  %v334 = vld [vmem:[%s3 + $0x8] sm:$0xff]
  %v335 = vld [vmem:[%s3 + $0x10] sm:$0xff]
  %v336 = vld [vmem:[%s3 + $0x18] sm:$0xff]
  %v337 = vld [vmem:[%s3 + $0x20] sm:$0xff]
  %v338 = vld [vmem:[%s3 + $0x28] sm:$0xff]
  %v339 = vld [vmem:[%s3 + $0x30] sm:$0xff]
  %v340 = vld [vmem:[%s3 + $0x38] sm:$0xff]
  %v341 = vld [vmem:[%s3 + $0x40] sm:$0xff]
  %v342 = vld [vmem:[%s3 + $0x48] sm:$0xff]
  %v343 = vld [vmem:[%s3 + $0x50] sm:$0xff]
  %v344 = vld [vmem:[%s3 + $0x58] sm:$0xff]
  %v345 = vld [vmem:[%s3 + $0x60] sm:$0xff]
  %v346 = vld [vmem:[%s3 + $0x68] sm:$0xff]
  %v347 = vld [vmem:[%s3 + $0x70] sm:$0xff]
  %v348 = vld [vmem:[%s3 + $0x78] sm:$0xff]
  %v349 = vld [vmem:[%s3 + $0x80] sm:$0xff]
  %v350 = vld [vmem:[%s3 + $0x88] sm:$0xff]
  %v351 = vld [vmem:[%s3 + $0x90] sm:$0xff]
  %v352 = vld [vmem:[%s3 + $0x98] sm:$0xff]
  %v353 = vld [vmem:[%s3 + $0xa0] sm:$0xff]
  %v354 = vld [vmem:[%s3 + $0xa8] sm:$0xff]
  %v355 = vld [vmem:[%s3 + $0xb0] sm:$0xff]
  %v356 = vld [vmem:[%s3 + $0xb8] sm:$0xff]
  %v357 = vld [vmem:[%s3 + $0xc0] sm:$0xff]
  %v358 = vld [vmem:[%s3 + $0xc8] sm:$0xff]
  %v359 = vld [vmem:[%s3 + $0xd0] sm:$0xff]
  %v360 = vld [vmem:[%s3 + $0xd8] sm:$0xff]
  %v361 = vld [vmem:[%s3 + $0xe0] sm:$0xff]
  %v362 = vld [vmem:[%s3 + $0xe8] sm:$0xff]
  %v363 = vld [vmem:[%s3 + $0xf0] sm:$0xff]
  %v364 = vld [vmem:[%s3 + $0xf8] sm:$0xff]
  %v365 = vld [vmem:[%s3 + $0x100] sm:$0xff]
  %v366 = vld [vmem:[%s3 + $0x108] sm:$0xff]
  %v367 = vld [vmem:[%s3 + $0x110] sm:$0xff]
  %v368 = vld [vmem:[%s3 + $0x118] sm:$0xff]
  %v369 = vld [vmem:[%s3 + $0x120] sm:$0xff]
  %v370 = vld [vmem:[%s3 + $0x128] sm:$0xff]
  %v371 = vld [vmem:[%s3 + $0x130] sm:$0xff]
  %v372 = vld [vmem:[%s3 + $0x138] sm:$0xff]
  %v373 = vld [vmem:[%s3 + $0x140] sm:$0xff]
  %v374 = vld [vmem:[%s3 + $0x148] sm:$0xff]
  %v375 = vld [vmem:[%s3 + $0x150] sm:$0xff]
  %v376 = vld [vmem:[%s3 + $0x158] sm:$0xff]
  %v377 = vld [vmem:[%s3 + $0x160] sm:$0xff]
  %v378 = vld [vmem:[%s3 + $0x168] sm:$0xff]
  %v379 = vld [vmem:[%s3 + $0x170] sm:$0xff]
  %v380 = vld [vmem:[%s3 + $0x178] sm:$0xff]
  %v381 = vld [vmem:[%s5] sm:$0x7]
  %v383 = vlaneseq
  %v384 = vshrl.u32 %v383, 7
  %v385 = vsub.s32 0, %v384
  %v386 = vrot.slane %v381, %v385
  %v387 = vlaneseq
  %v388 = vshrl.u32 %v387, 7
  %v389 = vsub.s32 1, %v388
  %v390 = vrot.slane %v381, %v389
  %v391 = vlaneseq
  %v392 = vshrl.u32 %v391, 7
  %v393 = vsub.s32 2, %v392
  %v394 = vrot.slane %v381, %v393
  %398 = vmatprep.subr.mxu0 %v379
  %399 = vmatpush1.msra.mxu0 %v378
  %400 = vmatprep.subr.mxu0 %v376
  %401 = vmatpush1.msra.mxu0 %v375
  %402 = vmatprep.subr.mxu0 %v373
  %403 = vmatpush1.msra.mxu0 %v372
  %404 = vmatprep.subr.mxu0 %v370
  %405 = vmatpush1.msra.mxu0 %v369
  %406 = vmatprep.subr.mxu0 %v367
  %407 = vmatpush1.msra.mxu0 %v366
  %408 = vmatprep.subr.mxu0 %v364
  %409 = vmatpush1.msra.mxu0 %v363
  %410 = vmatprep.subr.mxu0 %v361
  %411 = vmatpush1.msra.mxu0 %v360
  %412 = vmatprep.subr.mxu0 %v358
  %413 = vmatpush1.msra.mxu0 %v357
  %414 = vmatprep.subr.mxu0 %v355
  %415 = vmatpush1.msra.mxu0 %v354
  %416 = vmatprep.subr.mxu0 %v352
  %417 = vmatpush1.msra.mxu0 %v351
  %418 = vmatprep.subr.mxu0 %v349
  %419 = vmatpush1.msra.mxu0 %v348
  %420 = vmatprep.subr.mxu0 %v346
  %421 = vmatpush1.msra.mxu0 %v345
  %422 = vmatprep.subr.mxu0 %v343
  %423 = vmatpush1.msra.mxu0 %v342
  %424 = vmatprep.subr.mxu0 %v340
  %425 = vmatpush1.msra.mxu0 %v339
  %426 = vmatprep.subr.mxu0 %v337
  %427 = vmatpush1.msra.mxu0 %v336
  %428 = vmatprep.subr.mxu0 %v334
  %429 = vmatpush1.msra.mxu0 %v333
  %430 = vmatprep.subr.mxu0 0.0
  %431 = vmatpush2.msra.mxu0 0.0
  %432 = vmatprep.subr.mxu0 0.0
  %433 = vmatpush2.msra.mxu0 0.0
  %434 = vmatprep.subr.mxu0 0.0
  %435 = vmatpush2.msra.mxu0 0.0
  %436 = vmatprep.subr.mxu0 0.0
  %437 = vmatpush2.msra.mxu0 0.0
  %438 = vmatprep.subr.mxu0 0.0
  %439 = vmatpush2.msra.mxu0 0.0
  %440 = vmatprep.subr.mxu0 0.0
  %441 = vmatpush2.msra.mxu0 0.0
  %442 = vmatprep.subr.mxu0 0.0
  %443 = vmatpush2.msra.mxu0 0.0
  %444 = vmatprep.subr.mxu0 0.0
  %445 = vmatpush2.msra.mxu0 0.0
  %446 = vmatprep.subr.mxu0 0.0
  %447 = vmatpush2.msra.mxu0 0.0
  %448 = vmatprep.subr.mxu0 0.0
  %449 = vmatpush2.msra.mxu0 0.0
  %450 = vmatprep.subr.mxu0 0.0
  %451 = vmatpush2.msra.mxu0 0.0
  %452 = vmatprep.subr.mxu0 0.0
  %453 = vmatpush2.msra.mxu0 0.0
  %454 = vmatprep.subr.mxu0 0.0
  %455 = vmatpush2.msra.mxu0 0.0
  %456 = vmatprep.subr.mxu0 0.0
  %457 = vmatpush2.msra.mxu0 0.0
  %458 = vmatprep.subr.mxu0 0.0
  %459 = vmatpush2.msra.mxu0 0.0
  %460 = vmatprep.subr.mxu0 0.0
  %461 = vmatpush2.msra.mxu0 0.0
  %462 = vmatprep.mubr.f32.mxu0 0.0
  %463 = vmatmul.mubr.f32.gmra.mxu0 0.0
  %v464 = vpop.f32.mrf.mxu0
  %v465 = vadd.f32 %v386, %v464
  %v466 = vpop.f32.mrf.mxu0
  %v467 = vadd.f32 %v390, %v466
  %468 = vdwg.mxu0
  %469 = vmatprep.subr.mxu0 0.0
  %470 = vmatpush1.msra.mxu0 %v380
  %471 = vmatprep.subr.mxu0 0.0
  %472 = vmatpush1.msra.mxu0 %v377
  %473 = vmatprep.subr.mxu0 0.0
  %474 = vmatpush1.msra.mxu0 %v374
  %475 = vmatprep.subr.mxu0 0.0
  %476 = vmatpush1.msra.mxu0 %v371
  %477 = vmatprep.subr.mxu0 0.0
  %478 = vmatpush1.msra.mxu0 %v368
  %479 = vmatprep.subr.mxu0 0.0
  %480 = vmatpush1.msra.mxu0 %v365
  %481 = vmatprep.subr.mxu0 0.0
  %482 = vmatpush1.msra.mxu0 %v362
  %483 = vmatprep.subr.mxu0 0.0
  %484 = vmatpush1.msra.mxu0 %v359
  %485 = vmatprep.subr.mxu0 0.0
  %486 = vmatpush1.msra.mxu0 %v356
  %487 = vmatprep.subr.mxu0 0.0
  %488 = vmatpush1.msra.mxu0 %v353
  %489 = vmatprep.subr.mxu0 0.0
  %490 = vmatpush1.msra.mxu0 %v350
  %491 = vmatprep.subr.mxu0 0.0
  %492 = vmatpush1.msra.mxu0 %v347
  %493 = vmatprep.subr.mxu0 0.0
  %494 = vmatpush1.msra.mxu0 %v344
  %495 = vmatprep.subr.mxu0 0.0
  %496 = vmatpush1.msra.mxu0 %v341
  %497 = vmatprep.subr.mxu0 0.0
  %498 = vmatpush1.msra.mxu0 %v338
  %499 = vmatprep.subr.mxu0 0.0
  %500 = vmatpush1.msra.mxu0 %v335
  %501 = vmatprep.subr.mxu0 0.0
  %502 = vmatpush2.msra.mxu0 0.0
  %503 = vmatprep.subr.mxu0 0.0
  %504 = vmatpush2.msra.mxu0 0.0
  %505 = vmatprep.subr.mxu0 0.0
  %506 = vmatpush2.msra.mxu0 0.0
  %507 = vmatprep.subr.mxu0 0.0
  %508 = vmatpush2.msra.mxu0 0.0
  %509 = vmatprep.subr.mxu0 0.0
  %510 = vmatpush2.msra.mxu0 0.0
  %511 = vmatprep.subr.mxu0 0.0
  %512 = vmatpush2.msra.mxu0 0.0
  %513 = vmatprep.subr.mxu0 0.0
  %514 = vmatpush2.msra.mxu0 0.0
  %515 = vmatprep.subr.mxu0 0.0
  %516 = vmatpush2.msra.mxu0 0.0
  %517 = vmatprep.subr.mxu0 0.0
  %518 = vmatpush2.msra.mxu0 0.0
  %519 = vmatprep.subr.mxu0 0.0
  %520 = vmatpush2.msra.mxu0 0.0
  %521 = vmatprep.subr.mxu0 0.0
  %522 = vmatpush2.msra.mxu0 0.0
  %523 = vmatprep.subr.mxu0 0.0
  %524 = vmatpush2.msra.mxu0 0.0
  %525 = vmatprep.subr.mxu0 0.0
  %526 = vmatpush2.msra.mxu0 0.0
  %527 = vmatprep.subr.mxu0 0.0
  %528 = vmatpush2.msra.mxu0 0.0
  %529 = vmatprep.subr.mxu0 0.0
  %530 = vmatpush2.msra.mxu0 0.0
  %531 = vmatprep.subr.mxu0 0.0
  %532 = vmatpush2.msra.mxu0 0.0
  %533 = vmatprep.mubr.f32.mxu0 0.0
  %534 = vmatmul.mubr.f32.gmra.mxu0 0.0
  %v535 = vpop.f32.mrf.mxu0
  %v536 = vadd.f32 %v394, %v535
  %v537 = vpop.f32.mrf.mxu0
  %538 = vdwg.mxu0
  %v539 = vadd.f32 %v182, %v465
  %v540 = vxor.u32 %v539, 2147483648
  %v541 = vmul.f32 %v540, 1.442695
  %v542 = vpow.pop %v541
  %v543 = vadd.f32 %v542, 1.0
  %v544 = vrcp.pop %v543
  %v545 = vmul.f32 1.0, %v544
  %v546 = vadd.f32 %v184, %v467
  %v547 = vxor.u32 %v546, 2147483648
  %v548 = vmul.f32 %v547, 1.442695
  %v549 = vpow.pop %v548
  %v550 = vadd.f32 %v549, 1.0
  %v551 = vrcp.pop %v550
  %v552 = vmul.f32 1.0, %v551
  %v553 = vmul.f32 %v545, %v536
  %v554 = vadd.f32 %v295, %v553
  %v555 = vtanh.pop %v554
  %v556 = vsub.f32 1.0, %v552
  %v557 = vmul.f32 %v556, %v555
  %v558 = vmul.f32 %v552, 0.0
  %v559 = vadd.f32 %v557, %v558
  %560 = vmatprep.subr.mxu0 %v379
  %561 = vmatpush1.msra.mxu0 %v378
  %562 = vmatprep.subr.mxu0 %v376
  %563 = vmatpush1.msra.mxu0 %v375
  %564 = vmatprep.subr.mxu0 %v373
  %565 = vmatpush1.msra.mxu0 %v372
  %566 = vmatprep.subr.mxu0 %v370
  %567 = vmatpush1.msra.mxu0 %v369
  %568 = vmatprep.subr.mxu0 %v367
  %569 = vmatpush1.msra.mxu0 %v366
  %570 = vmatprep.subr.mxu0 %v364
  %571 = vmatpush1.msra.mxu0 %v363
  %572 = vmatprep.subr.mxu0 %v361
  %573 = vmatpush1.msra.mxu0 %v360
  %574 = vmatprep.subr.mxu0 %v358
  %575 = vmatpush1.msra.mxu0 %v357
  %576 = vmatprep.subr.mxu0 %v355
  %577 = vmatpush1.msra.mxu0 %v354
  %578 = vmatprep.subr.mxu0 %v352
  %579 = vmatpush1.msra.mxu0 %v351
  %580 = vmatprep.subr.mxu0 %v349
  %581 = vmatpush1.msra.mxu0 %v348
  %582 = vmatprep.subr.mxu0 %v346
  %583 = vmatpush1.msra.mxu0 %v345
  %584 = vmatprep.subr.mxu0 %v343
  %585 = vmatpush1.msra.mxu0 %v342
  %586 = vmatprep.subr.mxu0 %v340
  %587 = vmatpush1.msra.mxu0 %v339
  %588 = vmatprep.subr.mxu0 %v337
  %589 = vmatpush1.msra.mxu0 %v336
  %590 = vmatprep.subr.mxu0 %v334
  %591 = vmatpush1.msra.mxu0 %v333
  %592 = vmatprep.subr.mxu0 0.0
  %593 = vmatpush2.msra.mxu0 0.0
  %594 = vmatprep.subr.mxu0 0.0
  %595 = vmatpush2.msra.mxu0 0.0
  %596 = vmatprep.subr.mxu0 0.0
  %597 = vmatpush2.msra.mxu0 0.0
  %598 = vmatprep.subr.mxu0 0.0
  %599 = vmatpush2.msra.mxu0 0.0
  %600 = vmatprep.subr.mxu0 0.0
  %601 = vmatpush2.msra.mxu0 0.0
  %602 = vmatprep.subr.mxu0 0.0
  %603 = vmatpush2.msra.mxu0 0.0
  %604 = vmatprep.subr.mxu0 0.0
  %605 = vmatpush2.msra.mxu0 0.0
  %606 = vmatprep.subr.mxu0 0.0
  %607 = vmatpush2.msra.mxu0 0.0
  %608 = vmatprep.subr.mxu0 0.0
  %609 = vmatpush2.msra.mxu0 0.0
  %610 = vmatprep.subr.mxu0 0.0
  %611 = vmatpush2.msra.mxu0 0.0
  %612 = vmatprep.subr.mxu0 0.0
  %613 = vmatpush2.msra.mxu0 0.0
  %614 = vmatprep.subr.mxu0 0.0
  %615 = vmatpush2.msra.mxu0 0.0
  %616 = vmatprep.subr.mxu0 0.0
  %617 = vmatpush2.msra.mxu0 0.0
  %618 = vmatprep.subr.mxu0 0.0
  %619 = vmatpush2.msra.mxu0 0.0
  %620 = vmatprep.subr.mxu0 0.0
  %621 = vmatpush2.msra.mxu0 0.0
  %622 = vmatprep.subr.mxu0 0.0
  %623 = vmatpush2.msra.mxu0 0.0
  %624 = vmatprep.mubr.f32.mxu0 0.0
  %625 = vmatmul.mubr.f32.gmra.mxu0 %v559
  %v626 = vpop.f32.mrf.mxu0
  %v627 = vadd.f32 %v386, %v626
  %v628 = vpop.f32.mrf.mxu0
  %v629 = vadd.f32 %v390, %v628
  %630 = vdwg.mxu0
  %631 = vmatprep.subr.mxu0 0.0
  %632 = vmatpush1.msra.mxu0 %v380
  %633 = vmatprep.subr.mxu0 0.0
  %634 = vmatpush1.msra.mxu0 %v377
  %635 = vmatprep.subr.mxu0 0.0
  %636 = vmatpush1.msra.mxu0 %v374
  %637 = vmatprep.subr.mxu0 0.0
  %638 = vmatpush1.msra.mxu0 %v371
  %639 = vmatprep.subr.mxu0 0.0
  %640 = vmatpush1.msra.mxu0 %v368
  %641 = vmatprep.subr.mxu0 0.0
  %642 = vmatpush1.msra.mxu0 %v365
  %643 = vmatprep.subr.mxu0 0.0
  %644 = vmatpush1.msra.mxu0 %v362
  %645 = vmatprep.subr.mxu0 0.0
  %646 = vmatpush1.msra.mxu0 %v359
  %647 = vmatprep.subr.mxu0 0.0
  %648 = vmatpush1.msra.mxu0 %v356
  %649 = vmatprep.subr.mxu0 0.0
  %650 = vmatpush1.msra.mxu0 %v353
  %651 = vmatprep.subr.mxu0 0.0
  %652 = vmatpush1.msra.mxu0 %v350
  %653 = vmatprep.subr.mxu0 0.0
  %654 = vmatpush1.msra.mxu0 %v347
  %655 = vmatprep.subr.mxu0 0.0
  %656 = vmatpush1.msra.mxu0 %v344
  %657 = vmatprep.subr.mxu0 0.0
  %658 = vmatpush1.msra.mxu0 %v341
  %659 = vmatprep.subr.mxu0 0.0
  %660 = vmatpush1.msra.mxu0 %v338
  %661 = vmatprep.subr.mxu0 0.0
  %662 = vmatpush1.msra.mxu0 %v335
  %663 = vmatprep.subr.mxu0 0.0
  %664 = vmatpush2.msra.mxu0 0.0
  %665 = vmatprep.subr.mxu0 0.0
  %666 = vmatpush2.msra.mxu0 0.0
  %667 = vmatprep.subr.mxu0 0.0
  %668 = vmatpush2.msra.mxu0 0.0
  %669 = vmatprep.subr.mxu0 0.0
  %670 = vmatpush2.msra.mxu0 0.0
  %671 = vmatprep.subr.mxu0 0.0
  %672 = vmatpush2.msra.mxu0 0.0
  %673 = vmatprep.subr.mxu0 0.0
  %674 = vmatpush2.msra.mxu0 0.0
  %675 = vmatprep.subr.mxu0 0.0
  %676 = vmatpush2.msra.mxu0 0.0
  %677 = vmatprep.subr.mxu0 0.0
  %678 = vmatpush2.msra.mxu0 0.0
  %679 = vmatprep.subr.mxu0 0.0
  %680 = vmatpush2.msra.mxu0 0.0
  %681 = vmatprep.subr.mxu0 0.0
  %682 = vmatpush2.msra.mxu0 0.0
  %683 = vmatprep.subr.mxu0 0.0
  %684 = vmatpush2.msra.mxu0 0.0
  %685 = vmatprep.subr.mxu0 0.0
  %686 = vmatpush2.msra.mxu0 0.0
  %687 = vmatprep.subr.mxu0 0.0
  %688 = vmatpush2.msra.mxu0 0.0
  %689 = vmatprep.subr.mxu0 0.0
  %690 = vmatpush2.msra.mxu0 0.0
  %691 = vmatprep.subr.mxu0 0.0
  %692 = vmatpush2.msra.mxu0 0.0
  %693 = vmatprep.subr.mxu0 0.0
  %694 = vmatpush2.msra.mxu0 0.0
  %695 = vmatprep.mubr.f32.mxu0 0.0
  %696 = vmatmul.mubr.f32.gmra.mxu0 %v559
  %v697 = vpop.f32.mrf.mxu0
  %v698 = vadd.f32 %v394, %v697
  %v699 = vpop.f32.mrf.mxu0
  %700 = vdwg.mxu0
  %v701 = vadd.f32 %v188, %v627
  %v702 = vxor.u32 %v701, 2147483648
  %v703 = vmul.f32 %v702, 1.442695
  %v704 = vpow.pop %v703
  %v705 = vadd.f32 %v704, 1.0
  %v706 = vrcp.pop %v705
  %v707 = vmul.f32 1.0, %v706
  %v708 = vadd.f32 %v190, %v629
  %v709 = vxor.u32 %v708, 2147483648
  %v710 = vmul.f32 %v709, 1.442695
  %v711 = vpow.pop %v710
  %v712 = vadd.f32 %v711, 1.0
  %v713 = vrcp.pop %v712
  %v714 = vmul.f32 1.0, %v713
  %v715 = vmul.f32 %v707, %v698
  %v716 = vadd.f32 %v300, %v715
  %v717 = vtanh.pop %v716
  %v718 = vsub.f32 1.0, %v714
  %v719 = vmul.f32 %v718, %v717
  %v720 = vmul.f32 %v714, %v559
  %v721 = vadd.f32 %v719, %v720
  %722 = vmatprep.subr.mxu0 %v379
  %723 = vmatpush1.msra.mxu0 %v378
  %724 = vmatprep.subr.mxu0 %v376
  %725 = vmatpush1.msra.mxu0 %v375
  %726 = vmatprep.subr.mxu0 %v373
  %727 = vmatpush1.msra.mxu0 %v372
  %728 = vmatprep.subr.mxu0 %v370
  %729 = vmatpush1.msra.mxu0 %v369
  %730 = vmatprep.subr.mxu0 %v367
  %731 = vmatpush1.msra.mxu0 %v366
  %732 = vmatprep.subr.mxu0 %v364
  %733 = vmatpush1.msra.mxu0 %v363
  %734 = vmatprep.subr.mxu0 %v361
  %735 = vmatpush1.msra.mxu0 %v360
  %736 = vmatprep.subr.mxu0 %v358
  %737 = vmatpush1.msra.mxu0 %v357
  %738 = vmatprep.subr.mxu0 %v355
  %739 = vmatpush1.msra.mxu0 %v354
  %740 = vmatprep.subr.mxu0 %v352
  %741 = vmatpush1.msra.mxu0 %v351
  %742 = vmatprep.subr.mxu0 %v349
  %743 = vmatpush1.msra.mxu0 %v348
  %744 = vmatprep.subr.mxu0 %v346
  %745 = vmatpush1.msra.mxu0 %v345
  %746 = vmatprep.subr.mxu0 %v343
  %747 = vmatpush1.msra.mxu0 %v342
  %748 = vmatprep.subr.mxu0 %v340
  %749 = vmatpush1.msra.mxu0 %v339
  %750 = vmatprep.subr.mxu0 %v337
  %751 = vmatpush1.msra.mxu0 %v336
  %752 = vmatprep.subr.mxu0 %v334
  %753 = vmatpush1.msra.mxu0 %v333
  %754 = vmatprep.subr.mxu0 0.0
  %755 = vmatpush2.msra.mxu0 0.0
  %756 = vmatprep.subr.mxu0 0.0
  %757 = vmatpush2.msra.mxu0 0.0
  %758 = vmatprep.subr.mxu0 0.0
  %759 = vmatpush2.msra.mxu0 0.0
  %760 = vmatprep.subr.mxu0 0.0
  %761 = vmatpush2.msra.mxu0 0.0
  %762 = vmatprep.subr.mxu0 0.0
  %763 = vmatpush2.msra.mxu0 0.0
  %764 = vmatprep.subr.mxu0 0.0
  %765 = vmatpush2.msra.mxu0 0.0
  %766 = vmatprep.subr.mxu0 0.0
  %767 = vmatpush2.msra.mxu0 0.0
  %768 = vmatprep.subr.mxu0 0.0
  %769 = vmatpush2.msra.mxu0 0.0
  %770 = vmatprep.subr.mxu0 0.0
  %771 = vmatpush2.msra.mxu0 0.0
  %772 = vmatprep.subr.mxu0 0.0
  %773 = vmatpush2.msra.mxu0 0.0
  %774 = vmatprep.subr.mxu0 0.0
  %775 = vmatpush2.msra.mxu0 0.0
  %776 = vmatprep.subr.mxu0 0.0
  %777 = vmatpush2.msra.mxu0 0.0
  %778 = vmatprep.subr.mxu0 0.0
  %779 = vmatpush2.msra.mxu0 0.0
  %780 = vmatprep.subr.mxu0 0.0
  %781 = vmatpush2.msra.mxu0 0.0
  %782 = vmatprep.subr.mxu0 0.0
  %783 = vmatpush2.msra.mxu0 0.0
  %784 = vmatprep.subr.mxu0 0.0
  %785 = vmatpush2.msra.mxu0 0.0
  %786 = vmatprep.mubr.f32.mxu0 0.0
  %787 = vmatmul.mubr.f32.gmra.mxu0 %v721
  %v788 = vpop.f32.mrf.mxu0
  %v789 = vadd.f32 %v386, %v788
  %v790 = vpop.f32.mrf.mxu0
  %v791 = vadd.f32 %v390, %v790
  %792 = vdwg.mxu0
  %793 = vmatprep.subr.mxu0 0.0
  %794 = vmatpush1.msra.mxu0 %v380
  %795 = vmatprep.subr.mxu0 0.0
  %796 = vmatpush1.msra.mxu0 %v377
  %797 = vmatprep.subr.mxu0 0.0
  %798 = vmatpush1.msra.mxu0 %v374
  %799 = vmatprep.subr.mxu0 0.0
  %800 = vmatpush1.msra.mxu0 %v371
  %801 = vmatprep.subr.mxu0 0.0
  %802 = vmatpush1.msra.mxu0 %v368
  %803 = vmatprep.subr.mxu0 0.0
  %804 = vmatpush1.msra.mxu0 %v365
  %805 = vmatprep.subr.mxu0 0.0
  %806 = vmatpush1.msra.mxu0 %v362
  %807 = vmatprep.subr.mxu0 0.0
  %808 = vmatpush1.msra.mxu0 %v359
  %809 = vmatprep.subr.mxu0 0.0
  %810 = vmatpush1.msra.mxu0 %v356
  %811 = vmatprep.subr.mxu0 0.0
  %812 = vmatpush1.msra.mxu0 %v353
  %813 = vmatprep.subr.mxu0 0.0
  %814 = vmatpush1.msra.mxu0 %v350
  %815 = vmatprep.subr.mxu0 0.0
  %816 = vmatpush1.msra.mxu0 %v347
  %817 = vmatprep.subr.mxu0 0.0
  %818 = vmatpush1.msra.mxu0 %v344
  %819 = vmatprep.subr.mxu0 0.0
  %820 = vmatpush1.msra.mxu0 %v341
  %821 = vmatprep.subr.mxu0 0.0
  %822 = vmatpush1.msra.mxu0 %v338
  %823 = vmatprep.subr.mxu0 0.0
  %824 = vmatpush1.msra.mxu0 %v335
  %825 = vmatprep.subr.mxu0 0.0
  %826 = vmatpush2.msra.mxu0 0.0
  %827 = vmatprep.subr.mxu0 0.0
  %828 = vmatpush2.msra.mxu0 0.0
  %829 = vmatprep.subr.mxu0 0.0
  %830 = vmatpush2.msra.mxu0 0.0
  %831 = vmatprep.subr.mxu0 0.0
  %832 = vmatpush2.msra.mxu0 0.0
  %833 = vmatprep.subr.mxu0 0.0
  %834 = vmatpush2.msra.mxu0 0.0
  %835 = vmatprep.subr.mxu0 0.0
  %836 = vmatpush2.msra.mxu0 0.0
  %837 = vmatprep.subr.mxu0 0.0
  %838 = vmatpush2.msra.mxu0 0.0
  %839 = vmatprep.subr.mxu0 0.0
  %840 = vmatpush2.msra.mxu0 0.0
  %841 = vmatprep.subr.mxu0 0.0
  %842 = vmatpush2.msra.mxu0 0.0
  %843 = vmatprep.subr.mxu0 0.0
  %844 = vmatpush2.msra.mxu0 0.0
  %845 = vmatprep.subr.mxu0 0.0
  %846 = vmatpush2.msra.mxu0 0.0
  %847 = vmatprep.subr.mxu0 0.0
  %848 = vmatpush2.msra.mxu0 0.0
  %849 = vmatprep.subr.mxu0 0.0
  %850 = vmatpush2.msra.mxu0 0.0
  %851 = vmatprep.subr.mxu0 0.0
  %852 = vmatpush2.msra.mxu0 0.0
  %853 = vmatprep.subr.mxu0 0.0
  %854 = vmatpush2.msra.mxu0 0.0
  %855 = vmatprep.subr.mxu0 0.0
  %856 = vmatpush2.msra.mxu0 0.0
  %857 = vmatprep.mubr.f32.mxu0 0.0
  %858 = vmatmul.mubr.f32.gmra.mxu0 %v721
  %v859 = vpop.f32.mrf.mxu0
  %v860 = vadd.f32 %v394, %v859
  %v861 = vpop.f32.mrf.mxu0
  %862 = vdwg.mxu0
  %v863 = vadd.f32 %v194, %v789
  %v864 = vxor.u32 %v863, 2147483648
  %v865 = vmul.f32 %v864, 1.442695
  %v866 = vpow.pop %v865
  %v867 = vadd.f32 %v866, 1.0
  %v868 = vrcp.pop %v867
  %v869 = vmul.f32 1.0, %v868
  %v870 = vadd.f32 %v196, %v791
  %v871 = vxor.u32 %v870, 2147483648
  %v872 = vmul.f32 %v871, 1.442695
  %v873 = vpow.pop %v872
  %v874 = vadd.f32 %v873, 1.0
  %v875 = vrcp.pop %v874
  %v876 = vmul.f32 1.0, %v875
  %v877 = vmul.f32 %v869, %v860
  %v878 = vadd.f32 %v305, %v877
  %v879 = vtanh.pop %v878
  %v880 = vsub.f32 1.0, %v876
  %v881 = vmul.f32 %v880, %v879
  %v882 = vmul.f32 %v876, %v721
  %v883 = vadd.f32 %v881, %v882
  %884 = vmatprep.subr.mxu0 %v379
  %885 = vmatpush1.msra.mxu0 %v378
  %886 = vmatprep.subr.mxu0 %v376
  %887 = vmatpush1.msra.mxu0 %v375
  %888 = vmatprep.subr.mxu0 %v373
  %889 = vmatpush1.msra.mxu0 %v372
  %890 = vmatprep.subr.mxu0 %v370
  %891 = vmatpush1.msra.mxu0 %v369
  %892 = vmatprep.subr.mxu0 %v367
  %893 = vmatpush1.msra.mxu0 %v366
  %894 = vmatprep.subr.mxu0 %v364
  %895 = vmatpush1.msra.mxu0 %v363
  %896 = vmatprep.subr.mxu0 %v361
  %897 = vmatpush1.msra.mxu0 %v360
  %898 = vmatprep.subr.mxu0 %v358
  %899 = vmatpush1.msra.mxu0 %v357
  %900 = vmatprep.subr.mxu0 %v355
  %901 = vmatpush1.msra.mxu0 %v354
  %902 = vmatprep.subr.mxu0 %v352
  %903 = vmatpush1.msra.mxu0 %v351
  %904 = vmatprep.subr.mxu0 %v349
  %905 = vmatpush1.msra.mxu0 %v348
  %906 = vmatprep.subr.mxu0 %v346
  %907 = vmatpush1.msra.mxu0 %v345
  %908 = vmatprep.subr.mxu0 %v343
  %909 = vmatpush1.msra.mxu0 %v342
  %910 = vmatprep.subr.mxu0 %v340
  %911 = vmatpush1.msra.mxu0 %v339
  %912 = vmatprep.subr.mxu0 %v337
  %913 = vmatpush1.msra.mxu0 %v336
  %914 = vmatprep.subr.mxu0 %v334
  %915 = vmatpush1.msra.mxu0 %v333
  %916 = vmatprep.subr.mxu0 0.0
  %917 = vmatpush2.msra.mxu0 0.0
  %918 = vmatprep.subr.mxu0 0.0
  %919 = vmatpush2.msra.mxu0 0.0
  %920 = vmatprep.subr.mxu0 0.0
  %921 = vmatpush2.msra.mxu0 0.0
  %922 = vmatprep.subr.mxu0 0.0
  %923 = vmatpush2.msra.mxu0 0.0
  %924 = vmatprep.subr.mxu0 0.0
  %925 = vmatpush2.msra.mxu0 0.0
  %926 = vmatprep.subr.mxu0 0.0
  %927 = vmatpush2.msra.mxu0 0.0
  %928 = vmatprep.subr.mxu0 0.0
  %929 = vmatpush2.msra.mxu0 0.0
  %930 = vmatprep.subr.mxu0 0.0
  %931 = vmatpush2.msra.mxu0 0.0
  %932 = vmatprep.subr.mxu0 0.0
  %933 = vmatpush2.msra.mxu0 0.0
  %934 = vmatprep.subr.mxu0 0.0
  %935 = vmatpush2.msra.mxu0 0.0
  %936 = vmatprep.subr.mxu0 0.0
  %937 = vmatpush2.msra.mxu0 0.0
  %938 = vmatprep.subr.mxu0 0.0
  %939 = vmatpush2.msra.mxu0 0.0
  %940 = vmatprep.subr.mxu0 0.0
  %941 = vmatpush2.msra.mxu0 0.0
  %942 = vmatprep.subr.mxu0 0.0
  %943 = vmatpush2.msra.mxu0 0.0
  %944 = vmatprep.subr.mxu0 0.0
  %945 = vmatpush2.msra.mxu0 0.0
  %946 = vmatprep.subr.mxu0 0.0
  %947 = vmatpush2.msra.mxu0 0.0
  %948 = vmatprep.mubr.f32.mxu0 0.0
  %949 = vmatmul.mubr.f32.gmra.mxu0 %v883
  %v950 = vpop.f32.mrf.mxu0
  %v951 = vadd.f32 %v386, %v950
  %v952 = vpop.f32.mrf.mxu0
  %v953 = vadd.f32 %v390, %v952
  %954 = vdwg.mxu0
  %955 = vmatprep.subr.mxu0 0.0
  %956 = vmatpush1.msra.mxu0 %v380
  %957 = vmatprep.subr.mxu0 0.0
  %958 = vmatpush1.msra.mxu0 %v377
  %959 = vmatprep.subr.mxu0 0.0
  %960 = vmatpush1.msra.mxu0 %v374
  %961 = vmatprep.subr.mxu0 0.0
  %962 = vmatpush1.msra.mxu0 %v371
  %963 = vmatprep.subr.mxu0 0.0
  %964 = vmatpush1.msra.mxu0 %v368
  %965 = vmatprep.subr.mxu0 0.0
  %966 = vmatpush1.msra.mxu0 %v365
  %967 = vmatprep.subr.mxu0 0.0
  %968 = vmatpush1.msra.mxu0 %v362
  %969 = vmatprep.subr.mxu0 0.0
  %970 = vmatpush1.msra.mxu0 %v359
  %971 = vmatprep.subr.mxu0 0.0
  %972 = vmatpush1.msra.mxu0 %v356
  %973 = vmatprep.subr.mxu0 0.0
  %974 = vmatpush1.msra.mxu0 %v353
  %975 = vmatprep.subr.mxu0 0.0
  %976 = vmatpush1.msra.mxu0 %v350
  %977 = vmatprep.subr.mxu0 0.0
  %978 = vmatpush1.msra.mxu0 %v347
  %979 = vmatprep.subr.mxu0 0.0
  %980 = vmatpush1.msra.mxu0 %v344
  %981 = vmatprep.subr.mxu0 0.0
  %982 = vmatpush1.msra.mxu0 %v341
  %983 = vmatprep.subr.mxu0 0.0
  %984 = vmatpush1.msra.mxu0 %v338
  %985 = vmatprep.subr.mxu0 0.0
  %986 = vmatpush1.msra.mxu0 %v335
  %987 = vmatprep.subr.mxu0 0.0
  %988 = vmatpush2.msra.mxu0 0.0
  %989 = vmatprep.subr.mxu0 0.0
  %990 = vmatpush2.msra.mxu0 0.0
  %991 = vmatprep.subr.mxu0 0.0
  %992 = vmatpush2.msra.mxu0 0.0
  %993 = vmatprep.subr.mxu0 0.0
  %994 = vmatpush2.msra.mxu0 0.0
  %995 = vmatprep.subr.mxu0 0.0
  %996 = vmatpush2.msra.mxu0 0.0
  %997 = vmatprep.subr.mxu0 0.0
  %998 = vmatpush2.msra.mxu0 0.0
  %999 = vmatprep.subr.mxu0 0.0
  %1000 = vmatpush2.msra.mxu0 0.0
  %1001 = vmatprep.subr.mxu0 0.0
  %1002 = vmatpush2.msra.mxu0 0.0
  %1003 = vmatprep.subr.mxu0 0.0
  %1004 = vmatpush2.msra.mxu0 0.0
  %1005 = vmatprep.subr.mxu0 0.0
  %1006 = vmatpush2.msra.mxu0 0.0
  %1007 = vmatprep.subr.mxu0 0.0
  %1008 = vmatpush2.msra.mxu0 0.0
  %1009 = vmatprep.subr.mxu0 0.0
  %1010 = vmatpush2.msra.mxu0 0.0
  %1011 = vmatprep.subr.mxu0 0.0
  %1012 = vmatpush2.msra.mxu0 0.0
  %1013 = vmatprep.subr.mxu0 0.0
  %1014 = vmatpush2.msra.mxu0 0.0
  %1015 = vmatprep.subr.mxu0 0.0
  %1016 = vmatpush2.msra.mxu0 0.0
  %1017 = vmatprep.subr.mxu0 0.0
  %1018 = vmatpush2.msra.mxu0 0.0
  %1019 = vmatprep.mubr.f32.mxu0 0.0
  %1020 = vmatmul.mubr.f32.gmra.mxu0 %v883
  %v1021 = vpop.f32.mrf.mxu0
  %v1022 = vadd.f32 %v394, %v1021
  %v1023 = vpop.f32.mrf.mxu0
  %1024 = vdwg.mxu0
  %v1025 = vadd.f32 %v200, %v951
  %v1026 = vxor.u32 %v1025, 2147483648
  %v1027 = vmul.f32 %v1026, 1.442695
  %v1028 = vpow.pop %v1027
  %v1029 = vadd.f32 %v1028, 1.0
  %v1030 = vrcp.pop %v1029
  %v1031 = vmul.f32 1.0, %v1030
  %v1032 = vadd.f32 %v202, %v953
  %v1033 = vxor.u32 %v1032, 2147483648
  %v1034 = vmul.f32 %v1033, 1.442695
  %v1035 = vpow.pop %v1034
  %v1036 = vadd.f32 %v1035, 1.0
  %v1037 = vrcp.pop %v1036
  %v1038 = vmul.f32 1.0, %v1037
  %v1039 = vmul.f32 %v1031, %v1022
  %v1040 = vadd.f32 %v310, %v1039
  %v1041 = vtanh.pop %v1040
  %v1042 = vsub.f32 1.0, %v1038
  %v1043 = vmul.f32 %v1042, %v1041
  %v1044 = vmul.f32 %v1038, %v883
  %v1045 = vadd.f32 %v1043, %v1044
  %1046 = vmatprep.subr.mxu0 %v379
  %1047 = vmatpush1.msra.mxu0 %v378
  %1048 = vmatprep.subr.mxu0 %v376
  %1049 = vmatpush1.msra.mxu0 %v375
  %1050 = vmatprep.subr.mxu0 %v373
  %1051 = vmatpush1.msra.mxu0 %v372
  %1052 = vmatprep.subr.mxu0 %v370
  %1053 = vmatpush1.msra.mxu0 %v369
  %1054 = vmatprep.subr.mxu0 %v367
  %1055 = vmatpush1.msra.mxu0 %v366
  %1056 = vmatprep.subr.mxu0 %v364
  %1057 = vmatpush1.msra.mxu0 %v363
  %1058 = vmatprep.subr.mxu0 %v361
  %1059 = vmatpush1.msra.mxu0 %v360
  %1060 = vmatprep.subr.mxu0 %v358
  %1061 = vmatpush1.msra.mxu0 %v357
  %1062 = vmatprep.subr.mxu0 %v355
  %1063 = vmatpush1.msra.mxu0 %v354
  %1064 = vmatprep.subr.mxu0 %v352
  %1065 = vmatpush1.msra.mxu0 %v351
  %1066 = vmatprep.subr.mxu0 %v349
  %1067 = vmatpush1.msra.mxu0 %v348
  %1068 = vmatprep.subr.mxu0 %v346
  %1069 = vmatpush1.msra.mxu0 %v345
  %1070 = vmatprep.subr.mxu0 %v343
  %1071 = vmatpush1.msra.mxu0 %v342
  %1072 = vmatprep.subr.mxu0 %v340
  %1073 = vmatpush1.msra.mxu0 %v339
  %1074 = vmatprep.subr.mxu0 %v337
  %1075 = vmatpush1.msra.mxu0 %v336
  %1076 = vmatprep.subr.mxu0 %v334
  %1077 = vmatpush1.msra.mxu0 %v333
  %1078 = vmatprep.subr.mxu0 0.0
  %1079 = vmatpush2.msra.mxu0 0.0
  %1080 = vmatprep.subr.mxu0 0.0
  %1081 = vmatpush2.msra.mxu0 0.0
  %1082 = vmatprep.subr.mxu0 0.0
  %1083 = vmatpush2.msra.mxu0 0.0
  %1084 = vmatprep.subr.mxu0 0.0
  %1085 = vmatpush2.msra.mxu0 0.0
  %1086 = vmatprep.subr.mxu0 0.0
  %1087 = vmatpush2.msra.mxu0 0.0
  %1088 = vmatprep.subr.mxu0 0.0
  %1089 = vmatpush2.msra.mxu0 0.0
  %1090 = vmatprep.subr.mxu0 0.0
  %1091 = vmatpush2.msra.mxu0 0.0
  %1092 = vmatprep.subr.mxu0 0.0
  %1093 = vmatpush2.msra.mxu0 0.0
  %1094 = vmatprep.subr.mxu0 0.0
  %1095 = vmatpush2.msra.mxu0 0.0
  %1096 = vmatprep.subr.mxu0 0.0
  %1097 = vmatpush2.msra.mxu0 0.0
  %1098 = vmatprep.subr.mxu0 0.0
  %1099 = vmatpush2.msra.mxu0 0.0
  %1100 = vmatprep.subr.mxu0 0.0
  %1101 = vmatpush2.msra.mxu0 0.0
  %1102 = vmatprep.subr.mxu0 0.0
  %1103 = vmatpush2.msra.mxu0 0.0
  %1104 = vmatprep.subr.mxu0 0.0
  %1105 = vmatpush2.msra.mxu0 0.0
  %1106 = vmatprep.subr.mxu0 0.0
  %1107 = vmatpush2.msra.mxu0 0.0
  %1108 = vmatprep.subr.mxu0 0.0
  %1109 = vmatpush2.msra.mxu0 0.0
  %1110 = vmatprep.mubr.f32.mxu0 0.0
  %1111 = vmatmul.mubr.f32.gmra.mxu0 %v1045
  %v1112 = vpop.f32.mrf.mxu0
  %v1113 = vadd.f32 %v386, %v1112
  %v1114 = vpop.f32.mrf.mxu0
  %v1115 = vadd.f32 %v390, %v1114
  %1116 = vdwg.mxu0
  %1117 = vmatprep.subr.mxu0 0.0
  %1118 = vmatpush1.msra.mxu0 %v380
  %1119 = vmatprep.subr.mxu0 0.0
  %1120 = vmatpush1.msra.mxu0 %v377
  %1121 = vmatprep.subr.mxu0 0.0
  %1122 = vmatpush1.msra.mxu0 %v374
  %1123 = vmatprep.subr.mxu0 0.0
  %1124 = vmatpush1.msra.mxu0 %v371
  %1125 = vmatprep.subr.mxu0 0.0
  %1126 = vmatpush1.msra.mxu0 %v368
  %1127 = vmatprep.subr.mxu0 0.0
  %1128 = vmatpush1.msra.mxu0 %v365
  %1129 = vmatprep.subr.mxu0 0.0
  %1130 = vmatpush1.msra.mxu0 %v362
  %1131 = vmatprep.subr.mxu0 0.0
  %1132 = vmatpush1.msra.mxu0 %v359
  %1133 = vmatprep.subr.mxu0 0.0
  %1134 = vmatpush1.msra.mxu0 %v356
  %1135 = vmatprep.subr.mxu0 0.0
  %1136 = vmatpush1.msra.mxu0 %v353
  %1137 = vmatprep.subr.mxu0 0.0
  %1138 = vmatpush1.msra.mxu0 %v350
  %1139 = vmatprep.subr.mxu0 0.0
  %1140 = vmatpush1.msra.mxu0 %v347
  %1141 = vmatprep.subr.mxu0 0.0
  %1142 = vmatpush1.msra.mxu0 %v344
  %1143 = vmatprep.subr.mxu0 0.0
  %1144 = vmatpush1.msra.mxu0 %v341
  %1145 = vmatprep.subr.mxu0 0.0
  %1146 = vmatpush1.msra.mxu0 %v338
  %1147 = vmatprep.subr.mxu0 0.0
  %1148 = vmatpush1.msra.mxu0 %v335
  %1149 = vmatprep.subr.mxu0 0.0
  %1150 = vmatpush2.msra.mxu0 0.0
  %1151 = vmatprep.subr.mxu0 0.0
  %1152 = vmatpush2.msra.mxu0 0.0
  %1153 = vmatprep.subr.mxu0 0.0
  %1154 = vmatpush2.msra.mxu0 0.0
  %1155 = vmatprep.subr.mxu0 0.0
  %1156 = vmatpush2.msra.mxu0 0.0
  %1157 = vmatprep.subr.mxu0 0.0
  %1158 = vmatpush2.msra.mxu0 0.0
  %1159 = vmatprep.subr.mxu0 0.0
  %1160 = vmatpush2.msra.mxu0 0.0
  %1161 = vmatprep.subr.mxu0 0.0
  %1162 = vmatpush2.msra.mxu0 0.0
  %1163 = vmatprep.subr.mxu0 0.0
  %1164 = vmatpush2.msra.mxu0 0.0
  %1165 = vmatprep.subr.mxu0 0.0
  %1166 = vmatpush2.msra.mxu0 0.0
  %1167 = vmatprep.subr.mxu0 0.0
  %1168 = vmatpush2.msra.mxu0 0.0
  %1169 = vmatprep.subr.mxu0 0.0
  %1170 = vmatpush2.msra.mxu0 0.0
  %1171 = vmatprep.subr.mxu0 0.0
  %1172 = vmatpush2.msra.mxu0 0.0
  %1173 = vmatprep.subr.mxu0 0.0
  %1174 = vmatpush2.msra.mxu0 0.0
  %1175 = vmatprep.subr.mxu0 0.0
  %1176 = vmatpush2.msra.mxu0 0.0
  %1177 = vmatprep.subr.mxu0 0.0
  %1178 = vmatpush2.msra.mxu0 0.0
  %1179 = vmatprep.subr.mxu0 0.0
  %1180 = vmatpush2.msra.mxu0 0.0
  %1181 = vmatprep.mubr.f32.mxu0 0.0
  %1182 = vmatmul.mubr.f32.gmra.mxu0 %v1045
  %v1183 = vpop.f32.mrf.mxu0
  %v1184 = vadd.f32 %v394, %v1183
  %v1185 = vpop.f32.mrf.mxu0
  %1186 = vdwg.mxu0
  %v1187 = vadd.f32 %v206, %v1113
  %v1188 = vxor.u32 %v1187, 2147483648
  %v1189 = vmul.f32 %v1188, 1.442695
  %v1190 = vpow.pop %v1189
  %v1191 = vadd.f32 %v1190, 1.0
  %v1192 = vrcp.pop %v1191
  %v1193 = vmul.f32 1.0, %v1192
  %v1194 = vadd.f32 %v208, %v1115
  %v1195 = vxor.u32 %v1194, 2147483648
  %v1196 = vmul.f32 %v1195, 1.442695
  %v1197 = vpow.pop %v1196
  %v1198 = vadd.f32 %v1197, 1.0
  %v1199 = vrcp.pop %v1198
  %v1200 = vmul.f32 1.0, %v1199
  %v1201 = vmul.f32 %v1193, %v1184
  %v1202 = vadd.f32 %v315, %v1201
  %v1203 = vtanh.pop %v1202
  %v1204 = vsub.f32 1.0, %v1200
  %v1205 = vmul.f32 %v1204, %v1203
  %v1206 = vmul.f32 %v1200, %v1045
  %v1207 = vadd.f32 %v1205, %v1206
  %1208 = vmatprep.subr.mxu0 %v379
  %1209 = vmatpush1.msra.mxu0 %v378
  %1210 = vmatprep.subr.mxu0 %v376
  %1211 = vmatpush1.msra.mxu0 %v375
  %1212 = vmatprep.subr.mxu0 %v373
  %1213 = vmatpush1.msra.mxu0 %v372
  %1214 = vmatprep.subr.mxu0 %v370
  %1215 = vmatpush1.msra.mxu0 %v369
  %1216 = vmatprep.subr.mxu0 %v367
  %1217 = vmatpush1.msra.mxu0 %v366
  %1218 = vmatprep.subr.mxu0 %v364
  %1219 = vmatpush1.msra.mxu0 %v363
  %1220 = vmatprep.subr.mxu0 %v361
  %1221 = vmatpush1.msra.mxu0 %v360
  %1222 = vmatprep.subr.mxu0 %v358
  %1223 = vmatpush1.msra.mxu0 %v357
  %1224 = vmatprep.subr.mxu0 %v355
  %1225 = vmatpush1.msra.mxu0 %v354
  %1226 = vmatprep.subr.mxu0 %v352
  %1227 = vmatpush1.msra.mxu0 %v351
  %1228 = vmatprep.subr.mxu0 %v349
  %1229 = vmatpush1.msra.mxu0 %v348
  %1230 = vmatprep.subr.mxu0 %v346
  %1231 = vmatpush1.msra.mxu0 %v345
  %1232 = vmatprep.subr.mxu0 %v343
  %1233 = vmatpush1.msra.mxu0 %v342
  %1234 = vmatprep.subr.mxu0 %v340
  %1235 = vmatpush1.msra.mxu0 %v339
  %1236 = vmatprep.subr.mxu0 %v337
  %1237 = vmatpush1.msra.mxu0 %v336
  %1238 = vmatprep.subr.mxu0 %v334
  %1239 = vmatpush1.msra.mxu0 %v333
  %1240 = vmatprep.subr.mxu0 0.0
  %1241 = vmatpush2.msra.mxu0 0.0
  %1242 = vmatprep.subr.mxu0 0.0
  %1243 = vmatpush2.msra.mxu0 0.0
  %1244 = vmatprep.subr.mxu0 0.0
  %1245 = vmatpush2.msra.mxu0 0.0
  %1246 = vmatprep.subr.mxu0 0.0
  %1247 = vmatpush2.msra.mxu0 0.0
  %1248 = vmatprep.subr.mxu0 0.0
  %1249 = vmatpush2.msra.mxu0 0.0
  %1250 = vmatprep.subr.mxu0 0.0
  %1251 = vmatpush2.msra.mxu0 0.0
  %1252 = vmatprep.subr.mxu0 0.0
  %1253 = vmatpush2.msra.mxu0 0.0
  %1254 = vmatprep.subr.mxu0 0.0
  %1255 = vmatpush2.msra.mxu0 0.0
  %1256 = vmatprep.subr.mxu0 0.0
  %1257 = vmatpush2.msra.mxu0 0.0
  %1258 = vmatprep.subr.mxu0 0.0
  %1259 = vmatpush2.msra.mxu0 0.0
  %1260 = vmatprep.subr.mxu0 0.0
  %1261 = vmatpush2.msra.mxu0 0.0
  %1262 = vmatprep.subr.mxu0 0.0
  %1263 = vmatpush2.msra.mxu0 0.0
  %1264 = vmatprep.subr.mxu0 0.0
  %1265 = vmatpush2.msra.mxu0 0.0
  %1266 = vmatprep.subr.mxu0 0.0
  %1267 = vmatpush2.msra.mxu0 0.0
  %1268 = vmatprep.subr.mxu0 0.0
  %1269 = vmatpush2.msra.mxu0 0.0
  %1270 = vmatprep.subr.mxu0 0.0
  %1271 = vmatpush2.msra.mxu0 0.0
  %1272 = vmatprep.mubr.f32.mxu0 0.0
  %1273 = vmatmul.mubr.f32.gmra.mxu0 %v1207
  %v1274 = vpop.f32.mrf.mxu0
  %v1275 = vadd.f32 %v386, %v1274
  %v1276 = vpop.f32.mrf.mxu0
  %v1277 = vadd.f32 %v390, %v1276
  %1278 = vdwg.mxu0
  %1279 = vmatprep.subr.mxu0 0.0
  %1280 = vmatpush1.msra.mxu0 %v380
  %1281 = vmatprep.subr.mxu0 0.0
  %1282 = vmatpush1.msra.mxu0 %v377
  %1283 = vmatprep.subr.mxu0 0.0
  %1284 = vmatpush1.msra.mxu0 %v374
  %1285 = vmatprep.subr.mxu0 0.0
  %1286 = vmatpush1.msra.mxu0 %v371
  %1287 = vmatprep.subr.mxu0 0.0
  %1288 = vmatpush1.msra.mxu0 %v368
  %1289 = vmatprep.subr.mxu0 0.0
  %1290 = vmatpush1.msra.mxu0 %v365
  %1291 = vmatprep.subr.mxu0 0.0
  %1292 = vmatpush1.msra.mxu0 %v362
  %1293 = vmatprep.subr.mxu0 0.0
  %1294 = vmatpush1.msra.mxu0 %v359
  %1295 = vmatprep.subr.mxu0 0.0
  %1296 = vmatpush1.msra.mxu0 %v356
  %1297 = vmatprep.subr.mxu0 0.0
  %1298 = vmatpush1.msra.mxu0 %v353
  %1299 = vmatprep.subr.mxu0 0.0
  %1300 = vmatpush1.msra.mxu0 %v350
  %1301 = vmatprep.subr.mxu0 0.0
  %1302 = vmatpush1.msra.mxu0 %v347
  %1303 = vmatprep.subr.mxu0 0.0
  %1304 = vmatpush1.msra.mxu0 %v344
  %1305 = vmatprep.subr.mxu0 0.0
  %1306 = vmatpush1.msra.mxu0 %v341
  %1307 = vmatprep.subr.mxu0 0.0
  %1308 = vmatpush1.msra.mxu0 %v338
  %1309 = vmatprep.subr.mxu0 0.0
  %1310 = vmatpush1.msra.mxu0 %v335
  %1311 = vmatprep.subr.mxu0 0.0
  %1312 = vmatpush2.msra.mxu0 0.0
  %1313 = vmatprep.subr.mxu0 0.0
  %1314 = vmatpush2.msra.mxu0 0.0
  %1315 = vmatprep.subr.mxu0 0.0
  %1316 = vmatpush2.msra.mxu0 0.0
  %1317 = vmatprep.subr.mxu0 0.0
  %1318 = vmatpush2.msra.mxu0 0.0
  %1319 = vmatprep.subr.mxu0 0.0
  %1320 = vmatpush2.msra.mxu0 0.0
  %1321 = vmatprep.subr.mxu0 0.0
  %1322 = vmatpush2.msra.mxu0 0.0
  %1323 = vmatprep.subr.mxu0 0.0
  %1324 = vmatpush2.msra.mxu0 0.0
  %1325 = vmatprep.subr.mxu0 0.0
  %1326 = vmatpush2.msra.mxu0 0.0
  %1327 = vmatprep.subr.mxu0 0.0
  %1328 = vmatpush2.msra.mxu0 0.0
  %1329 = vmatprep.subr.mxu0 0.0
  %1330 = vmatpush2.msra.mxu0 0.0
  %1331 = vmatprep.subr.mxu0 0.0
  %1332 = vmatpush2.msra.mxu0 0.0
  %1333 = vmatprep.subr.mxu0 0.0
  %1334 = vmatpush2.msra.mxu0 0.0
  %1335 = vmatprep.subr.mxu0 0.0
  %1336 = vmatpush2.msra.mxu0 0.0
  %1337 = vmatprep.subr.mxu0 0.0
  %1338 = vmatpush2.msra.mxu0 0.0
  %1339 = vmatprep.subr.mxu0 0.0
  %1340 = vmatpush2.msra.mxu0 0.0
  %1341 = vmatprep.subr.mxu0 0.0
  %1342 = vmatpush2.msra.mxu0 0.0
  %1343 = vmatprep.mubr.f32.mxu0 0.0
  %1344 = vmatmul.mubr.f32.gmra.mxu0 %v1207
  %v1345 = vpop.f32.mrf.mxu0
  %v1346 = vadd.f32 %v394, %v1345
  %v1347 = vpop.f32.mrf.mxu0
  %1348 = vdwg.mxu0
  %v1349 = vadd.f32 %v212, %v1275
  %v1350 = vxor.u32 %v1349, 2147483648
  %v1351 = vmul.f32 %v1350, 1.442695
  %v1352 = vpow.pop %v1351
  %v1353 = vadd.f32 %v1352, 1.0
  %v1354 = vrcp.pop %v1353
  %v1355 = vmul.f32 1.0, %v1354
  %v1356 = vadd.f32 %v214, %v1277
  %v1357 = vxor.u32 %v1356, 2147483648
  %v1358 = vmul.f32 %v1357, 1.442695
  %v1359 = vpow.pop %v1358
  %v1360 = vadd.f32 %v1359, 1.0
  %v1361 = vrcp.pop %v1360
  %v1362 = vmul.f32 1.0, %v1361
  %v1363 = vmul.f32 %v1355, %v1346
  %v1364 = vadd.f32 %v320, %v1363
  %v1365 = vtanh.pop %v1364
  %v1366 = vsub.f32 1.0, %v1362
  %v1367 = vmul.f32 %v1366, %v1365
  %v1368 = vmul.f32 %v1362, %v1207
  %v1369 = vadd.f32 %v1367, %v1368
  %1370 = vmatprep.subr.mxu0 %v379
  %1371 = vmatpush1.msra.mxu0 %v378
  %1372 = vmatprep.subr.mxu0 %v376
  %1373 = vmatpush1.msra.mxu0 %v375
  %1374 = vmatprep.subr.mxu0 %v373
  %1375 = vmatpush1.msra.mxu0 %v372
  %1376 = vmatprep.subr.mxu0 %v370
  %1377 = vmatpush1.msra.mxu0 %v369
  %1378 = vmatprep.subr.mxu0 %v367
  %1379 = vmatpush1.msra.mxu0 %v366
  %1380 = vmatprep.subr.mxu0 %v364
  %1381 = vmatpush1.msra.mxu0 %v363
  %1382 = vmatprep.subr.mxu0 %v361
  %1383 = vmatpush1.msra.mxu0 %v360
  %1384 = vmatprep.subr.mxu0 %v358
  %1385 = vmatpush1.msra.mxu0 %v357
  %1386 = vmatprep.subr.mxu0 %v355
  %1387 = vmatpush1.msra.mxu0 %v354
  %1388 = vmatprep.subr.mxu0 %v352
  %1389 = vmatpush1.msra.mxu0 %v351
  %1390 = vmatprep.subr.mxu0 %v349
  %1391 = vmatpush1.msra.mxu0 %v348
  %1392 = vmatprep.subr.mxu0 %v346
  %1393 = vmatpush1.msra.mxu0 %v345
  %1394 = vmatprep.subr.mxu0 %v343
  %1395 = vmatpush1.msra.mxu0 %v342
  %1396 = vmatprep.subr.mxu0 %v340
  %1397 = vmatpush1.msra.mxu0 %v339
  %1398 = vmatprep.subr.mxu0 %v337
  %1399 = vmatpush1.msra.mxu0 %v336
  %1400 = vmatprep.subr.mxu0 %v334
  %1401 = vmatpush1.msra.mxu0 %v333
  %1402 = vmatprep.subr.mxu0 0.0
  %1403 = vmatpush2.msra.mxu0 0.0
  %1404 = vmatprep.subr.mxu0 0.0
  %1405 = vmatpush2.msra.mxu0 0.0
  %1406 = vmatprep.subr.mxu0 0.0
  %1407 = vmatpush2.msra.mxu0 0.0
  %1408 = vmatprep.subr.mxu0 0.0
  %1409 = vmatpush2.msra.mxu0 0.0
  %1410 = vmatprep.subr.mxu0 0.0
  %1411 = vmatpush2.msra.mxu0 0.0
  %1412 = vmatprep.subr.mxu0 0.0
  %1413 = vmatpush2.msra.mxu0 0.0
  %1414 = vmatprep.subr.mxu0 0.0
  %1415 = vmatpush2.msra.mxu0 0.0
  %1416 = vmatprep.subr.mxu0 0.0
  %1417 = vmatpush2.msra.mxu0 0.0
  %1418 = vmatprep.subr.mxu0 0.0
  %1419 = vmatpush2.msra.mxu0 0.0
  %1420 = vmatprep.subr.mxu0 0.0
  %1421 = vmatpush2.msra.mxu0 0.0
  %1422 = vmatprep.subr.mxu0 0.0
  %1423 = vmatpush2.msra.mxu0 0.0
  %1424 = vmatprep.subr.mxu0 0.0
  %1425 = vmatpush2.msra.mxu0 0.0
  %1426 = vmatprep.subr.mxu0 0.0
  %1427 = vmatpush2.msra.mxu0 0.0
  %1428 = vmatprep.subr.mxu0 0.0
  %1429 = vmatpush2.msra.mxu0 0.0
  %1430 = vmatprep.subr.mxu0 0.0
  %1431 = vmatpush2.msra.mxu0 0.0
  %1432 = vmatprep.subr.mxu0 0.0
  %1433 = vmatpush2.msra.mxu0 0.0
  %1434 = vmatprep.mubr.f32.mxu0 0.0
  %1435 = vmatmul.mubr.f32.gmra.mxu0 %v1369
  %v1436 = vpop.f32.mrf.mxu0
  %v1437 = vadd.f32 %v386, %v1436
  %v1438 = vpop.f32.mrf.mxu0
  %v1439 = vadd.f32 %v390, %v1438
  %1440 = vdwg.mxu0
  %1441 = vmatprep.subr.mxu0 0.0
  %1442 = vmatpush1.msra.mxu0 %v380
  %1443 = vmatprep.subr.mxu0 0.0
  %1444 = vmatpush1.msra.mxu0 %v377
  %1445 = vmatprep.subr.mxu0 0.0
  %1446 = vmatpush1.msra.mxu0 %v374
  %1447 = vmatprep.subr.mxu0 0.0
  %1448 = vmatpush1.msra.mxu0 %v371
  %1449 = vmatprep.subr.mxu0 0.0
  %1450 = vmatpush1.msra.mxu0 %v368
  %1451 = vmatprep.subr.mxu0 0.0
  %1452 = vmatpush1.msra.mxu0 %v365
  %1453 = vmatprep.subr.mxu0 0.0
  %1454 = vmatpush1.msra.mxu0 %v362
  %1455 = vmatprep.subr.mxu0 0.0
  %1456 = vmatpush1.msra.mxu0 %v359
  %1457 = vmatprep.subr.mxu0 0.0
  %1458 = vmatpush1.msra.mxu0 %v356
  %1459 = vmatprep.subr.mxu0 0.0
  %1460 = vmatpush1.msra.mxu0 %v353
  %1461 = vmatprep.subr.mxu0 0.0
  %1462 = vmatpush1.msra.mxu0 %v350
  %1463 = vmatprep.subr.mxu0 0.0
  %1464 = vmatpush1.msra.mxu0 %v347
  %1465 = vmatprep.subr.mxu0 0.0
  %1466 = vmatpush1.msra.mxu0 %v344
  %1467 = vmatprep.subr.mxu0 0.0
  %1468 = vmatpush1.msra.mxu0 %v341
  %1469 = vmatprep.subr.mxu0 0.0
  %1470 = vmatpush1.msra.mxu0 %v338
  %1471 = vmatprep.subr.mxu0 0.0
  %1472 = vmatpush1.msra.mxu0 %v335
  %1473 = vmatprep.subr.mxu0 0.0
  %1474 = vmatpush2.msra.mxu0 0.0
  %1475 = vmatprep.subr.mxu0 0.0
  %1476 = vmatpush2.msra.mxu0 0.0
  %1477 = vmatprep.subr.mxu0 0.0
  %1478 = vmatpush2.msra.mxu0 0.0
  %1479 = vmatprep.subr.mxu0 0.0
  %1480 = vmatpush2.msra.mxu0 0.0
  %1481 = vmatprep.subr.mxu0 0.0
  %1482 = vmatpush2.msra.mxu0 0.0
  %1483 = vmatprep.subr.mxu0 0.0
  %1484 = vmatpush2.msra.mxu0 0.0
  %1485 = vmatprep.subr.mxu0 0.0
  %1486 = vmatpush2.msra.mxu0 0.0
  %1487 = vmatprep.subr.mxu0 0.0
  %1488 = vmatpush2.msra.mxu0 0.0
  %1489 = vmatprep.subr.mxu0 0.0
  %1490 = vmatpush2.msra.mxu0 0.0
  %1491 = vmatprep.subr.mxu0 0.0
  %1492 = vmatpush2.msra.mxu0 0.0
  %1493 = vmatprep.subr.mxu0 0.0
  %1494 = vmatpush2.msra.mxu0 0.0
  %1495 = vmatprep.subr.mxu0 0.0
  %1496 = vmatpush2.msra.mxu0 0.0
  %1497 = vmatprep.subr.mxu0 0.0
  %1498 = vmatpush2.msra.mxu0 0.0
  %1499 = vmatprep.subr.mxu0 0.0
  %1500 = vmatpush2.msra.mxu0 0.0
  %1501 = vmatprep.subr.mxu0 0.0
  %1502 = vmatpush2.msra.mxu0 0.0
  %1503 = vmatprep.subr.mxu0 0.0
  %1504 = vmatpush2.msra.mxu0 0.0
  %1505 = vmatprep.mubr.f32.mxu0 0.0
  %1506 = vmatmul.mubr.f32.gmra.mxu0 %v1369
  %v1507 = vpop.f32.mrf.mxu0
  %v1508 = vadd.f32 %v394, %v1507
  %v1509 = vpop.f32.mrf.mxu0
  %1510 = vdwg.mxu0
  %v1511 = vadd.f32 %v218, %v1437
  %v1512 = vxor.u32 %v1511, 2147483648
  %v1513 = vmul.f32 %v1512, 1.442695
  %v1514 = vpow.pop %v1513
  %v1515 = vadd.f32 %v1514, 1.0
  %v1516 = vrcp.pop %v1515
  %v1517 = vmul.f32 1.0, %v1516
  %v1518 = vadd.f32 %v220, %v1439
  %v1519 = vxor.u32 %v1518, 2147483648
  %v1520 = vmul.f32 %v1519, 1.442695
  %v1521 = vpow.pop %v1520
  %v1522 = vadd.f32 %v1521, 1.0
  %v1523 = vrcp.pop %v1522
  %v1524 = vmul.f32 1.0, %v1523
  %v1525 = vmul.f32 %v1517, %v1508
  %v1526 = vadd.f32 %v325, %v1525
  %v1527 = vtanh.pop %v1526
  %v1528 = vsub.f32 1.0, %v1524
  %v1529 = vmul.f32 %v1528, %v1527
  %v1530 = vmul.f32 %v1524, %v1369
  %v1531 = vadd.f32 %v1529, %v1530
  %1532 = vmatprep.subr.mxu0 %v379
  %1533 = vmatpush1.msra.mxu0 %v378
  %1534 = vmatprep.subr.mxu0 %v376
  %1535 = vmatpush1.msra.mxu0 %v375
  %1536 = vmatprep.subr.mxu0 %v373
  %1537 = vmatpush1.msra.mxu0 %v372
  %1538 = vmatprep.subr.mxu0 %v370
  %1539 = vmatpush1.msra.mxu0 %v369
  %1540 = vmatprep.subr.mxu0 %v367
  %1541 = vmatpush1.msra.mxu0 %v366
  %1542 = vmatprep.subr.mxu0 %v364
  %1543 = vmatpush1.msra.mxu0 %v363
  %1544 = vmatprep.subr.mxu0 %v361
  %1545 = vmatpush1.msra.mxu0 %v360
  %1546 = vmatprep.subr.mxu0 %v358
  %1547 = vmatpush1.msra.mxu0 %v357
  %1548 = vmatprep.subr.mxu0 %v355
  %1549 = vmatpush1.msra.mxu0 %v354
  %1550 = vmatprep.subr.mxu0 %v352
  %1551 = vmatpush1.msra.mxu0 %v351
  %1552 = vmatprep.subr.mxu0 %v349
  %1553 = vmatpush1.msra.mxu0 %v348
  %1554 = vmatprep.subr.mxu0 %v346
  %1555 = vmatpush1.msra.mxu0 %v345
  %1556 = vmatprep.subr.mxu0 %v343
  %1557 = vmatpush1.msra.mxu0 %v342
  %1558 = vmatprep.subr.mxu0 %v340
  %1559 = vmatpush1.msra.mxu0 %v339
  %1560 = vmatprep.subr.mxu0 %v337
  %1561 = vmatpush1.msra.mxu0 %v336
  %1562 = vmatprep.subr.mxu0 %v334
  %1563 = vmatpush1.msra.mxu0 %v333
  %1564 = vmatprep.subr.mxu0 0.0
  %1565 = vmatpush2.msra.mxu0 0.0
  %1566 = vmatprep.subr.mxu0 0.0
  %1567 = vmatpush2.msra.mxu0 0.0
  %1568 = vmatprep.subr.mxu0 0.0
  %1569 = vmatpush2.msra.mxu0 0.0
  %1570 = vmatprep.subr.mxu0 0.0
  %1571 = vmatpush2.msra.mxu0 0.0
  %1572 = vmatprep.subr.mxu0 0.0
  %1573 = vmatpush2.msra.mxu0 0.0
  %1574 = vmatprep.subr.mxu0 0.0
  %1575 = vmatpush2.msra.mxu0 0.0
  %1576 = vmatprep.subr.mxu0 0.0
  %1577 = vmatpush2.msra.mxu0 0.0
  %1578 = vmatprep.subr.mxu0 0.0
  %1579 = vmatpush2.msra.mxu0 0.0
  %1580 = vmatprep.subr.mxu0 0.0
  %1581 = vmatpush2.msra.mxu0 0.0
  %1582 = vmatprep.subr.mxu0 0.0
  %1583 = vmatpush2.msra.mxu0 0.0
  %1584 = vmatprep.subr.mxu0 0.0
  %1585 = vmatpush2.msra.mxu0 0.0
  %1586 = vmatprep.subr.mxu0 0.0
  %1587 = vmatpush2.msra.mxu0 0.0
  %1588 = vmatprep.subr.mxu0 0.0
  %1589 = vmatpush2.msra.mxu0 0.0
  %1590 = vmatprep.subr.mxu0 0.0
  %1591 = vmatpush2.msra.mxu0 0.0
  %1592 = vmatprep.subr.mxu0 0.0
  %1593 = vmatpush2.msra.mxu0 0.0
  %1594 = vmatprep.subr.mxu0 0.0
  %1595 = vmatpush2.msra.mxu0 0.0
  %1596 = vmatprep.mubr.f32.mxu0 0.0
  %1597 = vmatmul.mubr.f32.gmra.mxu0 %v1531
  %v1598 = vpop.f32.mrf.mxu0
  %v1599 = vadd.f32 %v386, %v1598
  %v1600 = vpop.f32.mrf.mxu0
  %v1601 = vadd.f32 %v390, %v1600
  %1602 = vdwg.mxu0
  %1603 = vmatprep.subr.mxu0 0.0
  %1604 = vmatpush1.msra.mxu0 %v380
  %1605 = vmatprep.subr.mxu0 0.0
  %1606 = vmatpush1.msra.mxu0 %v377
  %1607 = vmatprep.subr.mxu0 0.0
  %1608 = vmatpush1.msra.mxu0 %v374
  %1609 = vmatprep.subr.mxu0 0.0
  %1610 = vmatpush1.msra.mxu0 %v371
  %1611 = vmatprep.subr.mxu0 0.0
  %1612 = vmatpush1.msra.mxu0 %v368
  %1613 = vmatprep.subr.mxu0 0.0
  %1614 = vmatpush1.msra.mxu0 %v365
  %1615 = vmatprep.subr.mxu0 0.0
  %1616 = vmatpush1.msra.mxu0 %v362
  %1617 = vmatprep.subr.mxu0 0.0
  %1618 = vmatpush1.msra.mxu0 %v359
  %1619 = vmatprep.subr.mxu0 0.0
  %1620 = vmatpush1.msra.mxu0 %v356
  %1621 = vmatprep.subr.mxu0 0.0
  %1622 = vmatpush1.msra.mxu0 %v353
  %1623 = vmatprep.subr.mxu0 0.0
  %1624 = vmatpush1.msra.mxu0 %v350
  %1625 = vmatprep.subr.mxu0 0.0
  %1626 = vmatpush1.msra.mxu0 %v347
  %1627 = vmatprep.subr.mxu0 0.0
  %1628 = vmatpush1.msra.mxu0 %v344
  %1629 = vmatprep.subr.mxu0 0.0
  %1630 = vmatpush1.msra.mxu0 %v341
  %1631 = vmatprep.subr.mxu0 0.0
  %1632 = vmatpush1.msra.mxu0 %v338
  %1633 = vmatprep.subr.mxu0 0.0
  %1634 = vmatpush1.msra.mxu0 %v335
  %1635 = vmatprep.subr.mxu0 0.0
  %1636 = vmatpush2.msra.mxu0 0.0
  %1637 = vmatprep.subr.mxu0 0.0
  %1638 = vmatpush2.msra.mxu0 0.0
  %1639 = vmatprep.subr.mxu0 0.0
  %1640 = vmatpush2.msra.mxu0 0.0
  %1641 = vmatprep.subr.mxu0 0.0
  %1642 = vmatpush2.msra.mxu0 0.0
  %1643 = vmatprep.subr.mxu0 0.0
  %1644 = vmatpush2.msra.mxu0 0.0
  %1645 = vmatprep.subr.mxu0 0.0
  %1646 = vmatpush2.msra.mxu0 0.0
  %1647 = vmatprep.subr.mxu0 0.0
  %1648 = vmatpush2.msra.mxu0 0.0
  %1649 = vmatprep.subr.mxu0 0.0
  %1650 = vmatpush2.msra.mxu0 0.0
  %1651 = vmatprep.subr.mxu0 0.0
  %1652 = vmatpush2.msra.mxu0 0.0
  %1653 = vmatprep.subr.mxu0 0.0
  %1654 = vmatpush2.msra.mxu0 0.0
  %1655 = vmatprep.subr.mxu0 0.0
  %1656 = vmatpush2.msra.mxu0 0.0
  %1657 = vmatprep.subr.mxu0 0.0
  %1658 = vmatpush2.msra.mxu0 0.0
  %1659 = vmatprep.subr.mxu0 0.0
  %1660 = vmatpush2.msra.mxu0 0.0
  %1661 = vmatprep.subr.mxu0 0.0
  %1662 = vmatpush2.msra.mxu0 0.0
  %1663 = vmatprep.subr.mxu0 0.0
  %1664 = vmatpush2.msra.mxu0 0.0
  %1665 = vmatprep.subr.mxu0 0.0
  %1666 = vmatpush2.msra.mxu0 0.0
  %1667 = vmatprep.mubr.f32.mxu0 0.0
  %1668 = vmatmul.mubr.f32.gmra.mxu0 %v1531
  %v1669 = vpop.f32.mrf.mxu0
  %v1670 = vadd.f32 %v394, %v1669
  %v1671 = vpop.f32.mrf.mxu0
  %1672 = vdwg.mxu0
  %v1673 = vadd.f32 %v224, %v1599
  %v1674 = vxor.u32 %v1673, 2147483648
  %v1675 = vmul.f32 %v1674, 1.442695
  %v1676 = vpow.pop %v1675
  %v1677 = vadd.f32 %v1676, 1.0
  %v1678 = vrcp.pop %v1677
  %v1679 = vmul.f32 1.0, %v1678
  %v1680 = vadd.f32 %v226, %v1601
  %v1681 = vxor.u32 %v1680, 2147483648
  %v1682 = vmul.f32 %v1681, 1.442695
  %v1683 = vpow.pop %v1682
  %v1684 = vadd.f32 %v1683, 1.0
  %v1685 = vrcp.pop %v1684
  %v1686 = vmul.f32 1.0, %v1685
  %v1687 = vmul.f32 %v1679, %v1670
  %v1688 = vadd.f32 %v330, %v1687
  %v1689 = vtanh.pop %v1688
  %v1690 = vsub.f32 1.0, %v1686
  %v1691 = vmul.f32 %v1690, %v1689
  %v1692 = vmul.f32 %v1686, %v1531
  %v1693 = vadd.f32 %v1691, %v1692
  %v1694 = vld [vmem:[%s1] sm:$0xff]
  %v1695 = vld [vmem:[%s1 + $0x8] sm:$0xff]
  %v1696 = vld [vmem:[%s1 + $0x10] sm:$0xff]
  %v1697 = vld [vmem:[%s1 + $0x18] sm:$0xff]
  %v1698 = vld [vmem:[%s1 + $0x20] sm:$0xff]
  %v1699 = vld [vmem:[%s1 + $0x28] sm:$0xff]
  %v1700 = vld [vmem:[%s1 + $0x30] sm:$0xff]
  %v1701 = vld [vmem:[%s1 + $0x38] sm:$0xff]
  %v1702 = vld [vmem:[%s6] sm:$0xff]
  %v1703 = vld [vmem:[%s6 + $0x8] sm:$0xff]
  %v1704 = vld [vmem:[%s6 + $0x10] sm:$0xff]
  %v1705 = vld [vmem:[%s6 + $0x18] sm:$0xff]
  %v1706 = vld [vmem:[%s6 + $0x20] sm:$0xff]
  %v1707 = vld [vmem:[%s6 + $0x28] sm:$0xff]
  %v1708 = vld [vmem:[%s6 + $0x30] sm:$0xff]
  %v1709 = vld [vmem:[%s6 + $0x38] sm:$0xff]
  %v1710 = vld [vmem:[%s6 + $0x40] sm:$0xff]
  %v1711 = vld [vmem:[%s6 + $0x48] sm:$0xff]
  %v1712 = vld [vmem:[%s6 + $0x50] sm:$0xff]
  %v1713 = vld [vmem:[%s6 + $0x58] sm:$0xff]
  %v1714 = vld [vmem:[%s6 + $0x60] sm:$0xff]
  %v1715 = vld [vmem:[%s6 + $0x68] sm:$0xff]
  %v1716 = vld [vmem:[%s6 + $0x70] sm:$0xff]
  %v1717 = vld [vmem:[%s6 + $0x78] sm:$0xff]
  %v1718 = vld [vmem:[%s6 + $0x80] sm:$0xff]
  %v1719 = vld [vmem:[%s6 + $0x88] sm:$0xff]
  %v1720 = vld [vmem:[%s6 + $0x90] sm:$0xff]
  %v1721 = vld [vmem:[%s6 + $0x98] sm:$0xff]
  %v1722 = vld [vmem:[%s6 + $0xa0] sm:$0xff]
  %v1723 = vld [vmem:[%s6 + $0xa8] sm:$0xff]
  %v1724 = vld [vmem:[%s6 + $0xb0] sm:$0xff]
  %v1725 = vld [vmem:[%s6 + $0xb8] sm:$0xff]
  %v1726 = vld [vmem:[%s8] sm:$0x7]
  %v1728 = vlaneseq
  %v1729 = vshrl.u32 %v1728, 7
  %v1730 = vsub.s32 0, %v1729
  %v1731 = vrot.slane %v1726, %v1730
  %v1732 = vlaneseq
  %v1733 = vshrl.u32 %v1732, 7
  %v1734 = vsub.s32 1, %v1733
  %v1735 = vrot.slane %v1726, %v1734
  %v1736 = vlaneseq
  %v1737 = vshrl.u32 %v1736, 7
  %v1738 = vsub.s32 2, %v1737
  %v1739 = vrot.slane %v1726, %v1738
  %v1744 = vsel %vm90, %v1694, 0
  %v1747 = vsel %vm90, %v1695, 0
  %v1750 = vsel %vm90, %v1696, 0
  %v1753 = vsel %vm90, %v1697, 0
  %v1756 = vsel %vm90, %v1698, 0
  %v1759 = vsel %vm90, %v1699, 0
  %v1762 = vsel %vm90, %v1700, 0
  %v1765 = vsel %vm90, %v1701, 0
  %1767 = vmatprep.subr.mxu0 0.0
  %1768 = vmatpush1.msra.mxu0 0.0
  %1769 = vmatprep.subr.mxu0 0.0
  %1770 = vmatpush1.msra.mxu0 0.0
  %1771 = vmatprep.subr.mxu0 0.0
  %1772 = vmatpush1.msra.mxu0 0.0
  %1773 = vmatprep.subr.mxu0 0.0
  %1774 = vmatpush1.msra.mxu0 0.0
  %1775 = vmatprep.subr.mxu0 0.0
  %1776 = vmatpush1.msra.mxu0 0.0
  %1777 = vmatprep.subr.mxu0 0.0
  %1778 = vmatpush1.msra.mxu0 0.0
  %1779 = vmatprep.subr.mxu0 0.0
  %1780 = vmatpush1.msra.mxu0 0.0
  %1781 = vmatprep.subr.mxu0 0.0
  %1782 = vmatpush1.msra.mxu0 0.0
  %1783 = vmatprep.subr.mxu0 %v1724
  %1784 = vmatpush1.msra.mxu0 %v1723
  %1785 = vmatprep.subr.mxu0 %v1721
  %1786 = vmatpush1.msra.mxu0 %v1720
  %1787 = vmatprep.subr.mxu0 %v1718
  %1788 = vmatpush1.msra.mxu0 %v1717
  %1789 = vmatprep.subr.mxu0 %v1715
  %1790 = vmatpush1.msra.mxu0 %v1714
  %1791 = vmatprep.subr.mxu0 %v1712
  %1792 = vmatpush1.msra.mxu0 %v1711
  %1793 = vmatprep.subr.mxu0 %v1709
  %1794 = vmatpush1.msra.mxu0 %v1708
  %1795 = vmatprep.subr.mxu0 %v1706
  %1796 = vmatpush1.msra.mxu0 %v1705
  %1797 = vmatprep.subr.mxu0 %v1703
  %1798 = vmatpush1.msra.mxu0 %v1702
  %1799 = vmatprep.subr.mxu0 0.0
  %1800 = vmatpush2.msra.mxu0 0.0
  %1801 = vmatprep.subr.mxu0 0.0
  %1802 = vmatpush2.msra.mxu0 0.0
  %1803 = vmatprep.subr.mxu0 0.0
  %1804 = vmatpush2.msra.mxu0 0.0
  %1805 = vmatprep.subr.mxu0 0.0
  %1806 = vmatpush2.msra.mxu0 0.0
  %1807 = vmatprep.subr.mxu0 0.0
  %1808 = vmatpush2.msra.mxu0 0.0
  %1809 = vmatprep.subr.mxu0 0.0
  %1810 = vmatpush2.msra.mxu0 0.0
  %1811 = vmatprep.subr.mxu0 0.0
  %1812 = vmatpush2.msra.mxu0 0.0
  %1813 = vmatprep.subr.mxu0 0.0
  %1814 = vmatpush2.msra.mxu0 0.0
  %1815 = vmatprep.subr.mxu0 0.0
  %1816 = vmatpush2.msra.mxu0 0.0
  %1817 = vmatprep.subr.mxu0 0.0
  %1818 = vmatpush2.msra.mxu0 0.0
  %1819 = vmatprep.subr.mxu0 0.0
  %1820 = vmatpush2.msra.mxu0 0.0
  %1821 = vmatprep.subr.mxu0 0.0
  %1822 = vmatpush2.msra.mxu0 0.0
  %1823 = vmatprep.subr.mxu0 0.0
  %1824 = vmatpush2.msra.mxu0 0.0
  %1825 = vmatprep.subr.mxu0 0.0
  %1826 = vmatpush2.msra.mxu0 0.0
  %1827 = vmatprep.subr.mxu0 0.0
  %1828 = vmatpush2.msra.mxu0 0.0
  %1829 = vmatprep.subr.mxu0 0.0
  %1830 = vmatpush2.msra.mxu0 0.0
  %1831 = vmatprep.mubr.f32.mxu0 0.0
  %1832 = vmatmul.mubr.f32.gmra.mxu0 %v1744
  %v1833 = vpop.f32.mrf.mxu0
  %v1834 = vadd.f32 %v1731, %v1833
  %v1835 = vpop.f32.mrf.mxu0
  %v1836 = vadd.f32 %v1735, %v1835
  %1837 = vmatprep.mubr.f32.mxu0 0.0
  %1838 = vmatmul.mubr.f32.gmra.mxu0 %v1747
  %v1839 = vpop.f32.mrf.mxu0
  %v1840 = vadd.f32 %v1731, %v1839
  %v1841 = vpop.f32.mrf.mxu0
  %v1842 = vadd.f32 %v1735, %v1841
  %1843 = vmatprep.mubr.f32.mxu0 0.0
  %1844 = vmatmul.mubr.f32.gmra.mxu0 %v1750
  %v1845 = vpop.f32.mrf.mxu0
  %v1846 = vadd.f32 %v1731, %v1845
  %v1847 = vpop.f32.mrf.mxu0
  %v1848 = vadd.f32 %v1735, %v1847
  %1849 = vmatprep.mubr.f32.mxu0 0.0
  %1850 = vmatmul.mubr.f32.gmra.mxu0 %v1753
  %v1851 = vpop.f32.mrf.mxu0
  %v1852 = vadd.f32 %v1731, %v1851
  %v1853 = vpop.f32.mrf.mxu0
  %v1854 = vadd.f32 %v1735, %v1853
  %1855 = vmatprep.mubr.f32.mxu0 0.0
  %1856 = vmatmul.mubr.f32.gmra.mxu0 %v1756
  %v1857 = vpop.f32.mrf.mxu0
  %v1858 = vadd.f32 %v1731, %v1857
  %v1859 = vpop.f32.mrf.mxu0
  %v1860 = vadd.f32 %v1735, %v1859
  %1861 = vmatprep.mubr.f32.mxu0 0.0
  %1862 = vmatmul.mubr.f32.gmra.mxu0 %v1759
  %v1863 = vpop.f32.mrf.mxu0
  %v1864 = vadd.f32 %v1731, %v1863
  %v1865 = vpop.f32.mrf.mxu0
  %v1866 = vadd.f32 %v1735, %v1865
  %1867 = vmatprep.mubr.f32.mxu0 0.0
  %1868 = vmatmul.mubr.f32.gmra.mxu0 %v1762
  %v1869 = vpop.f32.mrf.mxu0
  %v1870 = vadd.f32 %v1731, %v1869
  %v1871 = vpop.f32.mrf.mxu0
  %v1872 = vadd.f32 %v1735, %v1871
  %1873 = vmatprep.mubr.f32.mxu0 0.0
  %1874 = vmatmul.mubr.f32.gmra.mxu0 %v1765
  %v1875 = vpop.f32.mrf.mxu0
  %v1876 = vadd.f32 %v1731, %v1875
  %v1877 = vpop.f32.mrf.mxu0
  %v1878 = vadd.f32 %v1735, %v1877
  %1879 = vdwg.mxu0
  %1880 = vmatprep.subr.mxu0 0.0
  %1881 = vmatpush1.msra.mxu0 0.0
  %1882 = vmatprep.subr.mxu0 0.0
  %1883 = vmatpush1.msra.mxu0 0.0
  %1884 = vmatprep.subr.mxu0 0.0
  %1885 = vmatpush1.msra.mxu0 0.0
  %1886 = vmatprep.subr.mxu0 0.0
  %1887 = vmatpush1.msra.mxu0 0.0
  %1888 = vmatprep.subr.mxu0 0.0
  %1889 = vmatpush1.msra.mxu0 0.0
  %1890 = vmatprep.subr.mxu0 0.0
  %1891 = vmatpush1.msra.mxu0 0.0
  %1892 = vmatprep.subr.mxu0 0.0
  %1893 = vmatpush1.msra.mxu0 0.0
  %1894 = vmatprep.subr.mxu0 0.0
  %1895 = vmatpush1.msra.mxu0 0.0
  %1896 = vmatprep.subr.mxu0 0.0
  %1897 = vmatpush1.msra.mxu0 %v1725
  %1898 = vmatprep.subr.mxu0 0.0
  %1899 = vmatpush1.msra.mxu0 %v1722
  %1900 = vmatprep.subr.mxu0 0.0
  %1901 = vmatpush1.msra.mxu0 %v1719
  %1902 = vmatprep.subr.mxu0 0.0
  %1903 = vmatpush1.msra.mxu0 %v1716
  %1904 = vmatprep.subr.mxu0 0.0
  %1905 = vmatpush1.msra.mxu0 %v1713
  %1906 = vmatprep.subr.mxu0 0.0
  %1907 = vmatpush1.msra.mxu0 %v1710
  %1908 = vmatprep.subr.mxu0 0.0
  %1909 = vmatpush1.msra.mxu0 %v1707
  %1910 = vmatprep.subr.mxu0 0.0
  %1911 = vmatpush1.msra.mxu0 %v1704
  %1912 = vmatprep.subr.mxu0 0.0
  %1913 = vmatpush2.msra.mxu0 0.0
  %1914 = vmatprep.subr.mxu0 0.0
  %1915 = vmatpush2.msra.mxu0 0.0
  %1916 = vmatprep.subr.mxu0 0.0
  %1917 = vmatpush2.msra.mxu0 0.0
  %1918 = vmatprep.subr.mxu0 0.0
  %1919 = vmatpush2.msra.mxu0 0.0
  %1920 = vmatprep.subr.mxu0 0.0
  %1921 = vmatpush2.msra.mxu0 0.0
  %1922 = vmatprep.subr.mxu0 0.0
  %1923 = vmatpush2.msra.mxu0 0.0
  %1924 = vmatprep.subr.mxu0 0.0
  %1925 = vmatpush2.msra.mxu0 0.0
  %1926 = vmatprep.subr.mxu0 0.0
  %1927 = vmatpush2.msra.mxu0 0.0
  %1928 = vmatprep.subr.mxu0 0.0
  %1929 = vmatpush2.msra.mxu0 0.0
  %1930 = vmatprep.subr.mxu0 0.0
  %1931 = vmatpush2.msra.mxu0 0.0
  %1932 = vmatprep.subr.mxu0 0.0
  %1933 = vmatpush2.msra.mxu0 0.0
  %1934 = vmatprep.subr.mxu0 0.0
  %1935 = vmatpush2.msra.mxu0 0.0
  %1936 = vmatprep.subr.mxu0 0.0
  %1937 = vmatpush2.msra.mxu0 0.0
  %1938 = vmatprep.subr.mxu0 0.0
  %1939 = vmatpush2.msra.mxu0 0.0
  %1940 = vmatprep.subr.mxu0 0.0
  %1941 = vmatpush2.msra.mxu0 0.0
  %1942 = vmatprep.subr.mxu0 0.0
  %1943 = vmatpush2.msra.mxu0 0.0
  %1944 = vmatprep.mubr.f32.mxu0 0.0
  %1945 = vmatmul.mubr.f32.gmra.mxu0 %v1744
  %v1946 = vpop.f32.mrf.mxu0
  %v1947 = vadd.f32 %v1739, %v1946
  %v1948 = vpop.f32.mrf.mxu0
  %1949 = vmatprep.mubr.f32.mxu0 0.0
  %1950 = vmatmul.mubr.f32.gmra.mxu0 %v1747
  %v1951 = vpop.f32.mrf.mxu0
  %v1952 = vadd.f32 %v1739, %v1951
  %v1953 = vpop.f32.mrf.mxu0
  %1954 = vmatprep.mubr.f32.mxu0 0.0
  %1955 = vmatmul.mubr.f32.gmra.mxu0 %v1750
  %v1956 = vpop.f32.mrf.mxu0
  %v1957 = vadd.f32 %v1739, %v1956
  %v1958 = vpop.f32.mrf.mxu0
  %1959 = vmatprep.mubr.f32.mxu0 0.0
  %1960 = vmatmul.mubr.f32.gmra.mxu0 %v1753
  %v1961 = vpop.f32.mrf.mxu0
  %v1962 = vadd.f32 %v1739, %v1961
  %v1963 = vpop.f32.mrf.mxu0
  %1964 = vmatprep.mubr.f32.mxu0 0.0
  %1965 = vmatmul.mubr.f32.gmra.mxu0 %v1756
  %v1966 = vpop.f32.mrf.mxu0
  %v1967 = vadd.f32 %v1739, %v1966
  %v1968 = vpop.f32.mrf.mxu0
  %1969 = vmatprep.mubr.f32.mxu0 0.0
  %1970 = vmatmul.mubr.f32.gmra.mxu0 %v1759
  %v1971 = vpop.f32.mrf.mxu0
  %v1972 = vadd.f32 %v1739, %v1971
  %v1973 = vpop.f32.mrf.mxu0
  %1974 = vmatprep.mubr.f32.mxu0 0.0
  %1975 = vmatmul.mubr.f32.gmra.mxu0 %v1762
  %v1976 = vpop.f32.mrf.mxu0
  %v1977 = vadd.f32 %v1739, %v1976
  %v1978 = vpop.f32.mrf.mxu0
  %1979 = vmatprep.mubr.f32.mxu0 0.0
  %1980 = vmatmul.mubr.f32.gmra.mxu0 %v1765
  %v1981 = vpop.f32.mrf.mxu0
  %v1982 = vadd.f32 %v1739, %v1981
  %v1983 = vpop.f32.mrf.mxu0
  %1984 = vdwg.mxu0
  %v1985 = vld [vmem:[%s7] sm:$0xff]
  %v1986 = vld [vmem:[%s7 + $0x8] sm:$0xff]
  %v1987 = vld [vmem:[%s7 + $0x10] sm:$0xff]
  %v1988 = vld [vmem:[%s7 + $0x18] sm:$0xff]
  %v1989 = vld [vmem:[%s7 + $0x20] sm:$0xff]
  %v1990 = vld [vmem:[%s7 + $0x28] sm:$0xff]
  %v1991 = vld [vmem:[%s7 + $0x30] sm:$0xff]
  %v1992 = vld [vmem:[%s7 + $0x38] sm:$0xff]
  %v1993 = vld [vmem:[%s7 + $0x40] sm:$0xff]
  %v1994 = vld [vmem:[%s7 + $0x48] sm:$0xff]
  %v1995 = vld [vmem:[%s7 + $0x50] sm:$0xff]
  %v1996 = vld [vmem:[%s7 + $0x58] sm:$0xff]
  %v1997 = vld [vmem:[%s7 + $0x60] sm:$0xff]
  %v1998 = vld [vmem:[%s7 + $0x68] sm:$0xff]
  %v1999 = vld [vmem:[%s7 + $0x70] sm:$0xff]
  %v2000 = vld [vmem:[%s7 + $0x78] sm:$0xff]
  %v2001 = vld [vmem:[%s7 + $0x80] sm:$0xff]
  %v2002 = vld [vmem:[%s7 + $0x88] sm:$0xff]
  %v2003 = vld [vmem:[%s7 + $0x90] sm:$0xff]
  %v2004 = vld [vmem:[%s7 + $0x98] sm:$0xff]
  %v2005 = vld [vmem:[%s7 + $0xa0] sm:$0xff]
  %v2006 = vld [vmem:[%s7 + $0xa8] sm:$0xff]
  %v2007 = vld [vmem:[%s7 + $0xb0] sm:$0xff]
  %v2008 = vld [vmem:[%s7 + $0xb8] sm:$0xff]
  %v2009 = vld [vmem:[%s7 + $0xc0] sm:$0xff]
  %v2010 = vld [vmem:[%s7 + $0xc8] sm:$0xff]
  %v2011 = vld [vmem:[%s7 + $0xd0] sm:$0xff]
  %v2012 = vld [vmem:[%s7 + $0xd8] sm:$0xff]
  %v2013 = vld [vmem:[%s7 + $0xe0] sm:$0xff]
  %v2014 = vld [vmem:[%s7 + $0xe8] sm:$0xff]
  %v2015 = vld [vmem:[%s7 + $0xf0] sm:$0xff]
  %v2016 = vld [vmem:[%s7 + $0xf8] sm:$0xff]
  %v2017 = vld [vmem:[%s7 + $0x100] sm:$0xff]
  %v2018 = vld [vmem:[%s7 + $0x108] sm:$0xff]
  %v2019 = vld [vmem:[%s7 + $0x110] sm:$0xff]
  %v2020 = vld [vmem:[%s7 + $0x118] sm:$0xff]
  %v2021 = vld [vmem:[%s7 + $0x120] sm:$0xff]
  %v2022 = vld [vmem:[%s7 + $0x128] sm:$0xff]
  %v2023 = vld [vmem:[%s7 + $0x130] sm:$0xff]
  %v2024 = vld [vmem:[%s7 + $0x138] sm:$0xff]
  %v2025 = vld [vmem:[%s7 + $0x140] sm:$0xff]
  %v2026 = vld [vmem:[%s7 + $0x148] sm:$0xff]
  %v2027 = vld [vmem:[%s7 + $0x150] sm:$0xff]
  %v2028 = vld [vmem:[%s7 + $0x158] sm:$0xff]
  %v2029 = vld [vmem:[%s7 + $0x160] sm:$0xff]
  %v2030 = vld [vmem:[%s7 + $0x168] sm:$0xff]
  %v2031 = vld [vmem:[%s7 + $0x170] sm:$0xff]
  %v2032 = vld [vmem:[%s7 + $0x178] sm:$0xff]
  %v2033 = vld [vmem:[%s9] sm:$0x7]
  %v2035 = vlaneseq
  %v2036 = vshrl.u32 %v2035, 7
  %v2037 = vsub.s32 0, %v2036
  %v2038 = vrot.slane %v2033, %v2037
  %v2039 = vlaneseq
  %v2040 = vshrl.u32 %v2039, 7
  %v2041 = vsub.s32 1, %v2040
  %v2042 = vrot.slane %v2033, %v2041
  %v2043 = vlaneseq
  %v2044 = vshrl.u32 %v2043, 7
  %v2045 = vsub.s32 2, %v2044
  %v2046 = vrot.slane %v2033, %v2045
  %2050 = vmatprep.subr.mxu0 %v2031
  %2051 = vmatpush1.msra.mxu0 %v2030
  %2052 = vmatprep.subr.mxu0 %v2028
  %2053 = vmatpush1.msra.mxu0 %v2027
  %2054 = vmatprep.subr.mxu0 %v2025
  %2055 = vmatpush1.msra.mxu0 %v2024
  %2056 = vmatprep.subr.mxu0 %v2022
  %2057 = vmatpush1.msra.mxu0 %v2021
  %2058 = vmatprep.subr.mxu0 %v2019
  %2059 = vmatpush1.msra.mxu0 %v2018
  %2060 = vmatprep.subr.mxu0 %v2016
  %2061 = vmatpush1.msra.mxu0 %v2015
  %2062 = vmatprep.subr.mxu0 %v2013
  %2063 = vmatpush1.msra.mxu0 %v2012
  %2064 = vmatprep.subr.mxu0 %v2010
  %2065 = vmatpush1.msra.mxu0 %v2009
  %2066 = vmatprep.subr.mxu0 %v2007
  %2067 = vmatpush1.msra.mxu0 %v2006
  %2068 = vmatprep.subr.mxu0 %v2004
  %2069 = vmatpush1.msra.mxu0 %v2003
  %2070 = vmatprep.subr.mxu0 %v2001
  %2071 = vmatpush1.msra.mxu0 %v2000
  %2072 = vmatprep.subr.mxu0 %v1998
  %2073 = vmatpush1.msra.mxu0 %v1997
  %2074 = vmatprep.subr.mxu0 %v1995
  %2075 = vmatpush1.msra.mxu0 %v1994
  %2076 = vmatprep.subr.mxu0 %v1992
  %2077 = vmatpush1.msra.mxu0 %v1991
  %2078 = vmatprep.subr.mxu0 %v1989
  %2079 = vmatpush1.msra.mxu0 %v1988
  %2080 = vmatprep.subr.mxu0 %v1986
  %2081 = vmatpush1.msra.mxu0 %v1985
  %2082 = vmatprep.subr.mxu0 0.0
  %2083 = vmatpush2.msra.mxu0 0.0
  %2084 = vmatprep.subr.mxu0 0.0
  %2085 = vmatpush2.msra.mxu0 0.0
  %2086 = vmatprep.subr.mxu0 0.0
  %2087 = vmatpush2.msra.mxu0 0.0
  %2088 = vmatprep.subr.mxu0 0.0
  %2089 = vmatpush2.msra.mxu0 0.0
  %2090 = vmatprep.subr.mxu0 0.0
  %2091 = vmatpush2.msra.mxu0 0.0
  %2092 = vmatprep.subr.mxu0 0.0
  %2093 = vmatpush2.msra.mxu0 0.0
  %2094 = vmatprep.subr.mxu0 0.0
  %2095 = vmatpush2.msra.mxu0 0.0
  %2096 = vmatprep.subr.mxu0 0.0
  %2097 = vmatpush2.msra.mxu0 0.0
  %2098 = vmatprep.subr.mxu0 0.0
  %2099 = vmatpush2.msra.mxu0 0.0
  %2100 = vmatprep.subr.mxu0 0.0
  %2101 = vmatpush2.msra.mxu0 0.0
  %2102 = vmatprep.subr.mxu0 0.0
  %2103 = vmatpush2.msra.mxu0 0.0
  %2104 = vmatprep.subr.mxu0 0.0
  %2105 = vmatpush2.msra.mxu0 0.0
  %2106 = vmatprep.subr.mxu0 0.0
  %2107 = vmatpush2.msra.mxu0 0.0
  %2108 = vmatprep.subr.mxu0 0.0
  %2109 = vmatpush2.msra.mxu0 0.0
  %2110 = vmatprep.subr.mxu0 0.0
  %2111 = vmatpush2.msra.mxu0 0.0
  %2112 = vmatprep.subr.mxu0 0.0
  %2113 = vmatpush2.msra.mxu0 0.0
  %2114 = vmatprep.mubr.f32.mxu0 0.0
  %2115 = vmatmul.mubr.f32.gmra.mxu0 %v1693
  %v2116 = vpop.f32.mrf.mxu0
  %v2117 = vadd.f32 %v2038, %v2116
  %v2118 = vpop.f32.mrf.mxu0
  %v2119 = vadd.f32 %v2042, %v2118
  %2120 = vdwg.mxu0
  %2121 = vmatprep.subr.mxu0 0.0
  %2122 = vmatpush1.msra.mxu0 %v2032
  %2123 = vmatprep.subr.mxu0 0.0
  %2124 = vmatpush1.msra.mxu0 %v2029
  %2125 = vmatprep.subr.mxu0 0.0
  %2126 = vmatpush1.msra.mxu0 %v2026
  %2127 = vmatprep.subr.mxu0 0.0
  %2128 = vmatpush1.msra.mxu0 %v2023
  %2129 = vmatprep.subr.mxu0 0.0
  %2130 = vmatpush1.msra.mxu0 %v2020
  %2131 = vmatprep.subr.mxu0 0.0
  %2132 = vmatpush1.msra.mxu0 %v2017
  %2133 = vmatprep.subr.mxu0 0.0
  %2134 = vmatpush1.msra.mxu0 %v2014
  %2135 = vmatprep.subr.mxu0 0.0
  %2136 = vmatpush1.msra.mxu0 %v2011
  %2137 = vmatprep.subr.mxu0 0.0
  %2138 = vmatpush1.msra.mxu0 %v2008
  %2139 = vmatprep.subr.mxu0 0.0
  %2140 = vmatpush1.msra.mxu0 %v2005
  %2141 = vmatprep.subr.mxu0 0.0
  %2142 = vmatpush1.msra.mxu0 %v2002
  %2143 = vmatprep.subr.mxu0 0.0
  %2144 = vmatpush1.msra.mxu0 %v1999
  %2145 = vmatprep.subr.mxu0 0.0
  %2146 = vmatpush1.msra.mxu0 %v1996
  %2147 = vmatprep.subr.mxu0 0.0
  %2148 = vmatpush1.msra.mxu0 %v1993
  %2149 = vmatprep.subr.mxu0 0.0
  %2150 = vmatpush1.msra.mxu0 %v1990
  %2151 = vmatprep.subr.mxu0 0.0
  %2152 = vmatpush1.msra.mxu0 %v1987
  %2153 = vmatprep.subr.mxu0 0.0
  %2154 = vmatpush2.msra.mxu0 0.0
  %2155 = vmatprep.subr.mxu0 0.0
  %2156 = vmatpush2.msra.mxu0 0.0
  %2157 = vmatprep.subr.mxu0 0.0
  %2158 = vmatpush2.msra.mxu0 0.0
  %2159 = vmatprep.subr.mxu0 0.0
  %2160 = vmatpush2.msra.mxu0 0.0
  %2161 = vmatprep.subr.mxu0 0.0
  %2162 = vmatpush2.msra.mxu0 0.0
  %2163 = vmatprep.subr.mxu0 0.0
  %2164 = vmatpush2.msra.mxu0 0.0
  %2165 = vmatprep.subr.mxu0 0.0
  %2166 = vmatpush2.msra.mxu0 0.0
  %2167 = vmatprep.subr.mxu0 0.0
  %2168 = vmatpush2.msra.mxu0 0.0
  %2169 = vmatprep.subr.mxu0 0.0
  %2170 = vmatpush2.msra.mxu0 0.0
  %2171 = vmatprep.subr.mxu0 0.0
  %2172 = vmatpush2.msra.mxu0 0.0
  %2173 = vmatprep.subr.mxu0 0.0
  %2174 = vmatpush2.msra.mxu0 0.0
  %2175 = vmatprep.subr.mxu0 0.0
  %2176 = vmatpush2.msra.mxu0 0.0
  %2177 = vmatprep.subr.mxu0 0.0
  %2178 = vmatpush2.msra.mxu0 0.0
  %2179 = vmatprep.subr.mxu0 0.0
  %2180 = vmatpush2.msra.mxu0 0.0
  %2181 = vmatprep.subr.mxu0 0.0
  %2182 = vmatpush2.msra.mxu0 0.0
  %2183 = vmatprep.subr.mxu0 0.0
  %2184 = vmatpush2.msra.mxu0 0.0
  %2185 = vmatprep.mubr.f32.mxu0 0.0
  %2186 = vmatmul.mubr.f32.gmra.mxu0 %v1693
  %v2187 = vpop.f32.mrf.mxu0
  %v2188 = vadd.f32 %v2046, %v2187
  %v2189 = vpop.f32.mrf.mxu0
  %2190 = vdwg.mxu0
  %v2191 = vadd.f32 %v1834, %v2117
  %v2192 = vxor.u32 %v2191, 2147483648
  %v2193 = vmul.f32 %v2192, 1.442695
  %v2194 = vpow.pop %v2193
  %v2195 = vadd.f32 %v2194, 1.0
  %v2196 = vrcp.pop %v2195
  %v2197 = vmul.f32 1.0, %v2196
  %v2198 = vadd.f32 %v1836, %v2119
  %v2199 = vxor.u32 %v2198, 2147483648
  %v2200 = vmul.f32 %v2199, 1.442695
  %v2201 = vpow.pop %v2200
  %v2202 = vadd.f32 %v2201, 1.0
  %v2203 = vrcp.pop %v2202
  %v2204 = vmul.f32 1.0, %v2203
  %v2205 = vmul.f32 %v2197, %v2188
  %v2206 = vadd.f32 %v1947, %v2205
  %v2207 = vtanh.pop %v2206
  %v2208 = vsub.f32 1.0, %v2204
  %v2209 = vmul.f32 %v2208, %v2207
  %v2210 = vmul.f32 %v2204, %v1693
  %v2211 = vadd.f32 %v2209, %v2210
  %2212 = vst [vmem:[#allocation2] sm:$0xff] %v2211
  %2213 = vmatprep.subr.mxu0 %v2031
  %2214 = vmatpush1.msra.mxu0 %v2030
  %2215 = vmatprep.subr.mxu0 %v2028
  %2216 = vmatpush1.msra.mxu0 %v2027
  %2217 = vmatprep.subr.mxu0 %v2025
  %2218 = vmatpush1.msra.mxu0 %v2024
  %2219 = vmatprep.subr.mxu0 %v2022
  %2220 = vmatpush1.msra.mxu0 %v2021
  %2221 = vmatprep.subr.mxu0 %v2019
  %2222 = vmatpush1.msra.mxu0 %v2018
  %2223 = vmatprep.subr.mxu0 %v2016
  %2224 = vmatpush1.msra.mxu0 %v2015
  %2225 = vmatprep.subr.mxu0 %v2013
  %2226 = vmatpush1.msra.mxu0 %v2012
  %2227 = vmatprep.subr.mxu0 %v2010
  %2228 = vmatpush1.msra.mxu0 %v2009
  %2229 = vmatprep.subr.mxu0 %v2007
  %2230 = vmatpush1.msra.mxu0 %v2006
  %2231 = vmatprep.subr.mxu0 %v2004
  %2232 = vmatpush1.msra.mxu0 %v2003
  %2233 = vmatprep.subr.mxu0 %v2001
  %2234 = vmatpush1.msra.mxu0 %v2000
  %2235 = vmatprep.subr.mxu0 %v1998
  %2236 = vmatpush1.msra.mxu0 %v1997
  %2237 = vmatprep.subr.mxu0 %v1995
  %2238 = vmatpush1.msra.mxu0 %v1994
  %2239 = vmatprep.subr.mxu0 %v1992
  %2240 = vmatpush1.msra.mxu0 %v1991
  %2241 = vmatprep.subr.mxu0 %v1989
  %2242 = vmatpush1.msra.mxu0 %v1988
  %2243 = vmatprep.subr.mxu0 %v1986
  %2244 = vmatpush1.msra.mxu0 %v1985
  %2245 = vmatprep.subr.mxu0 0.0
  %2246 = vmatpush2.msra.mxu0 0.0
  %2247 = vmatprep.subr.mxu0 0.0
  %2248 = vmatpush2.msra.mxu0 0.0
  %2249 = vmatprep.subr.mxu0 0.0
  %2250 = vmatpush2.msra.mxu0 0.0
  %2251 = vmatprep.subr.mxu0 0.0
  %2252 = vmatpush2.msra.mxu0 0.0
  %2253 = vmatprep.subr.mxu0 0.0
  %2254 = vmatpush2.msra.mxu0 0.0
  %2255 = vmatprep.subr.mxu0 0.0
  %2256 = vmatpush2.msra.mxu0 0.0
  %2257 = vmatprep.subr.mxu0 0.0
  %2258 = vmatpush2.msra.mxu0 0.0
  %2259 = vmatprep.subr.mxu0 0.0
  %2260 = vmatpush2.msra.mxu0 0.0
  %2261 = vmatprep.subr.mxu0 0.0
  %2262 = vmatpush2.msra.mxu0 0.0
  %2263 = vmatprep.subr.mxu0 0.0
  %2264 = vmatpush2.msra.mxu0 0.0
  %2265 = vmatprep.subr.mxu0 0.0
  %2266 = vmatpush2.msra.mxu0 0.0
  %2267 = vmatprep.subr.mxu0 0.0
  %2268 = vmatpush2.msra.mxu0 0.0
  %2269 = vmatprep.subr.mxu0 0.0
  %2270 = vmatpush2.msra.mxu0 0.0
  %2271 = vmatprep.subr.mxu0 0.0
  %2272 = vmatpush2.msra.mxu0 0.0
  %2273 = vmatprep.subr.mxu0 0.0
  %2274 = vmatpush2.msra.mxu0 0.0
  %2275 = vmatprep.subr.mxu0 0.0
  %2276 = vmatpush2.msra.mxu0 0.0
  %2277 = vmatprep.mubr.f32.mxu0 0.0
  %2278 = vmatmul.mubr.f32.gmra.mxu0 %v2211
  %v2279 = vpop.f32.mrf.mxu0
  %v2280 = vadd.f32 %v2038, %v2279
  %v2281 = vpop.f32.mrf.mxu0
  %v2282 = vadd.f32 %v2042, %v2281
  %2283 = vdwg.mxu0
  %2284 = vmatprep.subr.mxu0 0.0
  %2285 = vmatpush1.msra.mxu0 %v2032
  %2286 = vmatprep.subr.mxu0 0.0
  %2287 = vmatpush1.msra.mxu0 %v2029
  %2288 = vmatprep.subr.mxu0 0.0
  %2289 = vmatpush1.msra.mxu0 %v2026
  %2290 = vmatprep.subr.mxu0 0.0
  %2291 = vmatpush1.msra.mxu0 %v2023
  %2292 = vmatprep.subr.mxu0 0.0
  %2293 = vmatpush1.msra.mxu0 %v2020
  %2294 = vmatprep.subr.mxu0 0.0
  %2295 = vmatpush1.msra.mxu0 %v2017
  %2296 = vmatprep.subr.mxu0 0.0
  %2297 = vmatpush1.msra.mxu0 %v2014
  %2298 = vmatprep.subr.mxu0 0.0
  %2299 = vmatpush1.msra.mxu0 %v2011
  %2300 = vmatprep.subr.mxu0 0.0
  %2301 = vmatpush1.msra.mxu0 %v2008
  %2302 = vmatprep.subr.mxu0 0.0
  %2303 = vmatpush1.msra.mxu0 %v2005
  %2304 = vmatprep.subr.mxu0 0.0
  %2305 = vmatpush1.msra.mxu0 %v2002
  %2306 = vmatprep.subr.mxu0 0.0
  %2307 = vmatpush1.msra.mxu0 %v1999
  %2308 = vmatprep.subr.mxu0 0.0
  %2309 = vmatpush1.msra.mxu0 %v1996
  %2310 = vmatprep.subr.mxu0 0.0
  %2311 = vmatpush1.msra.mxu0 %v1993
  %2312 = vmatprep.subr.mxu0 0.0
  %2313 = vmatpush1.msra.mxu0 %v1990
  %2314 = vmatprep.subr.mxu0 0.0
  %2315 = vmatpush1.msra.mxu0 %v1987
  %2316 = vmatprep.subr.mxu0 0.0
  %2317 = vmatpush2.msra.mxu0 0.0
  %2318 = vmatprep.subr.mxu0 0.0
  %2319 = vmatpush2.msra.mxu0 0.0
  %2320 = vmatprep.subr.mxu0 0.0
  %2321 = vmatpush2.msra.mxu0 0.0
  %2322 = vmatprep.subr.mxu0 0.0
  %2323 = vmatpush2.msra.mxu0 0.0
  %2324 = vmatprep.subr.mxu0 0.0
  %2325 = vmatpush2.msra.mxu0 0.0
  %2326 = vmatprep.subr.mxu0 0.0
  %2327 = vmatpush2.msra.mxu0 0.0
  %2328 = vmatprep.subr.mxu0 0.0
  %2329 = vmatpush2.msra.mxu0 0.0
  %2330 = vmatprep.subr.mxu0 0.0
  %2331 = vmatpush2.msra.mxu0 0.0
  %2332 = vmatprep.subr.mxu0 0.0
  %2333 = vmatpush2.msra.mxu0 0.0
  %2334 = vmatprep.subr.mxu0 0.0
  %2335 = vmatpush2.msra.mxu0 0.0
  %2336 = vmatprep.subr.mxu0 0.0
  %2337 = vmatpush2.msra.mxu0 0.0
  %2338 = vmatprep.subr.mxu0 0.0
  %2339 = vmatpush2.msra.mxu0 0.0
  %2340 = vmatprep.subr.mxu0 0.0
  %2341 = vmatpush2.msra.mxu0 0.0
  %2342 = vmatprep.subr.mxu0 0.0
  %2343 = vmatpush2.msra.mxu0 0.0
  %2344 = vmatprep.subr.mxu0 0.0
  %2345 = vmatpush2.msra.mxu0 0.0
  %2346 = vmatprep.subr.mxu0 0.0
  %2347 = vmatpush2.msra.mxu0 0.0
  %2348 = vmatprep.mubr.f32.mxu0 0.0
  %2349 = vmatmul.mubr.f32.gmra.mxu0 %v2211
  %v2350 = vpop.f32.mrf.mxu0
  %v2351 = vadd.f32 %v2046, %v2350
  %v2352 = vpop.f32.mrf.mxu0
  %2353 = vdwg.mxu0
  %v2354 = vadd.f32 %v1840, %v2280
  %v2355 = vxor.u32 %v2354, 2147483648
  %v2356 = vmul.f32 %v2355, 1.442695
  %v2357 = vpow.pop %v2356
  %v2358 = vadd.f32 %v2357, 1.0
  %v2359 = vrcp.pop %v2358
  %v2360 = vmul.f32 1.0, %v2359
  %v2361 = vadd.f32 %v1842, %v2282
  %v2362 = vxor.u32 %v2361, 2147483648
  %v2363 = vmul.f32 %v2362, 1.442695
  %v2364 = vpow.pop %v2363
  %v2365 = vadd.f32 %v2364, 1.0
  %v2366 = vrcp.pop %v2365
  %v2367 = vmul.f32 1.0, %v2366
  %v2368 = vmul.f32 %v2360, %v2351
  %v2369 = vadd.f32 %v1952, %v2368
  %v2370 = vtanh.pop %v2369
  %v2371 = vsub.f32 1.0, %v2367
  %v2372 = vmul.f32 %v2371, %v2370
  %v2373 = vmul.f32 %v2367, %v2211
  %v2374 = vadd.f32 %v2372, %v2373
  %2375 = vst [vmem:[#allocation2 + $0x8] sm:$0xff] %v2374
  %2376 = vmatprep.subr.mxu0 %v2031
  %2377 = vmatpush1.msra.mxu0 %v2030
  %2378 = vmatprep.subr.mxu0 %v2028
  %2379 = vmatpush1.msra.mxu0 %v2027
  %2380 = vmatprep.subr.mxu0 %v2025
  %2381 = vmatpush1.msra.mxu0 %v2024
  %2382 = vmatprep.subr.mxu0 %v2022
  %2383 = vmatpush1.msra.mxu0 %v2021
  %2384 = vmatprep.subr.mxu0 %v2019
  %2385 = vmatpush1.msra.mxu0 %v2018
  %2386 = vmatprep.subr.mxu0 %v2016
  %2387 = vmatpush1.msra.mxu0 %v2015
  %2388 = vmatprep.subr.mxu0 %v2013
  %2389 = vmatpush1.msra.mxu0 %v2012
  %2390 = vmatprep.subr.mxu0 %v2010
  %2391 = vmatpush1.msra.mxu0 %v2009
  %2392 = vmatprep.subr.mxu0 %v2007
  %2393 = vmatpush1.msra.mxu0 %v2006
  %2394 = vmatprep.subr.mxu0 %v2004
  %2395 = vmatpush1.msra.mxu0 %v2003
  %2396 = vmatprep.subr.mxu0 %v2001
  %2397 = vmatpush1.msra.mxu0 %v2000
  %2398 = vmatprep.subr.mxu0 %v1998
  %2399 = vmatpush1.msra.mxu0 %v1997
  %2400 = vmatprep.subr.mxu0 %v1995
  %2401 = vmatpush1.msra.mxu0 %v1994
  %2402 = vmatprep.subr.mxu0 %v1992
  %2403 = vmatpush1.msra.mxu0 %v1991
  %2404 = vmatprep.subr.mxu0 %v1989
  %2405 = vmatpush1.msra.mxu0 %v1988
  %2406 = vmatprep.subr.mxu0 %v1986
  %2407 = vmatpush1.msra.mxu0 %v1985
  %2408 = vmatprep.subr.mxu0 0.0
  %2409 = vmatpush2.msra.mxu0 0.0
  %2410 = vmatprep.subr.mxu0 0.0
  %2411 = vmatpush2.msra.mxu0 0.0
  %2412 = vmatprep.subr.mxu0 0.0
  %2413 = vmatpush2.msra.mxu0 0.0
  %2414 = vmatprep.subr.mxu0 0.0
  %2415 = vmatpush2.msra.mxu0 0.0
  %2416 = vmatprep.subr.mxu0 0.0
  %2417 = vmatpush2.msra.mxu0 0.0
  %2418 = vmatprep.subr.mxu0 0.0
  %2419 = vmatpush2.msra.mxu0 0.0
  %2420 = vmatprep.subr.mxu0 0.0
  %2421 = vmatpush2.msra.mxu0 0.0
  %2422 = vmatprep.subr.mxu0 0.0
  %2423 = vmatpush2.msra.mxu0 0.0
  %2424 = vmatprep.subr.mxu0 0.0
  %2425 = vmatpush2.msra.mxu0 0.0
  %2426 = vmatprep.subr.mxu0 0.0
  %2427 = vmatpush2.msra.mxu0 0.0
  %2428 = vmatprep.subr.mxu0 0.0
  %2429 = vmatpush2.msra.mxu0 0.0
  %2430 = vmatprep.subr.mxu0 0.0
  %2431 = vmatpush2.msra.mxu0 0.0
  %2432 = vmatprep.subr.mxu0 0.0
  %2433 = vmatpush2.msra.mxu0 0.0
  %2434 = vmatprep.subr.mxu0 0.0
  %2435 = vmatpush2.msra.mxu0 0.0
  %2436 = vmatprep.subr.mxu0 0.0
  %2437 = vmatpush2.msra.mxu0 0.0
  %2438 = vmatprep.subr.mxu0 0.0
  %2439 = vmatpush2.msra.mxu0 0.0
  %2440 = vmatprep.mubr.f32.mxu0 0.0
  %2441 = vmatmul.mubr.f32.gmra.mxu0 %v2374
  %v2442 = vpop.f32.mrf.mxu0
  %v2443 = vadd.f32 %v2038, %v2442
  %v2444 = vpop.f32.mrf.mxu0
  %v2445 = vadd.f32 %v2042, %v2444
  %2446 = vdwg.mxu0
  %2447 = vmatprep.subr.mxu0 0.0
  %2448 = vmatpush1.msra.mxu0 %v2032
  %2449 = vmatprep.subr.mxu0 0.0
  %2450 = vmatpush1.msra.mxu0 %v2029
  %2451 = vmatprep.subr.mxu0 0.0
  %2452 = vmatpush1.msra.mxu0 %v2026
  %2453 = vmatprep.subr.mxu0 0.0
  %2454 = vmatpush1.msra.mxu0 %v2023
  %2455 = vmatprep.subr.mxu0 0.0
  %2456 = vmatpush1.msra.mxu0 %v2020
  %2457 = vmatprep.subr.mxu0 0.0
  %2458 = vmatpush1.msra.mxu0 %v2017
  %2459 = vmatprep.subr.mxu0 0.0
  %2460 = vmatpush1.msra.mxu0 %v2014
  %2461 = vmatprep.subr.mxu0 0.0
  %2462 = vmatpush1.msra.mxu0 %v2011
  %2463 = vmatprep.subr.mxu0 0.0
  %2464 = vmatpush1.msra.mxu0 %v2008
  %2465 = vmatprep.subr.mxu0 0.0
  %2466 = vmatpush1.msra.mxu0 %v2005
  %2467 = vmatprep.subr.mxu0 0.0
  %2468 = vmatpush1.msra.mxu0 %v2002
  %2469 = vmatprep.subr.mxu0 0.0
  %2470 = vmatpush1.msra.mxu0 %v1999
  %2471 = vmatprep.subr.mxu0 0.0
  %2472 = vmatpush1.msra.mxu0 %v1996
  %2473 = vmatprep.subr.mxu0 0.0
  %2474 = vmatpush1.msra.mxu0 %v1993
  %2475 = vmatprep.subr.mxu0 0.0
  %2476 = vmatpush1.msra.mxu0 %v1990
  %2477 = vmatprep.subr.mxu0 0.0
  %2478 = vmatpush1.msra.mxu0 %v1987
  %2479 = vmatprep.subr.mxu0 0.0
  %2480 = vmatpush2.msra.mxu0 0.0
  %2481 = vmatprep.subr.mxu0 0.0
  %2482 = vmatpush2.msra.mxu0 0.0
  %2483 = vmatprep.subr.mxu0 0.0
  %2484 = vmatpush2.msra.mxu0 0.0
  %2485 = vmatprep.subr.mxu0 0.0
  %2486 = vmatpush2.msra.mxu0 0.0
  %2487 = vmatprep.subr.mxu0 0.0
  %2488 = vmatpush2.msra.mxu0 0.0
  %2489 = vmatprep.subr.mxu0 0.0
  %2490 = vmatpush2.msra.mxu0 0.0
  %2491 = vmatprep.subr.mxu0 0.0
  %2492 = vmatpush2.msra.mxu0 0.0
  %2493 = vmatprep.subr.mxu0 0.0
  %2494 = vmatpush2.msra.mxu0 0.0
  %2495 = vmatprep.subr.mxu0 0.0
  %2496 = vmatpush2.msra.mxu0 0.0
  %2497 = vmatprep.subr.mxu0 0.0
  %2498 = vmatpush2.msra.mxu0 0.0
  %2499 = vmatprep.subr.mxu0 0.0
  %2500 = vmatpush2.msra.mxu0 0.0
  %2501 = vmatprep.subr.mxu0 0.0
  %2502 = vmatpush2.msra.mxu0 0.0
  %2503 = vmatprep.subr.mxu0 0.0
  %2504 = vmatpush2.msra.mxu0 0.0
  %2505 = vmatprep.subr.mxu0 0.0
  %2506 = vmatpush2.msra.mxu0 0.0
  %2507 = vmatprep.subr.mxu0 0.0
  %2508 = vmatpush2.msra.mxu0 0.0
  %2509 = vmatprep.subr.mxu0 0.0
  %2510 = vmatpush2.msra.mxu0 0.0
  %2511 = vmatprep.mubr.f32.mxu0 0.0
  %2512 = vmatmul.mubr.f32.gmra.mxu0 %v2374
  %v2513 = vpop.f32.mrf.mxu0
  %v2514 = vadd.f32 %v2046, %v2513
  %v2515 = vpop.f32.mrf.mxu0
  %2516 = vdwg.mxu0
  %v2517 = vadd.f32 %v1846, %v2443
  %v2518 = vxor.u32 %v2517, 2147483648
  %v2519 = vmul.f32 %v2518, 1.442695
  %v2520 = vpow.pop %v2519
  %v2521 = vadd.f32 %v2520, 1.0
  %v2522 = vrcp.pop %v2521
  %v2523 = vmul.f32 1.0, %v2522
  %v2524 = vadd.f32 %v1848, %v2445
  %v2525 = vxor.u32 %v2524, 2147483648
  %v2526 = vmul.f32 %v2525, 1.442695
  %v2527 = vpow.pop %v2526
  %v2528 = vadd.f32 %v2527, 1.0
  %v2529 = vrcp.pop %v2528
  %v2530 = vmul.f32 1.0, %v2529
  %v2531 = vmul.f32 %v2523, %v2514
  %v2532 = vadd.f32 %v1957, %v2531
  %v2533 = vtanh.pop %v2532
  %v2534 = vsub.f32 1.0, %v2530
  %v2535 = vmul.f32 %v2534, %v2533
  %v2536 = vmul.f32 %v2530, %v2374
  %v2537 = vadd.f32 %v2535, %v2536
  %2538 = vst [vmem:[#allocation2 + $0x10] sm:$0xff] %v2537
  %2539 = vmatprep.subr.mxu0 %v2031
  %2540 = vmatpush1.msra.mxu0 %v2030
  %2541 = vmatprep.subr.mxu0 %v2028
  %2542 = vmatpush1.msra.mxu0 %v2027
  %2543 = vmatprep.subr.mxu0 %v2025
  %2544 = vmatpush1.msra.mxu0 %v2024
  %2545 = vmatprep.subr.mxu0 %v2022
  %2546 = vmatpush1.msra.mxu0 %v2021
  %2547 = vmatprep.subr.mxu0 %v2019
  %2548 = vmatpush1.msra.mxu0 %v2018
  %2549 = vmatprep.subr.mxu0 %v2016
  %2550 = vmatpush1.msra.mxu0 %v2015
  %2551 = vmatprep.subr.mxu0 %v2013
  %2552 = vmatpush1.msra.mxu0 %v2012
  %2553 = vmatprep.subr.mxu0 %v2010
  %2554 = vmatpush1.msra.mxu0 %v2009
  %2555 = vmatprep.subr.mxu0 %v2007
  %2556 = vmatpush1.msra.mxu0 %v2006
  %2557 = vmatprep.subr.mxu0 %v2004
  %2558 = vmatpush1.msra.mxu0 %v2003
  %2559 = vmatprep.subr.mxu0 %v2001
  %2560 = vmatpush1.msra.mxu0 %v2000
  %2561 = vmatprep.subr.mxu0 %v1998
  %2562 = vmatpush1.msra.mxu0 %v1997
  %2563 = vmatprep.subr.mxu0 %v1995
  %2564 = vmatpush1.msra.mxu0 %v1994
  %2565 = vmatprep.subr.mxu0 %v1992
  %2566 = vmatpush1.msra.mxu0 %v1991
  %2567 = vmatprep.subr.mxu0 %v1989
  %2568 = vmatpush1.msra.mxu0 %v1988
  %2569 = vmatprep.subr.mxu0 %v1986
  %2570 = vmatpush1.msra.mxu0 %v1985
  %2571 = vmatprep.subr.mxu0 0.0
  %2572 = vmatpush2.msra.mxu0 0.0
  %2573 = vmatprep.subr.mxu0 0.0
  %2574 = vmatpush2.msra.mxu0 0.0
  %2575 = vmatprep.subr.mxu0 0.0
  %2576 = vmatpush2.msra.mxu0 0.0
  %2577 = vmatprep.subr.mxu0 0.0
  %2578 = vmatpush2.msra.mxu0 0.0
  %2579 = vmatprep.subr.mxu0 0.0
  %2580 = vmatpush2.msra.mxu0 0.0
  %2581 = vmatprep.subr.mxu0 0.0
  %2582 = vmatpush2.msra.mxu0 0.0
  %2583 = vmatprep.subr.mxu0 0.0
  %2584 = vmatpush2.msra.mxu0 0.0
  %2585 = vmatprep.subr.mxu0 0.0
  %2586 = vmatpush2.msra.mxu0 0.0
  %2587 = vmatprep.subr.mxu0 0.0
  %2588 = vmatpush2.msra.mxu0 0.0
  %2589 = vmatprep.subr.mxu0 0.0
  %2590 = vmatpush2.msra.mxu0 0.0
  %2591 = vmatprep.subr.mxu0 0.0
  %2592 = vmatpush2.msra.mxu0 0.0
  %2593 = vmatprep.subr.mxu0 0.0
  %2594 = vmatpush2.msra.mxu0 0.0
  %2595 = vmatprep.subr.mxu0 0.0
  %2596 = vmatpush2.msra.mxu0 0.0
  %2597 = vmatprep.subr.mxu0 0.0
  %2598 = vmatpush2.msra.mxu0 0.0
  %2599 = vmatprep.subr.mxu0 0.0
  %2600 = vmatpush2.msra.mxu0 0.0
  %2601 = vmatprep.subr.mxu0 0.0
  %2602 = vmatpush2.msra.mxu0 0.0
  %2603 = vmatprep.mubr.f32.mxu0 0.0
  %2604 = vmatmul.mubr.f32.gmra.mxu0 %v2537
  %v2605 = vpop.f32.mrf.mxu0
  %v2606 = vadd.f32 %v2038, %v2605
  %v2607 = vpop.f32.mrf.mxu0
  %v2608 = vadd.f32 %v2042, %v2607
  %2609 = vdwg.mxu0
  %2610 = vmatprep.subr.mxu0 0.0
  %2611 = vmatpush1.msra.mxu0 %v2032
  %2612 = vmatprep.subr.mxu0 0.0
  %2613 = vmatpush1.msra.mxu0 %v2029
  %2614 = vmatprep.subr.mxu0 0.0
  %2615 = vmatpush1.msra.mxu0 %v2026
  %2616 = vmatprep.subr.mxu0 0.0
  %2617 = vmatpush1.msra.mxu0 %v2023
  %2618 = vmatprep.subr.mxu0 0.0
  %2619 = vmatpush1.msra.mxu0 %v2020
  %2620 = vmatprep.subr.mxu0 0.0
  %2621 = vmatpush1.msra.mxu0 %v2017
  %2622 = vmatprep.subr.mxu0 0.0
  %2623 = vmatpush1.msra.mxu0 %v2014
  %2624 = vmatprep.subr.mxu0 0.0
  %2625 = vmatpush1.msra.mxu0 %v2011
  %2626 = vmatprep.subr.mxu0 0.0
  %2627 = vmatpush1.msra.mxu0 %v2008
  %2628 = vmatprep.subr.mxu0 0.0
  %2629 = vmatpush1.msra.mxu0 %v2005
  %2630 = vmatprep.subr.mxu0 0.0
  %2631 = vmatpush1.msra.mxu0 %v2002
  %2632 = vmatprep.subr.mxu0 0.0
  %2633 = vmatpush1.msra.mxu0 %v1999
  %2634 = vmatprep.subr.mxu0 0.0
  %2635 = vmatpush1.msra.mxu0 %v1996
  %2636 = vmatprep.subr.mxu0 0.0
  %2637 = vmatpush1.msra.mxu0 %v1993
  %2638 = vmatprep.subr.mxu0 0.0
  %2639 = vmatpush1.msra.mxu0 %v1990
  %2640 = vmatprep.subr.mxu0 0.0
  %2641 = vmatpush1.msra.mxu0 %v1987
  %2642 = vmatprep.subr.mxu0 0.0
  %2643 = vmatpush2.msra.mxu0 0.0
  %2644 = vmatprep.subr.mxu0 0.0
  %2645 = vmatpush2.msra.mxu0 0.0
  %2646 = vmatprep.subr.mxu0 0.0
  %2647 = vmatpush2.msra.mxu0 0.0
  %2648 = vmatprep.subr.mxu0 0.0
  %2649 = vmatpush2.msra.mxu0 0.0
  %2650 = vmatprep.subr.mxu0 0.0
  %2651 = vmatpush2.msra.mxu0 0.0
  %2652 = vmatprep.subr.mxu0 0.0
  %2653 = vmatpush2.msra.mxu0 0.0
  %2654 = vmatprep.subr.mxu0 0.0
  %2655 = vmatpush2.msra.mxu0 0.0
  %2656 = vmatprep.subr.mxu0 0.0
  %2657 = vmatpush2.msra.mxu0 0.0
  %2658 = vmatprep.subr.mxu0 0.0
  %2659 = vmatpush2.msra.mxu0 0.0
  %2660 = vmatprep.subr.mxu0 0.0
  %2661 = vmatpush2.msra.mxu0 0.0
  %2662 = vmatprep.subr.mxu0 0.0
  %2663 = vmatpush2.msra.mxu0 0.0
  %2664 = vmatprep.subr.mxu0 0.0
  %2665 = vmatpush2.msra.mxu0 0.0
  %2666 = vmatprep.subr.mxu0 0.0
  %2667 = vmatpush2.msra.mxu0 0.0
  %2668 = vmatprep.subr.mxu0 0.0
  %2669 = vmatpush2.msra.mxu0 0.0
  %2670 = vmatprep.subr.mxu0 0.0
  %2671 = vmatpush2.msra.mxu0 0.0
  %2672 = vmatprep.subr.mxu0 0.0
  %2673 = vmatpush2.msra.mxu0 0.0
  %2674 = vmatprep.mubr.f32.mxu0 0.0
  %2675 = vmatmul.mubr.f32.gmra.mxu0 %v2537
  %v2676 = vpop.f32.mrf.mxu0
  %v2677 = vadd.f32 %v2046, %v2676
  %v2678 = vpop.f32.mrf.mxu0
  %2679 = vdwg.mxu0
  %v2680 = vadd.f32 %v1852, %v2606
  %v2681 = vxor.u32 %v2680, 2147483648
  %v2682 = vmul.f32 %v2681, 1.442695
  %v2683 = vpow.pop %v2682
  %v2684 = vadd.f32 %v2683, 1.0
  %v2685 = vrcp.pop %v2684
  %v2686 = vmul.f32 1.0, %v2685
  %v2687 = vadd.f32 %v1854, %v2608
  %v2688 = vxor.u32 %v2687, 2147483648
  %v2689 = vmul.f32 %v2688, 1.442695
  %v2690 = vpow.pop %v2689
  %v2691 = vadd.f32 %v2690, 1.0
  %v2692 = vrcp.pop %v2691
  %v2693 = vmul.f32 1.0, %v2692
  %v2694 = vmul.f32 %v2686, %v2677
  %v2695 = vadd.f32 %v1962, %v2694
  %v2696 = vtanh.pop %v2695
  %v2697 = vsub.f32 1.0, %v2693
  %v2698 = vmul.f32 %v2697, %v2696
  %v2699 = vmul.f32 %v2693, %v2537
  %v2700 = vadd.f32 %v2698, %v2699
  %2701 = vst [vmem:[#allocation2 + $0x18] sm:$0xff] %v2700
  %2702 = vmatprep.subr.mxu0 %v2031
  %2703 = vmatpush1.msra.mxu0 %v2030
  %2704 = vmatprep.subr.mxu0 %v2028
  %2705 = vmatpush1.msra.mxu0 %v2027
  %2706 = vmatprep.subr.mxu0 %v2025
  %2707 = vmatpush1.msra.mxu0 %v2024
  %2708 = vmatprep.subr.mxu0 %v2022
  %2709 = vmatpush1.msra.mxu0 %v2021
  %2710 = vmatprep.subr.mxu0 %v2019
  %2711 = vmatpush1.msra.mxu0 %v2018
  %2712 = vmatprep.subr.mxu0 %v2016
  %2713 = vmatpush1.msra.mxu0 %v2015
  %2714 = vmatprep.subr.mxu0 %v2013
  %2715 = vmatpush1.msra.mxu0 %v2012
  %2716 = vmatprep.subr.mxu0 %v2010
  %2717 = vmatpush1.msra.mxu0 %v2009
  %2718 = vmatprep.subr.mxu0 %v2007
  %2719 = vmatpush1.msra.mxu0 %v2006
  %2720 = vmatprep.subr.mxu0 %v2004
  %2721 = vmatpush1.msra.mxu0 %v2003
  %2722 = vmatprep.subr.mxu0 %v2001
  %2723 = vmatpush1.msra.mxu0 %v2000
  %2724 = vmatprep.subr.mxu0 %v1998
  %2725 = vmatpush1.msra.mxu0 %v1997
  %2726 = vmatprep.subr.mxu0 %v1995
  %2727 = vmatpush1.msra.mxu0 %v1994
  %2728 = vmatprep.subr.mxu0 %v1992
  %2729 = vmatpush1.msra.mxu0 %v1991
  %2730 = vmatprep.subr.mxu0 %v1989
  %2731 = vmatpush1.msra.mxu0 %v1988
  %2732 = vmatprep.subr.mxu0 %v1986
  %2733 = vmatpush1.msra.mxu0 %v1985
  %2734 = vmatprep.subr.mxu0 0.0
  %2735 = vmatpush2.msra.mxu0 0.0
  %2736 = vmatprep.subr.mxu0 0.0
  %2737 = vmatpush2.msra.mxu0 0.0
  %2738 = vmatprep.subr.mxu0 0.0
  %2739 = vmatpush2.msra.mxu0 0.0
  %2740 = vmatprep.subr.mxu0 0.0
  %2741 = vmatpush2.msra.mxu0 0.0
  %2742 = vmatprep.subr.mxu0 0.0
  %2743 = vmatpush2.msra.mxu0 0.0
  %2744 = vmatprep.subr.mxu0 0.0
  %2745 = vmatpush2.msra.mxu0 0.0
  %2746 = vmatprep.subr.mxu0 0.0
  %2747 = vmatpush2.msra.mxu0 0.0
  %2748 = vmatprep.subr.mxu0 0.0
  %2749 = vmatpush2.msra.mxu0 0.0
  %2750 = vmatprep.subr.mxu0 0.0
  %2751 = vmatpush2.msra.mxu0 0.0
  %2752 = vmatprep.subr.mxu0 0.0
  %2753 = vmatpush2.msra.mxu0 0.0
  %2754 = vmatprep.subr.mxu0 0.0
  %2755 = vmatpush2.msra.mxu0 0.0
  %2756 = vmatprep.subr.mxu0 0.0
  %2757 = vmatpush2.msra.mxu0 0.0
  %2758 = vmatprep.subr.mxu0 0.0
  %2759 = vmatpush2.msra.mxu0 0.0
  %2760 = vmatprep.subr.mxu0 0.0
  %2761 = vmatpush2.msra.mxu0 0.0
  %2762 = vmatprep.subr.mxu0 0.0
  %2763 = vmatpush2.msra.mxu0 0.0
  %2764 = vmatprep.subr.mxu0 0.0
  %2765 = vmatpush2.msra.mxu0 0.0
  %2766 = vmatprep.mubr.f32.mxu0 0.0
  %2767 = vmatmul.mubr.f32.gmra.mxu0 %v2700
  %v2768 = vpop.f32.mrf.mxu0
  %v2769 = vadd.f32 %v2038, %v2768
  %v2770 = vpop.f32.mrf.mxu0
  %v2771 = vadd.f32 %v2042, %v2770
  %2772 = vdwg.mxu0
  %2773 = vmatprep.subr.mxu0 0.0
  %2774 = vmatpush1.msra.mxu0 %v2032
  %2775 = vmatprep.subr.mxu0 0.0
  %2776 = vmatpush1.msra.mxu0 %v2029
  %2777 = vmatprep.subr.mxu0 0.0
  %2778 = vmatpush1.msra.mxu0 %v2026
  %2779 = vmatprep.subr.mxu0 0.0
  %2780 = vmatpush1.msra.mxu0 %v2023
  %2781 = vmatprep.subr.mxu0 0.0
  %2782 = vmatpush1.msra.mxu0 %v2020
  %2783 = vmatprep.subr.mxu0 0.0
  %2784 = vmatpush1.msra.mxu0 %v2017
  %2785 = vmatprep.subr.mxu0 0.0
  %2786 = vmatpush1.msra.mxu0 %v2014
  %2787 = vmatprep.subr.mxu0 0.0
  %2788 = vmatpush1.msra.mxu0 %v2011
  %2789 = vmatprep.subr.mxu0 0.0
  %2790 = vmatpush1.msra.mxu0 %v2008
  %2791 = vmatprep.subr.mxu0 0.0
  %2792 = vmatpush1.msra.mxu0 %v2005
  %2793 = vmatprep.subr.mxu0 0.0
  %2794 = vmatpush1.msra.mxu0 %v2002
  %2795 = vmatprep.subr.mxu0 0.0
  %2796 = vmatpush1.msra.mxu0 %v1999
  %2797 = vmatprep.subr.mxu0 0.0
  %2798 = vmatpush1.msra.mxu0 %v1996
  %2799 = vmatprep.subr.mxu0 0.0
  %2800 = vmatpush1.msra.mxu0 %v1993
  %2801 = vmatprep.subr.mxu0 0.0
  %2802 = vmatpush1.msra.mxu0 %v1990
  %2803 = vmatprep.subr.mxu0 0.0
  %2804 = vmatpush1.msra.mxu0 %v1987
  %2805 = vmatprep.subr.mxu0 0.0
  %2806 = vmatpush2.msra.mxu0 0.0
  %2807 = vmatprep.subr.mxu0 0.0
  %2808 = vmatpush2.msra.mxu0 0.0
  %2809 = vmatprep.subr.mxu0 0.0
  %2810 = vmatpush2.msra.mxu0 0.0
  %2811 = vmatprep.subr.mxu0 0.0
  %2812 = vmatpush2.msra.mxu0 0.0
  %2813 = vmatprep.subr.mxu0 0.0
  %2814 = vmatpush2.msra.mxu0 0.0
  %2815 = vmatprep.subr.mxu0 0.0
  %2816 = vmatpush2.msra.mxu0 0.0
  %2817 = vmatprep.subr.mxu0 0.0
  %2818 = vmatpush2.msra.mxu0 0.0
  %2819 = vmatprep.subr.mxu0 0.0
  %2820 = vmatpush2.msra.mxu0 0.0
  %2821 = vmatprep.subr.mxu0 0.0
  %2822 = vmatpush2.msra.mxu0 0.0
  %2823 = vmatprep.subr.mxu0 0.0
  %2824 = vmatpush2.msra.mxu0 0.0
  %2825 = vmatprep.subr.mxu0 0.0
  %2826 = vmatpush2.msra.mxu0 0.0
  %2827 = vmatprep.subr.mxu0 0.0
  %2828 = vmatpush2.msra.mxu0 0.0
  %2829 = vmatprep.subr.mxu0 0.0
  %2830 = vmatpush2.msra.mxu0 0.0
  %2831 = vmatprep.subr.mxu0 0.0
  %2832 = vmatpush2.msra.mxu0 0.0
  %2833 = vmatprep.subr.mxu0 0.0
  %2834 = vmatpush2.msra.mxu0 0.0
  %2835 = vmatprep.subr.mxu0 0.0
  %2836 = vmatpush2.msra.mxu0 0.0
  %2837 = vmatprep.mubr.f32.mxu0 0.0
  %2838 = vmatmul.mubr.f32.gmra.mxu0 %v2700
  %v2839 = vpop.f32.mrf.mxu0
  %v2840 = vadd.f32 %v2046, %v2839
  %v2841 = vpop.f32.mrf.mxu0
  %2842 = vdwg.mxu0
  %v2843 = vadd.f32 %v1858, %v2769
  %v2844 = vxor.u32 %v2843, 2147483648
  %v2845 = vmul.f32 %v2844, 1.442695
  %v2846 = vpow.pop %v2845
  %v2847 = vadd.f32 %v2846, 1.0
  %v2848 = vrcp.pop %v2847
  %v2849 = vmul.f32 1.0, %v2848
  %v2850 = vadd.f32 %v1860, %v2771
  %v2851 = vxor.u32 %v2850, 2147483648
  %v2852 = vmul.f32 %v2851, 1.442695
  %v2853 = vpow.pop %v2852
  %v2854 = vadd.f32 %v2853, 1.0
  %v2855 = vrcp.pop %v2854
  %v2856 = vmul.f32 1.0, %v2855
  %v2857 = vmul.f32 %v2849, %v2840
  %v2858 = vadd.f32 %v1967, %v2857
  %v2859 = vtanh.pop %v2858
  %v2860 = vsub.f32 1.0, %v2856
  %v2861 = vmul.f32 %v2860, %v2859
  %v2862 = vmul.f32 %v2856, %v2700
  %v2863 = vadd.f32 %v2861, %v2862
  %2864 = vst [vmem:[#allocation2 + $0x20] sm:$0xff] %v2863
  %2865 = vmatprep.subr.mxu0 %v2031
  %2866 = vmatpush1.msra.mxu0 %v2030
  %2867 = vmatprep.subr.mxu0 %v2028
  %2868 = vmatpush1.msra.mxu0 %v2027
  %2869 = vmatprep.subr.mxu0 %v2025
  %2870 = vmatpush1.msra.mxu0 %v2024
  %2871 = vmatprep.subr.mxu0 %v2022
  %2872 = vmatpush1.msra.mxu0 %v2021
  %2873 = vmatprep.subr.mxu0 %v2019
  %2874 = vmatpush1.msra.mxu0 %v2018
  %2875 = vmatprep.subr.mxu0 %v2016
  %2876 = vmatpush1.msra.mxu0 %v2015
  %2877 = vmatprep.subr.mxu0 %v2013
  %2878 = vmatpush1.msra.mxu0 %v2012
  %2879 = vmatprep.subr.mxu0 %v2010
  %2880 = vmatpush1.msra.mxu0 %v2009
  %2881 = vmatprep.subr.mxu0 %v2007
  %2882 = vmatpush1.msra.mxu0 %v2006
  %2883 = vmatprep.subr.mxu0 %v2004
  %2884 = vmatpush1.msra.mxu0 %v2003
  %2885 = vmatprep.subr.mxu0 %v2001
  %2886 = vmatpush1.msra.mxu0 %v2000
  %2887 = vmatprep.subr.mxu0 %v1998
  %2888 = vmatpush1.msra.mxu0 %v1997
  %2889 = vmatprep.subr.mxu0 %v1995
  %2890 = vmatpush1.msra.mxu0 %v1994
  %2891 = vmatprep.subr.mxu0 %v1992
  %2892 = vmatpush1.msra.mxu0 %v1991
  %2893 = vmatprep.subr.mxu0 %v1989
  %2894 = vmatpush1.msra.mxu0 %v1988
  %2895 = vmatprep.subr.mxu0 %v1986
  %2896 = vmatpush1.msra.mxu0 %v1985
  %2897 = vmatprep.subr.mxu0 0.0
  %2898 = vmatpush2.msra.mxu0 0.0
  %2899 = vmatprep.subr.mxu0 0.0
  %2900 = vmatpush2.msra.mxu0 0.0
  %2901 = vmatprep.subr.mxu0 0.0
  %2902 = vmatpush2.msra.mxu0 0.0
  %2903 = vmatprep.subr.mxu0 0.0
  %2904 = vmatpush2.msra.mxu0 0.0
  %2905 = vmatprep.subr.mxu0 0.0
  %2906 = vmatpush2.msra.mxu0 0.0
  %2907 = vmatprep.subr.mxu0 0.0
  %2908 = vmatpush2.msra.mxu0 0.0
  %2909 = vmatprep.subr.mxu0 0.0
  %2910 = vmatpush2.msra.mxu0 0.0
  %2911 = vmatprep.subr.mxu0 0.0
  %2912 = vmatpush2.msra.mxu0 0.0
  %2913 = vmatprep.subr.mxu0 0.0
  %2914 = vmatpush2.msra.mxu0 0.0
  %2915 = vmatprep.subr.mxu0 0.0
  %2916 = vmatpush2.msra.mxu0 0.0
  %2917 = vmatprep.subr.mxu0 0.0
  %2918 = vmatpush2.msra.mxu0 0.0
  %2919 = vmatprep.subr.mxu0 0.0
  %2920 = vmatpush2.msra.mxu0 0.0
  %2921 = vmatprep.subr.mxu0 0.0
  %2922 = vmatpush2.msra.mxu0 0.0
  %2923 = vmatprep.subr.mxu0 0.0
  %2924 = vmatpush2.msra.mxu0 0.0
  %2925 = vmatprep.subr.mxu0 0.0
  %2926 = vmatpush2.msra.mxu0 0.0
  %2927 = vmatprep.subr.mxu0 0.0
  %2928 = vmatpush2.msra.mxu0 0.0
  %2929 = vmatprep.mubr.f32.mxu0 0.0
  %2930 = vmatmul.mubr.f32.gmra.mxu0 %v2863
  %v2931 = vpop.f32.mrf.mxu0
  %v2932 = vadd.f32 %v2038, %v2931
  %v2933 = vpop.f32.mrf.mxu0
  %v2934 = vadd.f32 %v2042, %v2933
  %2935 = vdwg.mxu0
  %2936 = vmatprep.subr.mxu0 0.0
  %2937 = vmatpush1.msra.mxu0 %v2032
  %2938 = vmatprep.subr.mxu0 0.0
  %2939 = vmatpush1.msra.mxu0 %v2029
  %2940 = vmatprep.subr.mxu0 0.0
  %2941 = vmatpush1.msra.mxu0 %v2026
  %2942 = vmatprep.subr.mxu0 0.0
  %2943 = vmatpush1.msra.mxu0 %v2023
  %2944 = vmatprep.subr.mxu0 0.0
  %2945 = vmatpush1.msra.mxu0 %v2020
  %2946 = vmatprep.subr.mxu0 0.0
  %2947 = vmatpush1.msra.mxu0 %v2017
  %2948 = vmatprep.subr.mxu0 0.0
  %2949 = vmatpush1.msra.mxu0 %v2014
  %2950 = vmatprep.subr.mxu0 0.0
  %2951 = vmatpush1.msra.mxu0 %v2011
  %2952 = vmatprep.subr.mxu0 0.0
  %2953 = vmatpush1.msra.mxu0 %v2008
  %2954 = vmatprep.subr.mxu0 0.0
  %2955 = vmatpush1.msra.mxu0 %v2005
  %2956 = vmatprep.subr.mxu0 0.0
  %2957 = vmatpush1.msra.mxu0 %v2002
  %2958 = vmatprep.subr.mxu0 0.0
  %2959 = vmatpush1.msra.mxu0 %v1999
  %2960 = vmatprep.subr.mxu0 0.0
  %2961 = vmatpush1.msra.mxu0 %v1996
  %2962 = vmatprep.subr.mxu0 0.0
  %2963 = vmatpush1.msra.mxu0 %v1993
  %2964 = vmatprep.subr.mxu0 0.0
  %2965 = vmatpush1.msra.mxu0 %v1990
  %2966 = vmatprep.subr.mxu0 0.0
  %2967 = vmatpush1.msra.mxu0 %v1987
  %2968 = vmatprep.subr.mxu0 0.0
  %2969 = vmatpush2.msra.mxu0 0.0
  %2970 = vmatprep.subr.mxu0 0.0
  %2971 = vmatpush2.msra.mxu0 0.0
  %2972 = vmatprep.subr.mxu0 0.0
  %2973 = vmatpush2.msra.mxu0 0.0
  %2974 = vmatprep.subr.mxu0 0.0
  %2975 = vmatpush2.msra.mxu0 0.0
  %2976 = vmatprep.subr.mxu0 0.0
  %2977 = vmatpush2.msra.mxu0 0.0
  %2978 = vmatprep.subr.mxu0 0.0
  %2979 = vmatpush2.msra.mxu0 0.0
  %2980 = vmatprep.subr.mxu0 0.0
  %2981 = vmatpush2.msra.mxu0 0.0
  %2982 = vmatprep.subr.mxu0 0.0
  %2983 = vmatpush2.msra.mxu0 0.0
  %2984 = vmatprep.subr.mxu0 0.0
  %2985 = vmatpush2.msra.mxu0 0.0
  %2986 = vmatprep.subr.mxu0 0.0
  %2987 = vmatpush2.msra.mxu0 0.0
  %2988 = vmatprep.subr.mxu0 0.0
  %2989 = vmatpush2.msra.mxu0 0.0
  %2990 = vmatprep.subr.mxu0 0.0
  %2991 = vmatpush2.msra.mxu0 0.0
  %2992 = vmatprep.subr.mxu0 0.0
  %2993 = vmatpush2.msra.mxu0 0.0
  %2994 = vmatprep.subr.mxu0 0.0
  %2995 = vmatpush2.msra.mxu0 0.0
  %2996 = vmatprep.subr.mxu0 0.0
  %2997 = vmatpush2.msra.mxu0 0.0
  %2998 = vmatprep.subr.mxu0 0.0
  %2999 = vmatpush2.msra.mxu0 0.0
  %3000 = vmatprep.mubr.f32.mxu0 0.0
  %3001 = vmatmul.mubr.f32.gmra.mxu0 %v2863
  %v3002 = vpop.f32.mrf.mxu0
  %v3003 = vadd.f32 %v2046, %v3002
  %v3004 = vpop.f32.mrf.mxu0
  %3005 = vdwg.mxu0
  %v3006 = vadd.f32 %v1864, %v2932
  %v3007 = vxor.u32 %v3006, 2147483648
  %v3008 = vmul.f32 %v3007, 1.442695
  %v3009 = vpow.pop %v3008
  %v3010 = vadd.f32 %v3009, 1.0
  %v3011 = vrcp.pop %v3010
  %v3012 = vmul.f32 1.0, %v3011
  %v3013 = vadd.f32 %v1866, %v2934
  %v3014 = vxor.u32 %v3013, 2147483648
  %v3015 = vmul.f32 %v3014, 1.442695
  %v3016 = vpow.pop %v3015
  %v3017 = vadd.f32 %v3016, 1.0
  %v3018 = vrcp.pop %v3017
  %v3019 = vmul.f32 1.0, %v3018
  %v3020 = vmul.f32 %v3012, %v3003
  %v3021 = vadd.f32 %v1972, %v3020
  %v3022 = vtanh.pop %v3021
  %v3023 = vsub.f32 1.0, %v3019
  %v3024 = vmul.f32 %v3023, %v3022
  %v3025 = vmul.f32 %v3019, %v2863
  %v3026 = vadd.f32 %v3024, %v3025
  %3027 = vst [vmem:[#allocation2 + $0x28] sm:$0xff] %v3026
  %3028 = vmatprep.subr.mxu0 %v2031
  %3029 = vmatpush1.msra.mxu0 %v2030
  %3030 = vmatprep.subr.mxu0 %v2028
  %3031 = vmatpush1.msra.mxu0 %v2027
  %3032 = vmatprep.subr.mxu0 %v2025
  %3033 = vmatpush1.msra.mxu0 %v2024
  %3034 = vmatprep.subr.mxu0 %v2022
  %3035 = vmatpush1.msra.mxu0 %v2021
  %3036 = vmatprep.subr.mxu0 %v2019
  %3037 = vmatpush1.msra.mxu0 %v2018
  %3038 = vmatprep.subr.mxu0 %v2016
  %3039 = vmatpush1.msra.mxu0 %v2015
  %3040 = vmatprep.subr.mxu0 %v2013
  %3041 = vmatpush1.msra.mxu0 %v2012
  %3042 = vmatprep.subr.mxu0 %v2010
  %3043 = vmatpush1.msra.mxu0 %v2009
  %3044 = vmatprep.subr.mxu0 %v2007
  %3045 = vmatpush1.msra.mxu0 %v2006
  %3046 = vmatprep.subr.mxu0 %v2004
  %3047 = vmatpush1.msra.mxu0 %v2003
  %3048 = vmatprep.subr.mxu0 %v2001
  %3049 = vmatpush1.msra.mxu0 %v2000
  %3050 = vmatprep.subr.mxu0 %v1998
  %3051 = vmatpush1.msra.mxu0 %v1997
  %3052 = vmatprep.subr.mxu0 %v1995
  %3053 = vmatpush1.msra.mxu0 %v1994
  %3054 = vmatprep.subr.mxu0 %v1992
  %3055 = vmatpush1.msra.mxu0 %v1991
  %3056 = vmatprep.subr.mxu0 %v1989
  %3057 = vmatpush1.msra.mxu0 %v1988
  %3058 = vmatprep.subr.mxu0 %v1986
  %3059 = vmatpush1.msra.mxu0 %v1985
  %3060 = vmatprep.subr.mxu0 0.0
  %3061 = vmatpush2.msra.mxu0 0.0
  %3062 = vmatprep.subr.mxu0 0.0
  %3063 = vmatpush2.msra.mxu0 0.0
  %3064 = vmatprep.subr.mxu0 0.0
  %3065 = vmatpush2.msra.mxu0 0.0
  %3066 = vmatprep.subr.mxu0 0.0
  %3067 = vmatpush2.msra.mxu0 0.0
  %3068 = vmatprep.subr.mxu0 0.0
  %3069 = vmatpush2.msra.mxu0 0.0
  %3070 = vmatprep.subr.mxu0 0.0
  %3071 = vmatpush2.msra.mxu0 0.0
  %3072 = vmatprep.subr.mxu0 0.0
  %3073 = vmatpush2.msra.mxu0 0.0
  %3074 = vmatprep.subr.mxu0 0.0
  %3075 = vmatpush2.msra.mxu0 0.0
  %3076 = vmatprep.subr.mxu0 0.0
  %3077 = vmatpush2.msra.mxu0 0.0
  %3078 = vmatprep.subr.mxu0 0.0
  %3079 = vmatpush2.msra.mxu0 0.0
  %3080 = vmatprep.subr.mxu0 0.0
  %3081 = vmatpush2.msra.mxu0 0.0
  %3082 = vmatprep.subr.mxu0 0.0
  %3083 = vmatpush2.msra.mxu0 0.0
  %3084 = vmatprep.subr.mxu0 0.0
  %3085 = vmatpush2.msra.mxu0 0.0
  %3086 = vmatprep.subr.mxu0 0.0
  %3087 = vmatpush2.msra.mxu0 0.0
  %3088 = vmatprep.subr.mxu0 0.0
  %3089 = vmatpush2.msra.mxu0 0.0
  %3090 = vmatprep.subr.mxu0 0.0
  %3091 = vmatpush2.msra.mxu0 0.0
  %3092 = vmatprep.mubr.f32.mxu0 0.0
  %3093 = vmatmul.mubr.f32.gmra.mxu0 %v3026
  %v3094 = vpop.f32.mrf.mxu0
  %v3095 = vadd.f32 %v2038, %v3094
  %v3096 = vpop.f32.mrf.mxu0
  %v3097 = vadd.f32 %v2042, %v3096
  %3098 = vdwg.mxu0
  %3099 = vmatprep.subr.mxu0 0.0
  %3100 = vmatpush1.msra.mxu0 %v2032
  %3101 = vmatprep.subr.mxu0 0.0
  %3102 = vmatpush1.msra.mxu0 %v2029
  %3103 = vmatprep.subr.mxu0 0.0
  %3104 = vmatpush1.msra.mxu0 %v2026
  %3105 = vmatprep.subr.mxu0 0.0
  %3106 = vmatpush1.msra.mxu0 %v2023
  %3107 = vmatprep.subr.mxu0 0.0
  %3108 = vmatpush1.msra.mxu0 %v2020
  %3109 = vmatprep.subr.mxu0 0.0
  %3110 = vmatpush1.msra.mxu0 %v2017
  %3111 = vmatprep.subr.mxu0 0.0
  %3112 = vmatpush1.msra.mxu0 %v2014
  %3113 = vmatprep.subr.mxu0 0.0
  %3114 = vmatpush1.msra.mxu0 %v2011
  %3115 = vmatprep.subr.mxu0 0.0
  %3116 = vmatpush1.msra.mxu0 %v2008
  %3117 = vmatprep.subr.mxu0 0.0
  %3118 = vmatpush1.msra.mxu0 %v2005
  %3119 = vmatprep.subr.mxu0 0.0
  %3120 = vmatpush1.msra.mxu0 %v2002
  %3121 = vmatprep.subr.mxu0 0.0
  %3122 = vmatpush1.msra.mxu0 %v1999
  %3123 = vmatprep.subr.mxu0 0.0
  %3124 = vmatpush1.msra.mxu0 %v1996
  %3125 = vmatprep.subr.mxu0 0.0
  %3126 = vmatpush1.msra.mxu0 %v1993
  %3127 = vmatprep.subr.mxu0 0.0
  %3128 = vmatpush1.msra.mxu0 %v1990
  %3129 = vmatprep.subr.mxu0 0.0
  %3130 = vmatpush1.msra.mxu0 %v1987
  %3131 = vmatprep.subr.mxu0 0.0
  %3132 = vmatpush2.msra.mxu0 0.0
  %3133 = vmatprep.subr.mxu0 0.0
  %3134 = vmatpush2.msra.mxu0 0.0
  %3135 = vmatprep.subr.mxu0 0.0
  %3136 = vmatpush2.msra.mxu0 0.0
  %3137 = vmatprep.subr.mxu0 0.0
  %3138 = vmatpush2.msra.mxu0 0.0
  %3139 = vmatprep.subr.mxu0 0.0
  %3140 = vmatpush2.msra.mxu0 0.0
  %3141 = vmatprep.subr.mxu0 0.0
  %3142 = vmatpush2.msra.mxu0 0.0
  %3143 = vmatprep.subr.mxu0 0.0
  %3144 = vmatpush2.msra.mxu0 0.0
  %3145 = vmatprep.subr.mxu0 0.0
  %3146 = vmatpush2.msra.mxu0 0.0
  %3147 = vmatprep.subr.mxu0 0.0
  %3148 = vmatpush2.msra.mxu0 0.0
  %3149 = vmatprep.subr.mxu0 0.0
  %3150 = vmatpush2.msra.mxu0 0.0
  %3151 = vmatprep.subr.mxu0 0.0
  %3152 = vmatpush2.msra.mxu0 0.0
  %3153 = vmatprep.subr.mxu0 0.0
  %3154 = vmatpush2.msra.mxu0 0.0
  %3155 = vmatprep.subr.mxu0 0.0
  %3156 = vmatpush2.msra.mxu0 0.0
  %3157 = vmatprep.subr.mxu0 0.0
  %3158 = vmatpush2.msra.mxu0 0.0
  %3159 = vmatprep.subr.mxu0 0.0
  %3160 = vmatpush2.msra.mxu0 0.0
  %3161 = vmatprep.subr.mxu0 0.0
  %3162 = vmatpush2.msra.mxu0 0.0
  %3163 = vmatprep.mubr.f32.mxu0 0.0
  %3164 = vmatmul.mubr.f32.gmra.mxu0 %v3026
  %v3165 = vpop.f32.mrf.mxu0
  %v3166 = vadd.f32 %v2046, %v3165
  %v3167 = vpop.f32.mrf.mxu0
  %3168 = vdwg.mxu0
  %v3169 = vadd.f32 %v1870, %v3095
  %v3170 = vxor.u32 %v3169, 2147483648
  %v3171 = vmul.f32 %v3170, 1.442695
  %v3172 = vpow.pop %v3171
  %v3173 = vadd.f32 %v3172, 1.0
  %v3174 = vrcp.pop %v3173
  %v3175 = vmul.f32 1.0, %v3174
  %v3176 = vadd.f32 %v1872, %v3097
  %v3177 = vxor.u32 %v3176, 2147483648
  %v3178 = vmul.f32 %v3177, 1.442695
  %v3179 = vpow.pop %v3178
  %v3180 = vadd.f32 %v3179, 1.0
  %v3181 = vrcp.pop %v3180
  %v3182 = vmul.f32 1.0, %v3181
  %v3183 = vmul.f32 %v3175, %v3166
  %v3184 = vadd.f32 %v1977, %v3183
  %v3185 = vtanh.pop %v3184
  %v3186 = vsub.f32 1.0, %v3182
  %v3187 = vmul.f32 %v3186, %v3185
  %v3188 = vmul.f32 %v3182, %v3026
  %v3189 = vadd.f32 %v3187, %v3188
  %3190 = vst [vmem:[#allocation2 + $0x30] sm:$0xff] %v3189
  %3191 = vmatprep.subr.mxu0 %v2031
  %3192 = vmatpush1.msra.mxu0 %v2030
  %3193 = vmatprep.subr.mxu0 %v2028
  %3194 = vmatpush1.msra.mxu0 %v2027
  %3195 = vmatprep.subr.mxu0 %v2025
  %3196 = vmatpush1.msra.mxu0 %v2024
  %3197 = vmatprep.subr.mxu0 %v2022
  %3198 = vmatpush1.msra.mxu0 %v2021
  %3199 = vmatprep.subr.mxu0 %v2019
  %3200 = vmatpush1.msra.mxu0 %v2018
  %3201 = vmatprep.subr.mxu0 %v2016
  %3202 = vmatpush1.msra.mxu0 %v2015
  %3203 = vmatprep.subr.mxu0 %v2013
  %3204 = vmatpush1.msra.mxu0 %v2012
  %3205 = vmatprep.subr.mxu0 %v2010
  %3206 = vmatpush1.msra.mxu0 %v2009
  %3207 = vmatprep.subr.mxu0 %v2007
  %3208 = vmatpush1.msra.mxu0 %v2006
  %3209 = vmatprep.subr.mxu0 %v2004
  %3210 = vmatpush1.msra.mxu0 %v2003
  %3211 = vmatprep.subr.mxu0 %v2001
  %3212 = vmatpush1.msra.mxu0 %v2000
  %3213 = vmatprep.subr.mxu0 %v1998
  %3214 = vmatpush1.msra.mxu0 %v1997
  %3215 = vmatprep.subr.mxu0 %v1995
  %3216 = vmatpush1.msra.mxu0 %v1994
  %3217 = vmatprep.subr.mxu0 %v1992
  %3218 = vmatpush1.msra.mxu0 %v1991
  %3219 = vmatprep.subr.mxu0 %v1989
  %3220 = vmatpush1.msra.mxu0 %v1988
  %3221 = vmatprep.subr.mxu0 %v1986
  %3222 = vmatpush1.msra.mxu0 %v1985
  %3223 = vmatprep.subr.mxu0 0.0
  %3224 = vmatpush2.msra.mxu0 0.0
  %3225 = vmatprep.subr.mxu0 0.0
  %3226 = vmatpush2.msra.mxu0 0.0
  %3227 = vmatprep.subr.mxu0 0.0
  %3228 = vmatpush2.msra.mxu0 0.0
  %3229 = vmatprep.subr.mxu0 0.0
  %3230 = vmatpush2.msra.mxu0 0.0
  %3231 = vmatprep.subr.mxu0 0.0
  %3232 = vmatpush2.msra.mxu0 0.0
  %3233 = vmatprep.subr.mxu0 0.0
  %3234 = vmatpush2.msra.mxu0 0.0
  %3235 = vmatprep.subr.mxu0 0.0
  %3236 = vmatpush2.msra.mxu0 0.0
  %3237 = vmatprep.subr.mxu0 0.0
  %3238 = vmatpush2.msra.mxu0 0.0
  %3239 = vmatprep.subr.mxu0 0.0
  %3240 = vmatpush2.msra.mxu0 0.0
  %3241 = vmatprep.subr.mxu0 0.0
  %3242 = vmatpush2.msra.mxu0 0.0
  %3243 = vmatprep.subr.mxu0 0.0
  %3244 = vmatpush2.msra.mxu0 0.0
  %3245 = vmatprep.subr.mxu0 0.0
  %3246 = vmatpush2.msra.mxu0 0.0
  %3247 = vmatprep.subr.mxu0 0.0
  %3248 = vmatpush2.msra.mxu0 0.0
  %3249 = vmatprep.subr.mxu0 0.0
  %3250 = vmatpush2.msra.mxu0 0.0
  %3251 = vmatprep.subr.mxu0 0.0
  %3252 = vmatpush2.msra.mxu0 0.0
  %3253 = vmatprep.subr.mxu0 0.0
  %3254 = vmatpush2.msra.mxu0 0.0
  %3255 = vmatprep.mubr.f32.mxu0 0.0
  %3256 = vmatmul.mubr.f32.gmra.mxu0 %v3189
  %v3257 = vpop.f32.mrf.mxu0
  %v3258 = vadd.f32 %v2038, %v3257
  %v3259 = vpop.f32.mrf.mxu0
  %v3260 = vadd.f32 %v2042, %v3259
  %3261 = vdwg.mxu0
  %3262 = vmatprep.subr.mxu0 0.0
  %3263 = vmatpush1.msra.mxu0 %v2032
  %3264 = vmatprep.subr.mxu0 0.0
  %3265 = vmatpush1.msra.mxu0 %v2029
  %3266 = vmatprep.subr.mxu0 0.0
  %3267 = vmatpush1.msra.mxu0 %v2026
  %3268 = vmatprep.subr.mxu0 0.0
  %3269 = vmatpush1.msra.mxu0 %v2023
  %3270 = vmatprep.subr.mxu0 0.0
  %3271 = vmatpush1.msra.mxu0 %v2020
  %3272 = vmatprep.subr.mxu0 0.0
  %3273 = vmatpush1.msra.mxu0 %v2017
  %3274 = vmatprep.subr.mxu0 0.0
  %3275 = vmatpush1.msra.mxu0 %v2014
  %3276 = vmatprep.subr.mxu0 0.0
  %3277 = vmatpush1.msra.mxu0 %v2011
  %3278 = vmatprep.subr.mxu0 0.0
  %3279 = vmatpush1.msra.mxu0 %v2008
  %3280 = vmatprep.subr.mxu0 0.0
  %3281 = vmatpush1.msra.mxu0 %v2005
  %3282 = vmatprep.subr.mxu0 0.0
  %3283 = vmatpush1.msra.mxu0 %v2002
  %3284 = vmatprep.subr.mxu0 0.0
  %3285 = vmatpush1.msra.mxu0 %v1999
  %3286 = vmatprep.subr.mxu0 0.0
  %3287 = vmatpush1.msra.mxu0 %v1996
  %3288 = vmatprep.subr.mxu0 0.0
  %3289 = vmatpush1.msra.mxu0 %v1993
  %3290 = vmatprep.subr.mxu0 0.0
  %3291 = vmatpush1.msra.mxu0 %v1990
  %3292 = vmatprep.subr.mxu0 0.0
  %3293 = vmatpush1.msra.mxu0 %v1987
  %3294 = vmatprep.subr.mxu0 0.0
  %3295 = vmatpush2.msra.mxu0 0.0
  %3296 = vmatprep.subr.mxu0 0.0
  %3297 = vmatpush2.msra.mxu0 0.0
  %3298 = vmatprep.subr.mxu0 0.0
  %3299 = vmatpush2.msra.mxu0 0.0
  %3300 = vmatprep.subr.mxu0 0.0
  %3301 = vmatpush2.msra.mxu0 0.0
  %3302 = vmatprep.subr.mxu0 0.0
  %3303 = vmatpush2.msra.mxu0 0.0
  %3304 = vmatprep.subr.mxu0 0.0
  %3305 = vmatpush2.msra.mxu0 0.0
  %3306 = vmatprep.subr.mxu0 0.0
  %3307 = vmatpush2.msra.mxu0 0.0
  %3308 = vmatprep.subr.mxu0 0.0
  %3309 = vmatpush2.msra.mxu0 0.0
  %3310 = vmatprep.subr.mxu0 0.0
  %3311 = vmatpush2.msra.mxu0 0.0
  %3312 = vmatprep.subr.mxu0 0.0
  %3313 = vmatpush2.msra.mxu0 0.0
  %3314 = vmatprep.subr.mxu0 0.0
  %3315 = vmatpush2.msra.mxu0 0.0
  %3316 = vmatprep.subr.mxu0 0.0
  %3317 = vmatpush2.msra.mxu0 0.0
  %3318 = vmatprep.subr.mxu0 0.0
  %3319 = vmatpush2.msra.mxu0 0.0
  %3320 = vmatprep.subr.mxu0 0.0
  %3321 = vmatpush2.msra.mxu0 0.0
  %3322 = vmatprep.subr.mxu0 0.0
  %3323 = vmatpush2.msra.mxu0 0.0
  %3324 = vmatprep.subr.mxu0 0.0
  %3325 = vmatpush2.msra.mxu0 0.0
  %3326 = vmatprep.mubr.f32.mxu0 0.0
  %3327 = vmatmul.mubr.f32.gmra.mxu0 %v3189
  %v3328 = vpop.f32.mrf.mxu0
  %v3329 = vadd.f32 %v2046, %v3328
  %v3330 = vpop.f32.mrf.mxu0
  %3331 = vdwg.mxu0
  %v3332 = vadd.f32 %v1876, %v3258
  %v3333 = vxor.u32 %v3332, 2147483648
  %v3334 = vmul.f32 %v3333, 1.442695
  %v3335 = vpow.pop %v3334
  %v3336 = vadd.f32 %v3335, 1.0
  %v3337 = vrcp.pop %v3336
  %v3338 = vmul.f32 1.0, %v3337
  %v3339 = vadd.f32 %v1878, %v3260
  %v3340 = vxor.u32 %v3339, 2147483648
  %v3341 = vmul.f32 %v3340, 1.442695
  %v3342 = vpow.pop %v3341
  %v3343 = vadd.f32 %v3342, 1.0
  %v3344 = vrcp.pop %v3343
  %v3345 = vmul.f32 1.0, %v3344
  %v3346 = vmul.f32 %v3338, %v3329
  %v3347 = vadd.f32 %v1982, %v3346
  %v3348 = vtanh.pop %v3347
  %v3349 = vsub.f32 1.0, %v3345
  %v3350 = vmul.f32 %v3349, %v3348
  %v3351 = vmul.f32 %v3345, %v3189
  %v3352 = vadd.f32 %v3350, %v3351
  %3353 = vst [vmem:[#allocation2 + $0x38] sm:$0xff] %v3352
  %v3354 = vld [vmem:[#allocation2] sm:$0xff]
  %v3355 = vld [vmem:[#allocation2 + $0x8] sm:$0xff]
  %v3356 = vld [vmem:[#allocation2 + $0x10] sm:$0xff]
  %v3357 = vld [vmem:[#allocation2 + $0x18] sm:$0xff]
  %v3358 = vld [vmem:[#allocation2 + $0x20] sm:$0xff]
  %v3359 = vld [vmem:[#allocation2 + $0x28] sm:$0xff]
  %v3360 = vld [vmem:[#allocation2 + $0x30] sm:$0xff]
  %v3361 = vld [vmem:[#allocation2 + $0x38] sm:$0xff]
  %v3362 = vld [vmem:[%s10] sm:$0xff]
  %v3363 = vld [vmem:[%s10 + $0x8] sm:$0xff]
  %v3364 = vld [vmem:[%s10 + $0x10] sm:$0xff]
  %v3365 = vld [vmem:[%s10 + $0x18] sm:$0xff]
  %v3366 = vld [vmem:[%s10 + $0x20] sm:$0xff]
  %v3367 = vld [vmem:[%s10 + $0x28] sm:$0xff]
  %v3368 = vld [vmem:[%s10 + $0x30] sm:$0xff]
  %v3369 = vld [vmem:[%s10 + $0x38] sm:$0xff]
  %v3370 = vld [vmem:[%s10 + $0x40] sm:$0xff]
  %v3371 = vld [vmem:[%s10 + $0x48] sm:$0xff]
  %v3372 = vld [vmem:[%s10 + $0x50] sm:$0xff]
  %v3373 = vld [vmem:[%s10 + $0x58] sm:$0xff]
  %v3374 = vld [vmem:[%s10 + $0x60] sm:$0xff]
  %v3375 = vld [vmem:[%s10 + $0x68] sm:$0xff]
  %v3376 = vld [vmem:[%s10 + $0x70] sm:$0xff]
  %v3377 = vld [vmem:[%s10 + $0x78] sm:$0xff]
  %v3378 = vld [vmem:[%s11] sm:$0x1]
  %v3380 = vlaneseq
  %v3381 = vshrl.u32 %v3380, 7
  %v3382 = vsub.s32 0, %v3381
  %v3383 = vrot.slane %v3378, %v3382
  %3385 = vmatprep.subr.mxu0 0.0
  %3386 = vmatpush1.msra.mxu0 %v3377
  %3387 = vmatprep.subr.mxu0 0.0
  %3388 = vmatpush1.msra.mxu0 %v3376
  %3389 = vmatprep.subr.mxu0 0.0
  %3390 = vmatpush1.msra.mxu0 %v3375
  %3391 = vmatprep.subr.mxu0 0.0
  %3392 = vmatpush1.msra.mxu0 %v3374
  %3393 = vmatprep.subr.mxu0 0.0
  %3394 = vmatpush1.msra.mxu0 %v3373
  %3395 = vmatprep.subr.mxu0 0.0
  %3396 = vmatpush1.msra.mxu0 %v3372
  %3397 = vmatprep.subr.mxu0 0.0
  %3398 = vmatpush1.msra.mxu0 %v3371
  %3399 = vmatprep.subr.mxu0 0.0
  %3400 = vmatpush1.msra.mxu0 %v3370
  %3401 = vmatprep.subr.mxu0 0.0
  %3402 = vmatpush1.msra.mxu0 %v3369
  %3403 = vmatprep.subr.mxu0 0.0
  %3404 = vmatpush1.msra.mxu0 %v3368
  %3405 = vmatprep.subr.mxu0 0.0
  %3406 = vmatpush1.msra.mxu0 %v3367
  %3407 = vmatprep.subr.mxu0 0.0
  %3408 = vmatpush1.msra.mxu0 %v3366
  %3409 = vmatprep.subr.mxu0 0.0
  %3410 = vmatpush1.msra.mxu0 %v3365
  %3411 = vmatprep.subr.mxu0 0.0
  %3412 = vmatpush1.msra.mxu0 %v3364
  %3413 = vmatprep.subr.mxu0 0.0
  %3414 = vmatpush1.msra.mxu0 %v3363
  %3415 = vmatprep.subr.mxu0 0.0
  %3416 = vmatpush1.msra.mxu0 %v3362
  %3417 = vmatprep.subr.mxu0 0.0
  %3418 = vmatpush2.msra.mxu0 0.0
  %3419 = vmatprep.subr.mxu0 0.0
  %3420 = vmatpush2.msra.mxu0 0.0
  %3421 = vmatprep.subr.mxu0 0.0
  %3422 = vmatpush2.msra.mxu0 0.0
  %3423 = vmatprep.subr.mxu0 0.0
  %3424 = vmatpush2.msra.mxu0 0.0
  %3425 = vmatprep.subr.mxu0 0.0
  %3426 = vmatpush2.msra.mxu0 0.0
  %3427 = vmatprep.subr.mxu0 0.0
  %3428 = vmatpush2.msra.mxu0 0.0
  %3429 = vmatprep.subr.mxu0 0.0
  %3430 = vmatpush2.msra.mxu0 0.0
  %3431 = vmatprep.subr.mxu0 0.0
  %3432 = vmatpush2.msra.mxu0 0.0
  %3433 = vmatprep.subr.mxu0 0.0
  %3434 = vmatpush2.msra.mxu0 0.0
  %3435 = vmatprep.subr.mxu0 0.0
  %3436 = vmatpush2.msra.mxu0 0.0
  %3437 = vmatprep.subr.mxu0 0.0
  %3438 = vmatpush2.msra.mxu0 0.0
  %3439 = vmatprep.subr.mxu0 0.0
  %3440 = vmatpush2.msra.mxu0 0.0
  %3441 = vmatprep.subr.mxu0 0.0
  %3442 = vmatpush2.msra.mxu0 0.0
  %3443 = vmatprep.subr.mxu0 0.0
  %3444 = vmatpush2.msra.mxu0 0.0
  %3445 = vmatprep.subr.mxu0 0.0
  %3446 = vmatpush2.msra.mxu0 0.0
  %3447 = vmatprep.subr.mxu0 0.0
  %3448 = vmatpush2.msra.mxu0 0.0
  %3449 = vmatprep.mubr.f32.mxu0 0.0
  %3450 = vmatmul.mubr.f32.gmra.mxu0 %v3354
  %v3451 = vpop.f32.mrf.mxu0
  %v3452 = vadd.f32 %v3383, %v3451
  %v3453 = vpop.f32.mrf.mxu0
  %3454 = vmatprep.mubr.f32.mxu0 0.0
  %3455 = vmatmul.mubr.f32.gmra.mxu0 %v3355
  %v3456 = vpop.f32.mrf.mxu0
  %v3457 = vadd.f32 %v3383, %v3456
  %v3458 = vpop.f32.mrf.mxu0
  %3459 = vmatprep.mubr.f32.mxu0 0.0
  %3460 = vmatmul.mubr.f32.gmra.mxu0 %v3356
  %v3461 = vpop.f32.mrf.mxu0
  %v3462 = vadd.f32 %v3383, %v3461
  %v3463 = vpop.f32.mrf.mxu0
  %3464 = vmatprep.mubr.f32.mxu0 0.0
  %3465 = vmatmul.mubr.f32.gmra.mxu0 %v3357
  %v3466 = vpop.f32.mrf.mxu0
  %v3467 = vadd.f32 %v3383, %v3466
  %v3468 = vpop.f32.mrf.mxu0
  %3469 = vmatprep.mubr.f32.mxu0 0.0
  %3470 = vmatmul.mubr.f32.gmra.mxu0 %v3358
  %v3471 = vpop.f32.mrf.mxu0
  %v3472 = vadd.f32 %v3383, %v3471
  %v3473 = vpop.f32.mrf.mxu0
  %3474 = vmatprep.mubr.f32.mxu0 0.0
  %3475 = vmatmul.mubr.f32.gmra.mxu0 %v3359
  %v3476 = vpop.f32.mrf.mxu0
  %v3477 = vadd.f32 %v3383, %v3476
  %v3478 = vpop.f32.mrf.mxu0
  %3479 = vmatprep.mubr.f32.mxu0 0.0
  %3480 = vmatmul.mubr.f32.gmra.mxu0 %v3360
  %v3481 = vpop.f32.mrf.mxu0
  %v3482 = vadd.f32 %v3383, %v3481
  %v3483 = vpop.f32.mrf.mxu0
  %3484 = vmatprep.mubr.f32.mxu0 0.0
  %3485 = vmatmul.mubr.f32.gmra.mxu0 %v3361
  %v3486 = vpop.f32.mrf.mxu0
  %v3487 = vadd.f32 %v3383, %v3486
  %v3488 = vpop.f32.mrf.mxu0
  %3489 = vdwg.mxu0
  %3490 = vst [vmem:[%s12] sm:$0xff] %v3452
  %3491 = vst [vmem:[%s12 + $0x8] sm:$0xff] %v3457
  %3492 = vst [vmem:[%s12 + $0x10] sm:$0xff] %v3462
  %3493 = vst [vmem:[%s12 + $0x18] sm:$0xff] %v3467
  %3494 = vst [vmem:[%s12 + $0x20] sm:$0xff] %v3472
  %3495 = vst [vmem:[%s12 + $0x28] sm:$0xff] %v3477
  %3496 = vst [vmem:[%s12 + $0x30] sm:$0xff] %v3482
  %3497 = vst [vmem:[%s12 + $0x38] sm:$0xff] %v3487
  // Predicated region
  $region50: #{rnn_seq2seq_forward.1} parent=0 // pred_check
    _
  $region51: #{rnn_seq2seq_forward.1} parent=0 // pred_check_branch
    %3499 = sbr.rel (0) target = $region53
  $region52: #{rnn_seq2seq_forward.1} parent=0 // pred_region
    _
  $region53: #{rnn_seq2seq_forward.1} parent=0 // pred_fallthru
    _
  // Predicated region
  $region54: #{rnn_seq2seq_forward.1} parent=0 // pred_check
    _
  $region55: #{rnn_seq2seq_forward.1} parent=0 // pred_check_branch
    %3501 = sbr.rel (0) target = $region57
  $region56: #{rnn_seq2seq_forward.1} parent=0 // pred_region
    _
  $region57: #{rnn_seq2seq_forward.1} parent=0 // pred_fallthru
    _

</llo_original>
